<compile_context>
chip_gen: v6e
topology: v6e:2x2x1
jax: 0.10.0
libtpu: 0.0.40
codegen_flags: <defaults>
</compile_context>

<pallas_src>
import math
import functools

import jax
import jax.numpy as jnp
from jax import lax
from jax.experimental import pallas as pl
from jax.experimental.pallas import tpu as pltpu


def _sepconv_kernel(wc_ref, x_ref, o_ref, xpad_ref, *,
                    TH, Wm, H, W, K, C, F, dilate, p1):
    """One (batch, row-tile) grid step.

    wc_ref  : SMEM (K*K*C*F,) f32    fused depthwise*pointwise weights (scalar prefetch)
    x_ref   : VMEM (1, C, H, W)      unpadded input image (resident across row tiles)
    o_ref   : VMEM (1, F, TH, Wm)    output row tile, NCHW
    xpad_ref: VMEM (C, Hp, Wp) f32   zero-padded image scratch, filled at t == 0
    """
    t = pl.program_id(1)

    # Fill the zero-padded image scratch once per batch element.  The row-tile
    # axis is "arbitrary", so every core that owns an image visits t == 0 first.
    @pl.when(t == 0)
    def _fill_padded_image():
        xpad_ref[...] = jnp.zeros_like(xpad_ref)
        xpad_ref[:, p1:p1 + H, p1:p1 + W] = x_ref[0].astype(xpad_ref.dtype)

    row0 = pl.multiple_of(t * TH, TH)          # top output row of this tile

    # F accumulator slabs (TH, Wm) held in f32 vregs -> no spills, no transpose.
    accs = [jnp.zeros((TH, Wm), jnp.float32) for _ in range(F)]

    for kh in range(K):                        # K*K static taps
        for kw in range(K):
            for c in range(C):
                # Lane-dense (TH, Wm) window of channel c for this tap; the kw
                # shift is a static in-lane offset resolved at load time.
                slab = xpad_ref[c,
                                pl.ds(row0 + kh * dilate, TH),
                                kw * dilate: kw * dilate + Wm]
                base = ((kh * K + kw) * C + c) * F
                for f in range(F):
                    # scalar (SMEM) x vector FMA on the VPU, f32 accumulation.
                    accs[f] = accs[f] + wc_ref[base + f] * slab

    for f in range(F):
        o_ref[0, f] = accs[f].astype(o_ref.dtype)
    # TODO(synk): for Wm < 128 a flattened (F, TH*Wm) lane-dense output layout
    # would make the final stores unmasked; it needs an in-kernel minor-dim
    # reshape (relayout), skipped here to keep lowering simple.


def _pick_row_tile(Hm, Wm, F, max_acc_vregs=48):
    """Largest TH that (a) divides Hm, (b) satisfies the (8,128) block rule
    (TH % 8 == 0 or TH == Hm) and (c) keeps the f32 accumulator slabs inside a
    vreg budget so they never spill across the unrolled taps."""
    cdiv = lambda a, b: -(-a // b)
    lane_tiles = cdiv(Wm, 128)
    legal = [th for th in range(1, Hm + 1)
             if Hm % th == 0 and (th % 8 == 0 or th == Hm)]
    fitting = [th for th in legal
               if F * cdiv(th, 8) * lane_tiles <= max_acc_vregs]
    if fitting:
        return max(fitting)
    return min(legal)      # very wide rows: smallest legal tile, accept pressure


def sepconv_pallas(x_nchw, w1, w2, *, f_sz, dilate=1, out_dtype=jnp.float32):
    """Forward pass of SepConv: conv2(conv1(x)) of the PyTorch module.

    x_nchw: (N, C, H, W)  input in PyTorch NCHW (pass bf16 to halve HBM reads)
    w1    : (C, 1, K, K)  depthwise conv weight (groups=C, bias-free)
    w2    : (F, C, 1, 1)  pointwise conv weight (bias-free)
    out_dtype: dtype of the streamed output (bf16 halves the only HBM write).
    returns (N, F, Hout, Wout) in NCHW, matching nn.Conv2d semantics.
    """
    N, C, H, W = x_nchw.shape
    F = w2.shape[0]
    K = f_sz
    d = dilate
    p1 = K // 2 + d - 1                 # conv1 padding: floor(K/2) + d - 1
    p2 = d - 1                          # conv2 padding: floor(1/2) + d - 1
    Hm = H + 2 * p1 - d * (K - 1)       # depthwise output size (stride 1)
    Wm = W + 2 * p1 - d * (K - 1)
    Hp, Wp = H + 2 * p1, W + 2 * p1

    # Fused weight wc[kh,kw,c,f] = w1[c,0,kh,kw] * w2[f,c,0,0]; f32, flattened
    # for SMEM scalar prefetch (K*K*C*F scalars).
    w1_k = jnp.transpose(w1[:, 0, :, :], (1, 2, 0)).astype(jnp.float32)   # (K,K,C)
    w2_k = jnp.transpose(w2[:, :, 0, 0], (1, 0)).astype(jnp.float32)      # (C,F)
    wc = (w1_k[:, :, :, None] * w2_k[None, None, :, :]).reshape(-1)       # (K*K*C*F,)

    TH = _pick_row_tile(Hm, Wm, F)
    n_t = Hm // TH

    kernel = functools.partial(_sepconv_kernel, TH=TH, Wm=Wm, H=H, W=W,
                               K=K, C=C, F=F, dilate=d, p1=p1)

    # Explicit VMEM budget (padded to hardware tiles) with 2x headroom, clamped
    # to [32 MiB, 64 MiB] so it is valid on v5e/v6e (128 MiB) and v7x (64 MiB).
    rup = lambda v, m: -(-v // m) * m
    in_b = 2 * C * rup(H, 16) * rup(W, 128) * x_nchw.dtype.itemsize
    out_b = 2 * F * rup(TH, 16) * rup(Wm, 128) * jnp.dtype(out_dtype).itemsize
    pad_b = C * rup(Hp, 8) * rup(Wp, 128) * 4
    vmem_limit = int(min(64 << 20, max(32 << 20, 2 * (in_b + out_b + pad_b))))

    out = pl.pallas_call(
        kernel,
        out_shape=jax.ShapeDtypeStruct((N, F, Hm, Wm), out_dtype),
        grid_spec=pltpu.PrefetchScalarGridSpec(
            num_scalar_prefetch=1,
            grid=(N, n_t),
            in_specs=[
                # Full unpadded image per batch element; the index map ignores
                # the row-tile axis so the block stays resident (one DMA/image).
                pl.BlockSpec((1, C, H, W), lambda n, t, wc_s: (n, 0, 0, 0)),
            ],
            out_specs=pl.BlockSpec((1, F, TH, Wm), lambda n, t, wc_s: (n, 0, t, 0)),
            scratch_shapes=[pltpu.VMEM((C, Hp, Wp), jnp.float32)],
        ),
        compiler_params=pltpu.CompilerParams(
            # Batch axis parallel (v7x megacore splits batches); row-tile axis
            # must stay sequential per image (scratch is filled at t == 0).
            dimension_semantics=("parallel", "arbitrary"),
            vmem_limit_bytes=vmem_limit),
    )(wc, x_nchw)

    # conv2 padding p2 is non-zero only when dilate > 1; with bias=False a 1x1
    # conv over a zero-padded border is just zeros -> plain zero border.
    # TODO(synk): when dilate > 1 is hot, write this border from the kernel into
    # a pre-sized output instead of an extra jnp.pad pass.
    if p2 > 0:
        out = jnp.pad(out, ((0, 0), (0, 0), (p2, p2), (p2, p2)))
    return out


def _reference(x_nchw, w1, w2, *, f_sz, dilate=1):
    """Pure-JAX reference using lax.conv_general_dilated (mirrors nn.Conv2d)."""
    C = x_nchw.shape[1]
    p1 = math.floor(f_sz / 2) + dilate - 1
    p2 = math.floor(1 / 2) + dilate - 1
    y = lax.conv_general_dilated(
        x_nchw, w1,
        window_strides=(1, 1), padding=[(p1, p1), (p1, p1)],
        rhs_dilation=(dilate, dilate),
        dimension_numbers=('NCHW', 'OIHW', 'NCHW'),
        feature_group_count=C, precision=lax.Precision.HIGHEST)
    z = lax.conv_general_dilated(
        y, w2,
        window_strides=(1, 1), padding=[(p2, p2), (p2, p2)],
        rhs_dilation=(dilate, dilate),
        dimension_numbers=('NCHW', 'OIHW', 'NCHW'),
        precision=lax.Precision.HIGHEST)
    return z


def _kaiming_uniform_fan_out(key, shape):
    # kaiming_uniform_(a=0, mode='fan_out', nonlinearity='relu'):
    # fan_out = out_channels * kH * kW; bound = sqrt(2) * sqrt(3 / fan_out)
    out_ch, _, kh, kw = shape
    fan_out = out_ch * kh * kw
    bound = math.sqrt(2.0) * math.sqrt(3.0 / fan_out)
    return jax.random.uniform(key, shape, jnp.float32, minval=-bound, maxval=bound)


if __name__ == "__main__":
    # SepConv(in_ch=4, f_ch=8, f_sz=3, dilate=1) on a (2, 4, 16, 16) input.
    N, in_ch, f_ch, f_sz, dilate = 2, 4, 8, 3, 1
    H = W = 16

    key = jax.random.PRNGKey(0)
    kx, k1, k2 = jax.random.split(key, 3)

    x = jax.random.normal(kx, (N, in_ch, H, W), dtype=jnp.float32)
    w1 = _kaiming_uniform_fan_out(k1, (in_ch, 1, f_sz, f_sz))   # depthwise weight
    w2 = _kaiming_uniform_fan_out(k2, (f_ch, in_ch, 1, 1))      # pointwise weight

    ref = _reference(x, w1, w2, f_sz=f_sz, dilate=dilate)

    # f32 input path: strict correctness check.
    out = sepconv_pallas(x, w1, w2, f_sz=f_sz, dilate=dilate)
    out = jax.block_until_ready(out)
    assert out.shape == ref.shape, (out.shape, ref.shape)
    assert jnp.max(jnp.abs(out - ref)) < 1e-4

    # bf16 input path (halves the streaming HBM read when the producer is bf16):
    # looser tolerance since x itself is quantized to bf16.
    out_bf16 = sepconv_pallas(x.astype(jnp.bfloat16), w1, w2,
                              f_sz=f_sz, dilate=dilate)
    out_bf16 = jax.block_until_ready(out_bf16)
    assert jnp.max(jnp.abs(out_bf16 - ref)) < 1.5e-1

    print("KERNEL_OK")
</pallas_src>

<mosaic_0001>
module attributes {stable_mosaic.version = 11 : i64} {
  func.func @_sepconv_kernel(%arg0: i32, %arg1: i32, %arg2: memref<288xf32, #tpu.memory_space<smem>>, %arg3: memref<1x4x16x16xf32, #tpu.memory_space<vmem>>, %arg4: memref<1x8x16x16xf32, #tpu.memory_space<vmem>>, %arg5: memref<4x18x18xf32, #tpu.memory_space<vmem>>) attributes {dimension_semantics = [#tpu.dimension_semantics<parallel>, #tpu.dimension_semantics<arbitrary>], iteration_bounds = array<i64: 2, 1>, scalar_prefetch = 1 : i64, scratch_operands = 1 : i64, tpu.core_type = #tpu.core_type<tc>, window_params = [{transform_indices = @transform_0, window_bounds = array<i64: 1, 4, 16, 16>}, {transform_indices = @transform_1, window_bounds = array<i64: 1, 8, 16, 16>}]} {
    %c0_i32 = arith.constant 0 : i32
    %0 = arith.cmpi eq, %arg1, %c0_i32 : i32
    %1 = arith.extui %0 : i1 to i32
    %c0_i32_0 = arith.constant 0 : i32
    %2 = arith.cmpi ne, %1, %c0_i32_0 : i32
    scf.if %2 {
      %cst_146 = arith.constant 0.000000e+00 : f32
      %1333 = vector.broadcast %cst_146 : f32 to vector<4x18x18xf32>
      %c0_147 = arith.constant 0 : index
      %c0_148 = arith.constant 0 : index
      %c0_149 = arith.constant 0 : index
      %1334 = vector.load %arg5[%c0_147, %c0_148, %c0_149] : memref<4x18x18xf32, #tpu.memory_space<vmem>>, vector<4x18x18xf32>
      tpu.vector_store %arg5[%c0_147, %c0_148, %c0_149], %1333 {strides = array<i32>} : memref<4x18x18xf32, #tpu.memory_space<vmem>>, vector<4x18x18xf32>,
      %c0_150 = arith.constant 0 : index
      %c0_151 = arith.constant 0 : index
      %c0_152 = arith.constant 0 : index
      %c0_153 = arith.constant 0 : index
      %1335 = vector.load %arg3[%c0_150, %c0_151, %c0_152, %c0_153] : memref<1x4x16x16xf32, #tpu.memory_space<vmem>>, vector<1x4x16x16xf32>
      %1336 = vector.shape_cast %1335 : vector<1x4x16x16xf32> to vector<4x16x16xf32>
      %c0_154 = arith.constant 0 : index
      %c1_155 = arith.constant 1 : index
      %c1_156 = arith.constant 1 : index
      %1337 = vector.load %arg5[%c0_154, %c1_155, %c1_156] : memref<4x18x18xf32, #tpu.memory_space<vmem>>, vector<4x16x16xf32>
      tpu.vector_store %arg5[%c0_154, %c1_155, %c1_156], %1336 {strides = array<i32>} : memref<4x18x18xf32, #tpu.memory_space<vmem>>, vector<4x16x16xf32>,
    } else {
    }
    %c16_i32 = arith.constant 16 : i32
    %3 = arith.muli %arg1, %c16_i32 : i32
    %4 = tpu.assume_multiple %3, 16 : i32
    %cst = arith.constant 0.000000e+00 : f32
    %5 = vector.broadcast %cst : f32 to vector<16x16xf32>
    %cst_1 = arith.constant 0.000000e+00 : f32
    %6 = vector.broadcast %cst_1 : f32 to vector<16x16xf32>
    %cst_2 = arith.constant 0.000000e+00 : f32
    %7 = vector.broadcast %cst_2 : f32 to vector<16x16xf32>
    %cst_3 = arith.constant 0.000000e+00 : f32
    %8 = vector.broadcast %cst_3 : f32 to vector<16x16xf32>
    %cst_4 = arith.constant 0.000000e+00 : f32
    %9 = vector.broadcast %cst_4 : f32 to vector<16x16xf32>
    %cst_5 = arith.constant 0.000000e+00 : f32
    %10 = vector.broadcast %cst_5 : f32 to vector<16x16xf32>
    %cst_6 = arith.constant 0.000000e+00 : f32
    %11 = vector.broadcast %cst_6 : f32 to vector<16x16xf32>
    %cst_7 = arith.constant 0.000000e+00 : f32
    %12 = vector.broadcast %cst_7 : f32 to vector<16x16xf32>
    %c0_i32_8 = arith.constant 0 : i32
    %13 = arith.addi %4, %c0_i32_8 : i32
    %c0 = arith.constant 0 : index
    %14 = arith.index_cast %13 : i32 to index
    %c0_9 = arith.constant 0 : index
    %15 = vector.load %arg5[%c0, %14, %c0_9] : memref<4x18x18xf32, #tpu.memory_space<vmem>>, vector<1x16x16xf32>
    %16 = vector.shape_cast %15 : vector<1x16x16xf32> to vector<16x16xf32>
    %c0_10 = arith.constant 0 : index
    %17 = memref.load %arg2[%c0_10] : memref<288xf32, #tpu.memory_space<smem>>
    %18 = vector.broadcast %17 : f32 to vector<16x16xf32>
    %19 = arith.mulf %18, %16 : vector<16x16xf32>
    %20 = arith.addf %5, %19 : vector<16x16xf32>
    %c1 = arith.constant 1 : index
    %21 = memref.load %arg2[%c1] : memref<288xf32, #tpu.memory_space<smem>>
    %22 = vector.broadcast %21 : f32 to vector<16x16xf32>
    %23 = arith.mulf %22, %16 : vector<16x16xf32>
    %24 = arith.addf %6, %23 : vector<16x16xf32>
    %c2 = arith.constant 2 : index
    %25 = memref.load %arg2[%c2] : memref<288xf32, #tpu.memory_space<smem>>
    %26 = vector.broadcast %25 : f32 to vector<16x16xf32>
    %27 = arith.mulf %26, %16 : vector<16x16xf32>
    %28 = arith.addf %7, %27 : vector<16x16xf32>
    %c3 = arith.constant 3 : index
    %29 = memref.load %arg2[%c3] : memref<288xf32, #tpu.memory_space<smem>>
    %30 = vector.broadcast %29 : f32 to vector<16x16xf32>
    %31 = arith.mulf %30, %16 : vector<16x16xf32>
    %32 = arith.addf %8, %31 : vector<16x16xf32>
    %c4 = arith.constant 4 : index
    %33 = memref.load %arg2[%c4] : memref<288xf32, #tpu.memory_space<smem>>
    %34 = vector.broadcast %33 : f32 to vector<16x16xf32>
    %35 = arith.mulf %34, %16 : vector<16x16xf32>
    %36 = arith.addf %9, %35 : vector<16x16xf32>
    %c5 = arith.constant 5 : index
    %37 = memref.load %arg2[%c5] : memref<288xf32, #tpu.memory_space<smem>>
    %38 = vector.broadcast %37 : f32 to vector<16x16xf32>
    %39 = arith.mulf %38, %16 : vector<16x16xf32>
    %40 = arith.addf %10, %39 : vector<16x16xf32>
    %c6 = arith.constant 6 : index
    %41 = memref.load %arg2[%c6] : memref<288xf32, #tpu.memory_space<smem>>
    %42 = vector.broadcast %41 : f32 to vector<16x16xf32>
    %43 = arith.mulf %42, %16 : vector<16x16xf32>
    %44 = arith.addf %11, %43 : vector<16x16xf32>
    %c7 = arith.constant 7 : index
    %45 = memref.load %arg2[%c7] : memref<288xf32, #tpu.memory_space<smem>>
    %46 = vector.broadcast %45 : f32 to vector<16x16xf32>
    %47 = arith.mulf %46, %16 : vector<16x16xf32>
    %48 = arith.addf %12, %47 : vector<16x16xf32>
    %c0_i32_11 = arith.constant 0 : i32
    %49 = arith.addi %4, %c0_i32_11 : i32
    %c1_12 = arith.constant 1 : index
    %50 = arith.index_cast %49 : i32 to index
    %c0_13 = arith.constant 0 : index
    %51 = vector.load %arg5[%c1_12, %50, %c0_13] : memref<4x18x18xf32, #tpu.memory_space<vmem>>, vector<1x16x16xf32>
    %52 = vector.shape_cast %51 : vector<1x16x16xf32> to vector<16x16xf32>
    %c8 = arith.constant 8 : index
    %53 = memref.load %arg2[%c8] : memref<288xf32, #tpu.memory_space<smem>>
    %54 = vector.broadcast %53 : f32 to vector<16x16xf32>
    %55 = arith.mulf %54, %52 : vector<16x16xf32>
    %56 = arith.addf %20, %55 : vector<16x16xf32>
    %c9 = arith.constant 9 : index
    %57 = memref.load %arg2[%c9] : memref<288xf32, #tpu.memory_space<smem>>
    %58 = vector.broadcast %57 : f32 to vector<16x16xf32>
    %59 = arith.mulf %58, %52 : vector<16x16xf32>
    %60 = arith.addf %24, %59 : vector<16x16xf32>
    %c10 = arith.constant 10 : index
    %61 = memref.load %arg2[%c10] : memref<288xf32, #tpu.memory_space<smem>>
    %62 = vector.broadcast %61 : f32 to vector<16x16xf32>
    %63 = arith.mulf %62, %52 : vector<16x16xf32>
    %64 = arith.addf %28, %63 : vector<16x16xf32>
    %c11 = arith.constant 11 : index
    %65 = memref.load %arg2[%c11] : memref<288xf32, #tpu.memory_space<smem>>
    %66 = vector.broadcast %65 : f32 to vector<16x16xf32>
    %67 = arith.mulf %66, %52 : vector<16x16xf32>
    %68 = arith.addf %32, %67 : vector<16x16xf32>
    %c12 = arith.constant 12 : index
    %69 = memref.load %arg2[%c12] : memref<288xf32, #tpu.memory_space<smem>>
    %70 = vector.broadcast %69 : f32 to vector<16x16xf32>
    %71 = arith.mulf %70, %52 : vector<16x16xf32>
    %72 = arith.addf %36, %71 : vector<16x16xf32>
    %c13 = arith.constant 13 : index
    %73 = memref.load %arg2[%c13] : memref<288xf32, #tpu.memory_space<smem>>
    %74 = vector.broadcast %73 : f32 to vector<16x16xf32>
    %75 = arith.mulf %74, %52 : vector<16x16xf32>
    %76 = arith.addf %40, %75 : vector<16x16xf32>
    %c14 = arith.constant 14 : index
    %77 = memref.load %arg2[%c14] : memref<288xf32, #tpu.memory_space<smem>>
    %78 = vector.broadcast %77 : f32 to vector<16x16xf32>
    %79 = arith.mulf %78, %52 : vector<16x16xf32>
    %80 = arith.addf %44, %79 : vector<16x16xf32>
    %c15 = arith.constant 15 : index
    %81 = memref.load %arg2[%c15] : memref<288xf32, #tpu.memory_space<smem>>
    %82 = vector.broadcast %81 : f32 to vector<16x16xf32>
    %83 = arith.mulf %82, %52 : vector<16x16xf32>
    %84 = arith.addf %48, %83 : vector<16x16xf32>
    %c0_i32_14 = arith.constant 0 : i32
    %85 = arith.addi %4, %c0_i32_14 : i32
    %c2_15 = arith.constant 2 : index
    %86 = arith.index_cast %85 : i32 to index
    %c0_16 = arith.constant 0 : index
    %87 = vector.load %arg5[%c2_15, %86, %c0_16] : memref<4x18x18xf32, #tpu.memory_space<vmem>>, vector<1x16x16xf32>
    %88 = vector.shape_cast %87 : vector<1x16x16xf32> to vector<16x16xf32>
    %c16 = arith.constant 16 : index
    %89 = memref.load %arg2[%c16] : memref<288xf32, #tpu.memory_space<smem>>
    %90 = vector.broadcast %89 : f32 to vector<16x16xf32>
    %91 = arith.mulf %90, %88 : vector<16x16xf32>
    %92 = arith.addf %56, %91 : vector<16x16xf32>
    %c17 = arith.constant 17 : index
    %93 = memref.load %arg2[%c17] : memref<288xf32, #tpu.memory_space<smem>>
    %94 = vector.broadcast %93 : f32 to vector<16x16xf32>
    %95 = arith.mulf %94, %88 : vector<16x16xf32>
    %96 = arith.addf %60, %95 : vector<16x16xf32>
    %c18 = arith.constant 18 : index
    %97 = memref.load %arg2[%c18] : memref<288xf32, #tpu.memory_space<smem>>
    %98 = vector.broadcast %97 : f32 to vector<16x16xf32>
    %99 = arith.mulf %98, %88 : vector<16x16xf32>
    %100 = arith.addf %64, %99 : vector<16x16xf32>
    %c19 = arith.constant 19 : index
    %101 = memref.load %arg2[%c19] : memref<288xf32, #tpu.memory_space<smem>>
    %102 = vector.broadcast %101 : f32 to vector<16x16xf32>
    %103 = arith.mulf %102, %88 : vector<16x16xf32>
    %104 = arith.addf %68, %103 : vector<16x16xf32>
    %c20 = arith.constant 20 : index
    %105 = memref.load %arg2[%c20] : memref<288xf32, #tpu.memory_space<smem>>
    %106 = vector.broadcast %105 : f32 to vector<16x16xf32>
    %107 = arith.mulf %106, %88 : vector<16x16xf32>
    %108 = arith.addf %72, %107 : vector<16x16xf32>
    %c21 = arith.constant 21 : index
    %109 = memref.load %arg2[%c21] : memref<288xf32, #tpu.memory_space<smem>>
    %110 = vector.broadcast %109 : f32 to vector<16x16xf32>
    %111 = arith.mulf %110, %88 : vector<16x16xf32>
    %112 = arith.addf %76, %111 : vector<16x16xf32>
    %c22 = arith.constant 22 : index
    %113 = memref.load %arg2[%c22] : memref<288xf32, #tpu.memory_space<smem>>
    %114 = vector.broadcast %113 : f32 to vector<16x16xf32>
    %115 = arith.mulf %114, %88 : vector<16x16xf32>
    %116 = arith.addf %80, %115 : vector<16x16xf32>
    %c23 = arith.constant 23 : index
    %117 = memref.load %arg2[%c23] : memref<288xf32, #tpu.memory_space<smem>>
    %118 = vector.broadcast %117 : f32 to vector<16x16xf32>
    %119 = arith.mulf %118, %88 : vector<16x16xf32>
    %120 = arith.addf %84, %119 : vector<16x16xf32>
    %c0_i32_17 = arith.constant 0 : i32
    %121 = arith.addi %4, %c0_i32_17 : i32
    %c3_18 = arith.constant 3 : index
    %122 = arith.index_cast %121 : i32 to index
    %c0_19 = arith.constant 0 : index
    %123 = vector.load %arg5[%c3_18, %122, %c0_19] : memref<4x18x18xf32, #tpu.memory_space<vmem>>, vector<1x16x16xf32>
    %124 = vector.shape_cast %123 : vector<1x16x16xf32> to vector<16x16xf32>
    %c24 = arith.constant 24 : index
    %125 = memref.load %arg2[%c24] : memref<288xf32, #tpu.memory_space<smem>>
    %126 = vector.broadcast %125 : f32 to vector<16x16xf32>
    %127 = arith.mulf %126, %124 : vector<16x16xf32>
    %128 = arith.addf %92, %127 : vector<16x16xf32>
    %c25 = arith.constant 25 : index
    %129 = memref.load %arg2[%c25] : memref<288xf32, #tpu.memory_space<smem>>
    %130 = vector.broadcast %129 : f32 to vector<16x16xf32>
    %131 = arith.mulf %130, %124 : vector<16x16xf32>
    %132 = arith.addf %96, %131 : vector<16x16xf32>
    %c26 = arith.constant 26 : index
    %133 = memref.load %arg2[%c26] : memref<288xf32, #tpu.memory_space<smem>>
    %134 = vector.broadcast %133 : f32 to vector<16x16xf32>
    %135 = arith.mulf %134, %124 : vector<16x16xf32>
    %136 = arith.addf %100, %135 : vector<16x16xf32>
    %c27 = arith.constant 27 : index
    %137 = memref.load %arg2[%c27] : memref<288xf32, #tpu.memory_space<smem>>
    %138 = vector.broadcast %137 : f32 to vector<16x16xf32>
    %139 = arith.mulf %138, %124 : vector<16x16xf32>
    %140 = arith.addf %104, %139 : vector<16x16xf32>
    %c28 = arith.constant 28 : index
    %141 = memref.load %arg2[%c28] : memref<288xf32, #tpu.memory_space<smem>>
    %142 = vector.broadcast %141 : f32 to vector<16x16xf32>
    %143 = arith.mulf %142, %124 : vector<16x16xf32>
    %144 = arith.addf %108, %143 : vector<16x16xf32>
    %c29 = arith.constant 29 : index
    %145 = memref.load %arg2[%c29] : memref<288xf32, #tpu.memory_space<smem>>
    %146 = vector.broadcast %145 : f32 to vector<16x16xf32>
    %147 = arith.mulf %146, %124 : vector<16x16xf32>
    %148 = arith.addf %112, %147 : vector<16x16xf32>
    %c30 = arith.constant 30 : index
    %149 = memref.load %arg2[%c30] : memref<288xf32, #tpu.memory_space<smem>>
    %150 = vector.broadcast %149 : f32 to vector<16x16xf32>
    %151 = arith.mulf %150, %124 : vector<16x16xf32>
    %152 = arith.addf %116, %151 : vector<16x16xf32>
    %c31 = arith.constant 31 : index
    %153 = memref.load %arg2[%c31] : memref<288xf32, #tpu.memory_space<smem>>
    %154 = vector.broadcast %153 : f32 to vector<16x16xf32>
    %155 = arith.mulf %154, %124 : vector<16x16xf32>
    %156 = arith.addf %120, %155 : vector<16x16xf32>
    %c0_i32_20 = arith.constant 0 : i32
    %157 = arith.addi %4, %c0_i32_20 : i32
    %c0_21 = arith.constant 0 : index
    %158 = arith.index_cast %157 : i32 to index
    %c1_22 = arith.constant 1 : index
    %159 = vector.load %arg5[%c0_21, %158, %c1_22] : memref<4x18x18xf32, #tpu.memory_space<vmem>>, vector<1x16x16xf32>
    %160 = vector.shape_cast %159 : vector<1x16x16xf32> to vector<16x16xf32>
    %c32 = arith.constant 32 : index
    %161 = memref.load %arg2[%c32] : memref<288xf32, #tpu.memory_space<smem>>
    %162 = vector.broadcast %161 : f32 to vector<16x16xf32>
    %163 = arith.mulf %162, %160 : vector<16x16xf32>
    %164 = arith.addf %128, %163 : vector<16x16xf32>
    %c33 = arith.constant 33 : index
    %165 = memref.load %arg2[%c33] : memref<288xf32, #tpu.memory_space<smem>>
    %166 = vector.broadcast %165 : f32 to vector<16x16xf32>
    %167 = arith.mulf %166, %160 : vector<16x16xf32>
    %168 = arith.addf %132, %167 : vector<16x16xf32>
    %c34 = arith.constant 34 : index
    %169 = memref.load %arg2[%c34] : memref<288xf32, #tpu.memory_space<smem>>
    %170 = vector.broadcast %169 : f32 to vector<16x16xf32>
    %171 = arith.mulf %170, %160 : vector<16x16xf32>
    %172 = arith.addf %136, %171 : vector<16x16xf32>
    %c35 = arith.constant 35 : index
    %173 = memref.load %arg2[%c35] : memref<288xf32, #tpu.memory_space<smem>>
    %174 = vector.broadcast %173 : f32 to vector<16x16xf32>
    %175 = arith.mulf %174, %160 : vector<16x16xf32>
    %176 = arith.addf %140, %175 : vector<16x16xf32>
    %c36 = arith.constant 36 : index
    %177 = memref.load %arg2[%c36] : memref<288xf32, #tpu.memory_space<smem>>
    %178 = vector.broadcast %177 : f32 to vector<16x16xf32>
    %179 = arith.mulf %178, %160 : vector<16x16xf32>
    %180 = arith.addf %144, %179 : vector<16x16xf32>
    %c37 = arith.constant 37 : index
    %181 = memref.load %arg2[%c37] : memref<288xf32, #tpu.memory_space<smem>>
    %182 = vector.broadcast %181 : f32 to vector<16x16xf32>
    %183 = arith.mulf %182, %160 : vector<16x16xf32>
    %184 = arith.addf %148, %183 : vector<16x16xf32>
    %c38 = arith.constant 38 : index
    %185 = memref.load %arg2[%c38] : memref<288xf32, #tpu.memory_space<smem>>
    %186 = vector.broadcast %185 : f32 to vector<16x16xf32>
    %187 = arith.mulf %186, %160 : vector<16x16xf32>
    %188 = arith.addf %152, %187 : vector<16x16xf32>
    %c39 = arith.constant 39 : index
    %189 = memref.load %arg2[%c39] : memref<288xf32, #tpu.memory_space<smem>>
    %190 = vector.broadcast %189 : f32 to vector<16x16xf32>
    %191 = arith.mulf %190, %160 : vector<16x16xf32>
    %192 = arith.addf %156, %191 : vector<16x16xf32>
    %c0_i32_23 = arith.constant 0 : i32
    %193 = arith.addi %4, %c0_i32_23 : i32
    %c1_24 = arith.constant 1 : index
    %194 = arith.index_cast %193 : i32 to index
    %c1_25 = arith.constant 1 : index
    %195 = vector.load %arg5[%c1_24, %194, %c1_25] : memref<4x18x18xf32, #tpu.memory_space<vmem>>, vector<1x16x16xf32>
    %196 = vector.shape_cast %195 : vector<1x16x16xf32> to vector<16x16xf32>
    %c40 = arith.constant 40 : index
    %197 = memref.load %arg2[%c40] : memref<288xf32, #tpu.memory_space<smem>>
    %198 = vector.broadcast %197 : f32 to vector<16x16xf32>
    %199 = arith.mulf %198, %196 : vector<16x16xf32>
    %200 = arith.addf %164, %199 : vector<16x16xf32>
    %c41 = arith.constant 41 : index
    %201 = memref.load %arg2[%c41] : memref<288xf32, #tpu.memory_space<smem>>
    %202 = vector.broadcast %201 : f32 to vector<16x16xf32>
    %203 = arith.mulf %202, %196 : vector<16x16xf32>
    %204 = arith.addf %168, %203 : vector<16x16xf32>
    %c42 = arith.constant 42 : index
    %205 = memref.load %arg2[%c42] : memref<288xf32, #tpu.memory_space<smem>>
    %206 = vector.broadcast %205 : f32 to vector<16x16xf32>
    %207 = arith.mulf %206, %196 : vector<16x16xf32>
    %208 = arith.addf %172, %207 : vector<16x16xf32>
    %c43 = arith.constant 43 : index
    %209 = memref.load %arg2[%c43] : memref<288xf32, #tpu.memory_space<smem>>
    %210 = vector.broadcast %209 : f32 to vector<16x16xf32>
    %211 = arith.mulf %210, %196 : vector<16x16xf32>
    %212 = arith.addf %176, %211 : vector<16x16xf32>
    %c44 = arith.constant 44 : index
    %213 = memref.load %arg2[%c44] : memref<288xf32, #tpu.memory_space<smem>>
    %214 = vector.broadcast %213 : f32 to vector<16x16xf32>
    %215 = arith.mulf %214, %196 : vector<16x16xf32>
    %216 = arith.addf %180, %215 : vector<16x16xf32>
    %c45 = arith.constant 45 : index
    %217 = memref.load %arg2[%c45] : memref<288xf32, #tpu.memory_space<smem>>
    %218 = vector.broadcast %217 : f32 to vector<16x16xf32>
    %219 = arith.mulf %218, %196 : vector<16x16xf32>
    %220 = arith.addf %184, %219 : vector<16x16xf32>
    %c46 = arith.constant 46 : index
    %221 = memref.load %arg2[%c46] : memref<288xf32, #tpu.memory_space<smem>>
    %222 = vector.broadcast %221 : f32 to vector<16x16xf32>
    %223 = arith.mulf %222, %196 : vector<16x16xf32>
    %224 = arith.addf %188, %223 : vector<16x16xf32>
    %c47 = arith.constant 47 : index
    %225 = memref.load %arg2[%c47] : memref<288xf32, #tpu.memory_space<smem>>
    %226 = vector.broadcast %225 : f32 to vector<16x16xf32>
    %227 = arith.mulf %226, %196 : vector<16x16xf32>
    %228 = arith.addf %192, %227 : vector<16x16xf32>
    %c0_i32_26 = arith.constant 0 : i32
    %229 = arith.addi %4, %c0_i32_26 : i32
    %c2_27 = arith.constant 2 : index
    %230 = arith.index_cast %229 : i32 to index
    %c1_28 = arith.constant 1 : index
    %231 = vector.load %arg5[%c2_27, %230, %c1_28] : memref<4x18x18xf32, #tpu.memory_space<vmem>>, vector<1x16x16xf32>
    %232 = vector.shape_cast %231 : vector<1x16x16xf32> to vector<16x16xf32>
    %c48 = arith.constant 48 : index
    %233 = memref.load %arg2[%c48] : memref<288xf32, #tpu.memory_space<smem>>
    %234 = vector.broadcast %233 : f32 to vector<16x16xf32>
    %235 = arith.mulf %234, %232 : vector<16x16xf32>
    %236 = arith.addf %200, %235 : vector<16x16xf32>
    %c49 = arith.constant 49 : index
    %237 = memref.load %arg2[%c49] : memref<288xf32, #tpu.memory_space<smem>>
    %238 = vector.broadcast %237 : f32 to vector<16x16xf32>
    %239 = arith.mulf %238, %232 : vector<16x16xf32>
    %240 = arith.addf %204, %239 : vector<16x16xf32>
    %c50 = arith.constant 50 : index
    %241 = memref.load %arg2[%c50] : memref<288xf32, #tpu.memory_space<smem>>
    %242 = vector.broadcast %241 : f32 to vector<16x16xf32>
    %243 = arith.mulf %242, %232 : vector<16x16xf32>
    %244 = arith.addf %208, %243 : vector<16x16xf32>
    %c51 = arith.constant 51 : index
    %245 = memref.load %arg2[%c51] : memref<288xf32, #tpu.memory_space<smem>>
    %246 = vector.broadcast %245 : f32 to vector<16x16xf32>
    %247 = arith.mulf %246, %232 : vector<16x16xf32>
    %248 = arith.addf %212, %247 : vector<16x16xf32>
    %c52 = arith.constant 52 : index
    %249 = memref.load %arg2[%c52] : memref<288xf32, #tpu.memory_space<smem>>
    %250 = vector.broadcast %249 : f32 to vector<16x16xf32>
    %251 = arith.mulf %250, %232 : vector<16x16xf32>
    %252 = arith.addf %216, %251 : vector<16x16xf32>
    %c53 = arith.constant 53 : index
    %253 = memref.load %arg2[%c53] : memref<288xf32, #tpu.memory_space<smem>>
    %254 = vector.broadcast %253 : f32 to vector<16x16xf32>
    %255 = arith.mulf %254, %232 : vector<16x16xf32>
    %256 = arith.addf %220, %255 : vector<16x16xf32>
    %c54 = arith.constant 54 : index
    %257 = memref.load %arg2[%c54] : memref<288xf32, #tpu.memory_space<smem>>
    %258 = vector.broadcast %257 : f32 to vector<16x16xf32>
    %259 = arith.mulf %258, %232 : vector<16x16xf32>
    %260 = arith.addf %224, %259 : vector<16x16xf32>
    %c55 = arith.constant 55 : index
    %261 = memref.load %arg2[%c55] : memref<288xf32, #tpu.memory_space<smem>>
    %262 = vector.broadcast %261 : f32 to vector<16x16xf32>
    %263 = arith.mulf %262, %232 : vector<16x16xf32>
    %264 = arith.addf %228, %263 : vector<16x16xf32>
    %c0_i32_29 = arith.constant 0 : i32
    %265 = arith.addi %4, %c0_i32_29 : i32
    %c3_30 = arith.constant 3 : index
    %266 = arith.index_cast %265 : i32 to index
    %c1_31 = arith.constant 1 : index
    %267 = vector.load %arg5[%c3_30, %266, %c1_31] : memref<4x18x18xf32, #tpu.memory_space<vmem>>, vector<1x16x16xf32>
    %268 = vector.shape_cast %267 : vector<1x16x16xf32> to vector<16x16xf32>
    %c56 = arith.constant 56 : index
    %269 = memref.load %arg2[%c56] : memref<288xf32, #tpu.memory_space<smem>>
    %270 = vector.broadcast %269 : f32 to vector<16x16xf32>
    %271 = arith.mulf %270, %268 : vector<16x16xf32>
    %272 = arith.addf %236, %271 : vector<16x16xf32>
    %c57 = arith.constant 57 : index
    %273 = memref.load %arg2[%c57] : memref<288xf32, #tpu.memory_space<smem>>
    %274 = vector.broadcast %273 : f32 to vector<16x16xf32>
    %275 = arith.mulf %274, %268 : vector<16x16xf32>
    %276 = arith.addf %240, %275 : vector<16x16xf32>
    %c58 = arith.constant 58 : index
    %277 = memref.load %arg2[%c58] : memref<288xf32, #tpu.memory_space<smem>>
    %278 = vector.broadcast %277 : f32 to vector<16x16xf32>
    %279 = arith.mulf %278, %268 : vector<16x16xf32>
    %280 = arith.addf %244, %279 : vector<16x16xf32>
    %c59 = arith.constant 59 : index
    %281 = memref.load %arg2[%c59] : memref<288xf32, #tpu.memory_space<smem>>
    %282 = vector.broadcast %281 : f32 to vector<16x16xf32>
    %283 = arith.mulf %282, %268 : vector<16x16xf32>
    %284 = arith.addf %248, %283 : vector<16x16xf32>
    %c60 = arith.constant 60 : index
    %285 = memref.load %arg2[%c60] : memref<288xf32, #tpu.memory_space<smem>>
    %286 = vector.broadcast %285 : f32 to vector<16x16xf32>
    %287 = arith.mulf %286, %268 : vector<16x16xf32>
    %288 = arith.addf %252, %287 : vector<16x16xf32>
    %c61 = arith.constant 61 : index
    %289 = memref.load %arg2[%c61] : memref<288xf32, #tpu.memory_space<smem>>
    %290 = vector.broadcast %289 : f32 to vector<16x16xf32>
    %291 = arith.mulf %290, %268 : vector<16x16xf32>
    %292 = arith.addf %256, %291 : vector<16x16xf32>
    %c62 = arith.constant 62 : index
    %293 = memref.load %arg2[%c62] : memref<288xf32, #tpu.memory_space<smem>>
    %294 = vector.broadcast %293 : f32 to vector<16x16xf32>
    %295 = arith.mulf %294, %268 : vector<16x16xf32>
    %296 = arith.addf %260, %295 : vector<16x16xf32>
    %c63 = arith.constant 63 : index
    %297 = memref.load %arg2[%c63] : memref<288xf32, #tpu.memory_space<smem>>
    %298 = vector.broadcast %297 : f32 to vector<16x16xf32>
    %299 = arith.mulf %298, %268 : vector<16x16xf32>
    %300 = arith.addf %264, %299 : vector<16x16xf32>
    %c0_i32_32 = arith.constant 0 : i32
    %301 = arith.addi %4, %c0_i32_32 : i32
    %c0_33 = arith.constant 0 : index
    %302 = arith.index_cast %301 : i32 to index
    %c2_34 = arith.constant 2 : index
    %303 = vector.load %arg5[%c0_33, %302, %c2_34] : memref<4x18x18xf32, #tpu.memory_space<vmem>>, vector<1x16x16xf32>
    %304 = vector.shape_cast %303 : vector<1x16x16xf32> to vector<16x16xf32>
    %c64 = arith.constant 64 : index
    %305 = memref.load %arg2[%c64] : memref<288xf32, #tpu.memory_space<smem>>
    %306 = vector.broadcast %305 : f32 to vector<16x16xf32>
    %307 = arith.mulf %306, %304 : vector<16x16xf32>
    %308 = arith.addf %272, %307 : vector<16x16xf32>
    %c65 = arith.constant 65 : index
    %309 = memref.load %arg2[%c65] : memref<288xf32, #tpu.memory_space<smem>>
    %310 = vector.broadcast %309 : f32 to vector<16x16xf32>
    %311 = arith.mulf %310, %304 : vector<16x16xf32>
    %312 = arith.addf %276, %311 : vector<16x16xf32>
    %c66 = arith.constant 66 : index
    %313 = memref.load %arg2[%c66] : memref<288xf32, #tpu.memory_space<smem>>
    %314 = vector.broadcast %313 : f32 to vector<16x16xf32>
    %315 = arith.mulf %314, %304 : vector<16x16xf32>
    %316 = arith.addf %280, %315 : vector<16x16xf32>
    %c67 = arith.constant 67 : index
    %317 = memref.load %arg2[%c67] : memref<288xf32, #tpu.memory_space<smem>>
    %318 = vector.broadcast %317 : f32 to vector<16x16xf32>
    %319 = arith.mulf %318, %304 : vector<16x16xf32>
    %320 = arith.addf %284, %319 : vector<16x16xf32>
    %c68 = arith.constant 68 : index
    %321 = memref.load %arg2[%c68] : memref<288xf32, #tpu.memory_space<smem>>
    %322 = vector.broadcast %321 : f32 to vector<16x16xf32>
    %323 = arith.mulf %322, %304 : vector<16x16xf32>
    %324 = arith.addf %288, %323 : vector<16x16xf32>
    %c69 = arith.constant 69 : index
    %325 = memref.load %arg2[%c69] : memref<288xf32, #tpu.memory_space<smem>>
    %326 = vector.broadcast %325 : f32 to vector<16x16xf32>
    %327 = arith.mulf %326, %304 : vector<16x16xf32>
    %328 = arith.addf %292, %327 : vector<16x16xf32>
    %c70 = arith.constant 70 : index
    %329 = memref.load %arg2[%c70] : memref<288xf32, #tpu.memory_space<smem>>
    %330 = vector.broadcast %329 : f32 to vector<16x16xf32>
    %331 = arith.mulf %330, %304 : vector<16x16xf32>
    %332 = arith.addf %296, %331 : vector<16x16xf32>
    %c71 = arith.constant 71 : index
    %333 = memref.load %arg2[%c71] : memref<288xf32, #tpu.memory_space<smem>>
    %334 = vector.broadcast %333 : f32 to vector<16x16xf32>
    %335 = arith.mulf %334, %304 : vector<16x16xf32>
    %336 = arith.addf %300, %335 : vector<16x16xf32>
    %c0_i32_35 = arith.constant 0 : i32
    %337 = arith.addi %4, %c0_i32_35 : i32
    %c1_36 = arith.constant 1 : index
    %338 = arith.index_cast %337 : i32 to index
    %c2_37 = arith.constant 2 : index
    %339 = vector.load %arg5[%c1_36, %338, %c2_37] : memref<4x18x18xf32, #tpu.memory_space<vmem>>, vector<1x16x16xf32>
    %340 = vector.shape_cast %339 : vector<1x16x16xf32> to vector<16x16xf32>
    %c72 = arith.constant 72 : index
    %341 = memref.load %arg2[%c72] : memref<288xf32, #tpu.memory_space<smem>>
    %342 = vector.broadcast %341 : f32 to vector<16x16xf32>
    %343 = arith.mulf %342, %340 : vector<16x16xf32>
    %344 = arith.addf %308, %343 : vector<16x16xf32>
    %c73 = arith.constant 73 : index
    %345 = memref.load %arg2[%c73] : memref<288xf32, #tpu.memory_space<smem>>
    %346 = vector.broadcast %345 : f32 to vector<16x16xf32>
    %347 = arith.mulf %346, %340 : vector<16x16xf32>
    %348 = arith.addf %312, %347 : vector<16x16xf32>
    %c74 = arith.constant 74 : index
    %349 = memref.load %arg2[%c74] : memref<288xf32, #tpu.memory_space<smem>>
    %350 = vector.broadcast %349 : f32 to vector<16x16xf32>
    %351 = arith.mulf %350, %340 : vector<16x16xf32>
    %352 = arith.addf %316, %351 : vector<16x16xf32>
    %c75 = arith.constant 75 : index
    %353 = memref.load %arg2[%c75] : memref<288xf32, #tpu.memory_space<smem>>
    %354 = vector.broadcast %353 : f32 to vector<16x16xf32>
    %355 = arith.mulf %354, %340 : vector<16x16xf32>
    %356 = arith.addf %320, %355 : vector<16x16xf32>
    %c76 = arith.constant 76 : index
    %357 = memref.load %arg2[%c76] : memref<288xf32, #tpu.memory_space<smem>>
    %358 = vector.broadcast %357 : f32 to vector<16x16xf32>
    %359 = arith.mulf %358, %340 : vector<16x16xf32>
    %360 = arith.addf %324, %359 : vector<16x16xf32>
    %c77 = arith.constant 77 : index
    %361 = memref.load %arg2[%c77] : memref<288xf32, #tpu.memory_space<smem>>
    %362 = vector.broadcast %361 : f32 to vector<16x16xf32>
    %363 = arith.mulf %362, %340 : vector<16x16xf32>
    %364 = arith.addf %328, %363 : vector<16x16xf32>
    %c78 = arith.constant 78 : index
    %365 = memref.load %arg2[%c78] : memref<288xf32, #tpu.memory_space<smem>>
    %366 = vector.broadcast %365 : f32 to vector<16x16xf32>
    %367 = arith.mulf %366, %340 : vector<16x16xf32>
    %368 = arith.addf %332, %367 : vector<16x16xf32>
    %c79 = arith.constant 79 : index
    %369 = memref.load %arg2[%c79] : memref<288xf32, #tpu.memory_space<smem>>
    %370 = vector.broadcast %369 : f32 to vector<16x16xf32>
    %371 = arith.mulf %370, %340 : vector<16x16xf32>
    %372 = arith.addf %336, %371 : vector<16x16xf32>
    %c0_i32_38 = arith.constant 0 : i32
    %373 = arith.addi %4, %c0_i32_38 : i32
    %c2_39 = arith.constant 2 : index
    %374 = arith.index_cast %373 : i32 to index
    %c2_40 = arith.constant 2 : index
    %375 = vector.load %arg5[%c2_39, %374, %c2_40] : memref<4x18x18xf32, #tpu.memory_space<vmem>>, vector<1x16x16xf32>
    %376 = vector.shape_cast %375 : vector<1x16x16xf32> to vector<16x16xf32>
    %c80 = arith.constant 80 : index
    %377 = memref.load %arg2[%c80] : memref<288xf32, #tpu.memory_space<smem>>
    %378 = vector.broadcast %377 : f32 to vector<16x16xf32>
    %379 = arith.mulf %378, %376 : vector<16x16xf32>
    %380 = arith.addf %344, %379 : vector<16x16xf32>
    %c81 = arith.constant 81 : index
    %381 = memref.load %arg2[%c81] : memref<288xf32, #tpu.memory_space<smem>>
    %382 = vector.broadcast %381 : f32 to vector<16x16xf32>
    %383 = arith.mulf %382, %376 : vector<16x16xf32>
    %384 = arith.addf %348, %383 : vector<16x16xf32>
    %c82 = arith.constant 82 : index
    %385 = memref.load %arg2[%c82] : memref<288xf32, #tpu.memory_space<smem>>
    %386 = vector.broadcast %385 : f32 to vector<16x16xf32>
    %387 = arith.mulf %386, %376 : vector<16x16xf32>
    %388 = arith.addf %352, %387 : vector<16x16xf32>
    %c83 = arith.constant 83 : index
    %389 = memref.load %arg2[%c83] : memref<288xf32, #tpu.memory_space<smem>>
    %390 = vector.broadcast %389 : f32 to vector<16x16xf32>
    %391 = arith.mulf %390, %376 : vector<16x16xf32>
    %392 = arith.addf %356, %391 : vector<16x16xf32>
    %c84 = arith.constant 84 : index
    %393 = memref.load %arg2[%c84] : memref<288xf32, #tpu.memory_space<smem>>
    %394 = vector.broadcast %393 : f32 to vector<16x16xf32>
    %395 = arith.mulf %394, %376 : vector<16x16xf32>
    %396 = arith.addf %360, %395 : vector<16x16xf32>
    %c85 = arith.constant 85 : index
    %397 = memref.load %arg2[%c85] : memref<288xf32, #tpu.memory_space<smem>>
    %398 = vector.broadcast %397 : f32 to vector<16x16xf32>
    %399 = arith.mulf %398, %376 : vector<16x16xf32>
    %400 = arith.addf %364, %399 : vector<16x16xf32>
    %c86 = arith.constant 86 : index
    %401 = memref.load %arg2[%c86] : memref<288xf32, #tpu.memory_space<smem>>
    %402 = vector.broadcast %401 : f32 to vector<16x16xf32>
    %403 = arith.mulf %402, %376 : vector<16x16xf32>
    %404 = arith.addf %368, %403 : vector<16x16xf32>
    %c87 = arith.constant 87 : index
    %405 = memref.load %arg2[%c87] : memref<288xf32, #tpu.memory_space<smem>>
    %406 = vector.broadcast %405 : f32 to vector<16x16xf32>
    %407 = arith.mulf %406, %376 : vector<16x16xf32>
    %408 = arith.addf %372, %407 : vector<16x16xf32>
    %c0_i32_41 = arith.constant 0 : i32
    %409 = arith.addi %4, %c0_i32_41 : i32
    %c3_42 = arith.constant 3 : index
    %410 = arith.index_cast %409 : i32 to index
    %c2_43 = arith.constant 2 : index
    %411 = vector.load %arg5[%c3_42, %410, %c2_43] : memref<4x18x18xf32, #tpu.memory_space<vmem>>, vector<1x16x16xf32>
    %412 = vector.shape_cast %411 : vector<1x16x16xf32> to vector<16x16xf32>
    %c88 = arith.constant 88 : index
    %413 = memref.load %arg2[%c88] : memref<288xf32, #tpu.memory_space<smem>>
    %414 = vector.broadcast %413 : f32 to vector<16x16xf32>
    %415 = arith.mulf %414, %412 : vector<16x16xf32>
    %416 = arith.addf %380, %415 : vector<16x16xf32>
    %c89 = arith.constant 89 : index
    %417 = memref.load %arg2[%c89] : memref<288xf32, #tpu.memory_space<smem>>
    %418 = vector.broadcast %417 : f32 to vector<16x16xf32>
    %419 = arith.mulf %418, %412 : vector<16x16xf32>
    %420 = arith.addf %384, %419 : vector<16x16xf32>
    %c90 = arith.constant 90 : index
    %421 = memref.load %arg2[%c90] : memref<288xf32, #tpu.memory_space<smem>>
    %422 = vector.broadcast %421 : f32 to vector<16x16xf32>
    %423 = arith.mulf %422, %412 : vector<16x16xf32>
    %424 = arith.addf %388, %423 : vector<16x16xf32>
    %c91 = arith.constant 91 : index
    %425 = memref.load %arg2[%c91] : memref<288xf32, #tpu.memory_space<smem>>
    %426 = vector.broadcast %425 : f32 to vector<16x16xf32>
    %427 = arith.mulf %426, %412 : vector<16x16xf32>
    %428 = arith.addf %392, %427 : vector<16x16xf32>
    %c92 = arith.constant 92 : index
    %429 = memref.load %arg2[%c92] : memref<288xf32, #tpu.memory_space<smem>>
    %430 = vector.broadcast %429 : f32 to vector<16x16xf32>
    %431 = arith.mulf %430, %412 : vector<16x16xf32>
    %432 = arith.addf %396, %431 : vector<16x16xf32>
    %c93 = arith.constant 93 : index
    %433 = memref.load %arg2[%c93] : memref<288xf32, #tpu.memory_space<smem>>
    %434 = vector.broadcast %433 : f32 to vector<16x16xf32>
    %435 = arith.mulf %434, %412 : vector<16x16xf32>
    %436 = arith.addf %400, %435 : vector<16x16xf32>
    %c94 = arith.constant 94 : index
    %437 = memref.load %arg2[%c94] : memref<288xf32, #tpu.memory_space<smem>>
    %438 = vector.broadcast %437 : f32 to vector<16x16xf32>
    %439 = arith.mulf %438, %412 : vector<16x16xf32>
    %440 = arith.addf %404, %439 : vector<16x16xf32>
    %c95 = arith.constant 95 : index
    %441 = memref.load %arg2[%c95] : memref<288xf32, #tpu.memory_space<smem>>
    %442 = vector.broadcast %441 : f32 to vector<16x16xf32>
    %443 = arith.mulf %442, %412 : vector<16x16xf32>
    %444 = arith.addf %408, %443 : vector<16x16xf32>
    %c1_i32 = arith.constant 1 : i32
    %445 = arith.addi %4, %c1_i32 : i32
    %c0_44 = arith.constant 0 : index
    %446 = arith.index_cast %445 : i32 to index
    %c0_45 = arith.constant 0 : index
    %447 = vector.load %arg5[%c0_44, %446, %c0_45] : memref<4x18x18xf32, #tpu.memory_space<vmem>>, vector<1x16x16xf32>
    %448 = vector.shape_cast %447 : vector<1x16x16xf32> to vector<16x16xf32>
    %c96 = arith.constant 96 : index
    %449 = memref.load %arg2[%c96] : memref<288xf32, #tpu.memory_space<smem>>
    %450 = vector.broadcast %449 : f32 to vector<16x16xf32>
    %451 = arith.mulf %450, %448 : vector<16x16xf32>
    %452 = arith.addf %416, %451 : vector<16x16xf32>
    %c97 = arith.constant 97 : index
    %453 = memref.load %arg2[%c97] : memref<288xf32, #tpu.memory_space<smem>>
    %454 = vector.broadcast %453 : f32 to vector<16x16xf32>
    %455 = arith.mulf %454, %448 : vector<16x16xf32>
    %456 = arith.addf %420, %455 : vector<16x16xf32>
    %c98 = arith.constant 98 : index
    %457 = memref.load %arg2[%c98] : memref<288xf32, #tpu.memory_space<smem>>
    %458 = vector.broadcast %457 : f32 to vector<16x16xf32>
    %459 = arith.mulf %458, %448 : vector<16x16xf32>
    %460 = arith.addf %424, %459 : vector<16x16xf32>
    %c99 = arith.constant 99 : index
    %461 = memref.load %arg2[%c99] : memref<288xf32, #tpu.memory_space<smem>>
    %462 = vector.broadcast %461 : f32 to vector<16x16xf32>
    %463 = arith.mulf %462, %448 : vector<16x16xf32>
    %464 = arith.addf %428, %463 : vector<16x16xf32>
    %c100 = arith.constant 100 : index
    %465 = memref.load %arg2[%c100] : memref<288xf32, #tpu.memory_space<smem>>
    %466 = vector.broadcast %465 : f32 to vector<16x16xf32>
    %467 = arith.mulf %466, %448 : vector<16x16xf32>
    %468 = arith.addf %432, %467 : vector<16x16xf32>
    %c101 = arith.constant 101 : index
    %469 = memref.load %arg2[%c101] : memref<288xf32, #tpu.memory_space<smem>>
    %470 = vector.broadcast %469 : f32 to vector<16x16xf32>
    %471 = arith.mulf %470, %448 : vector<16x16xf32>
    %472 = arith.addf %436, %471 : vector<16x16xf32>
    %c102 = arith.constant 102 : index
    %473 = memref.load %arg2[%c102] : memref<288xf32, #tpu.memory_space<smem>>
    %474 = vector.broadcast %473 : f32 to vector<16x16xf32>
    %475 = arith.mulf %474, %448 : vector<16x16xf32>
    %476 = arith.addf %440, %475 : vector<16x16xf32>
    %c103 = arith.constant 103 : index
    %477 = memref.load %arg2[%c103] : memref<288xf32, #tpu.memory_space<smem>>
    %478 = vector.broadcast %477 : f32 to vector<16x16xf32>
    %479 = arith.mulf %478, %448 : vector<16x16xf32>
    %480 = arith.addf %444, %479 : vector<16x16xf32>
    %c1_i32_46 = arith.constant 1 : i32
    %481 = arith.addi %4, %c1_i32_46 : i32
    %c1_47 = arith.constant 1 : index
    %482 = arith.index_cast %481 : i32 to index
    %c0_48 = arith.constant 0 : index
    %483 = vector.load %arg5[%c1_47, %482, %c0_48] : memref<4x18x18xf32, #tpu.memory_space<vmem>>, vector<1x16x16xf32>
    %484 = vector.shape_cast %483 : vector<1x16x16xf32> to vector<16x16xf32>
    %c104 = arith.constant 104 : index
    %485 = memref.load %arg2[%c104] : memref<288xf32, #tpu.memory_space<smem>>
    %486 = vector.broadcast %485 : f32 to vector<16x16xf32>
    %487 = arith.mulf %486, %484 : vector<16x16xf32>
    %488 = arith.addf %452, %487 : vector<16x16xf32>
    %c105 = arith.constant 105 : index
    %489 = memref.load %arg2[%c105] : memref<288xf32, #tpu.memory_space<smem>>
    %490 = vector.broadcast %489 : f32 to vector<16x16xf32>
    %491 = arith.mulf %490, %484 : vector<16x16xf32>
    %492 = arith.addf %456, %491 : vector<16x16xf32>
    %c106 = arith.constant 106 : index
    %493 = memref.load %arg2[%c106] : memref<288xf32, #tpu.memory_space<smem>>
    %494 = vector.broadcast %493 : f32 to vector<16x16xf32>
    %495 = arith.mulf %494, %484 : vector<16x16xf32>
    %496 = arith.addf %460, %495 : vector<16x16xf32>
    %c107 = arith.constant 107 : index
    %497 = memref.load %arg2[%c107] : memref<288xf32, #tpu.memory_space<smem>>
    %498 = vector.broadcast %497 : f32 to vector<16x16xf32>
    %499 = arith.mulf %498, %484 : vector<16x16xf32>
    %500 = arith.addf %464, %499 : vector<16x16xf32>
    %c108 = arith.constant 108 : index
    %501 = memref.load %arg2[%c108] : memref<288xf32, #tpu.memory_space<smem>>
    %502 = vector.broadcast %501 : f32 to vector<16x16xf32>
    %503 = arith.mulf %502, %484 : vector<16x16xf32>
    %504 = arith.addf %468, %503 : vector<16x16xf32>
    %c109 = arith.constant 109 : index
    %505 = memref.load %arg2[%c109] : memref<288xf32, #tpu.memory_space<smem>>
    %506 = vector.broadcast %505 : f32 to vector<16x16xf32>
    %507 = arith.mulf %506, %484 : vector<16x16xf32>
    %508 = arith.addf %472, %507 : vector<16x16xf32>
    %c110 = arith.constant 110 : index
    %509 = memref.load %arg2[%c110] : memref<288xf32, #tpu.memory_space<smem>>
    %510 = vector.broadcast %509 : f32 to vector<16x16xf32>
    %511 = arith.mulf %510, %484 : vector<16x16xf32>
    %512 = arith.addf %476, %511 : vector<16x16xf32>
    %c111 = arith.constant 111 : index
    %513 = memref.load %arg2[%c111] : memref<288xf32, #tpu.memory_space<smem>>
    %514 = vector.broadcast %513 : f32 to vector<16x16xf32>
    %515 = arith.mulf %514, %484 : vector<16x16xf32>
    %516 = arith.addf %480, %515 : vector<16x16xf32>
    %c1_i32_49 = arith.constant 1 : i32
    %517 = arith.addi %4, %c1_i32_49 : i32
    %c2_50 = arith.constant 2 : index
    %518 = arith.index_cast %517 : i32 to index
    %c0_51 = arith.constant 0 : index
    %519 = vector.load %arg5[%c2_50, %518, %c0_51] : memref<4x18x18xf32, #tpu.memory_space<vmem>>, vector<1x16x16xf32>
    %520 = vector.shape_cast %519 : vector<1x16x16xf32> to vector<16x16xf32>
    %c112 = arith.constant 112 : index
    %521 = memref.load %arg2[%c112] : memref<288xf32, #tpu.memory_space<smem>>
    %522 = vector.broadcast %521 : f32 to vector<16x16xf32>
    %523 = arith.mulf %522, %520 : vector<16x16xf32>
    %524 = arith.addf %488, %523 : vector<16x16xf32>
    %c113 = arith.constant 113 : index
    %525 = memref.load %arg2[%c113] : memref<288xf32, #tpu.memory_space<smem>>
    %526 = vector.broadcast %525 : f32 to vector<16x16xf32>
    %527 = arith.mulf %526, %520 : vector<16x16xf32>
    %528 = arith.addf %492, %527 : vector<16x16xf32>
    %c114 = arith.constant 114 : index
    %529 = memref.load %arg2[%c114] : memref<288xf32, #tpu.memory_space<smem>>
    %530 = vector.broadcast %529 : f32 to vector<16x16xf32>
    %531 = arith.mulf %530, %520 : vector<16x16xf32>
    %532 = arith.addf %496, %531 : vector<16x16xf32>
    %c115 = arith.constant 115 : index
    %533 = memref.load %arg2[%c115] : memref<288xf32, #tpu.memory_space<smem>>
    %534 = vector.broadcast %533 : f32 to vector<16x16xf32>
    %535 = arith.mulf %534, %520 : vector<16x16xf32>
    %536 = arith.addf %500, %535 : vector<16x16xf32>
    %c116 = arith.constant 116 : index
    %537 = memref.load %arg2[%c116] : memref<288xf32, #tpu.memory_space<smem>>
    %538 = vector.broadcast %537 : f32 to vector<16x16xf32>
    %539 = arith.mulf %538, %520 : vector<16x16xf32>
    %540 = arith.addf %504, %539 : vector<16x16xf32>
    %c117 = arith.constant 117 : index
    %541 = memref.load %arg2[%c117] : memref<288xf32, #tpu.memory_space<smem>>
    %542 = vector.broadcast %541 : f32 to vector<16x16xf32>
    %543 = arith.mulf %542, %520 : vector<16x16xf32>
    %544 = arith.addf %508, %543 : vector<16x16xf32>
    %c118 = arith.constant 118 : index
    %545 = memref.load %arg2[%c118] : memref<288xf32, #tpu.memory_space<smem>>
    %546 = vector.broadcast %545 : f32 to vector<16x16xf32>
    %547 = arith.mulf %546, %520 : vector<16x16xf32>
    %548 = arith.addf %512, %547 : vector<16x16xf32>
    %c119 = arith.constant 119 : index
    %549 = memref.load %arg2[%c119] : memref<288xf32, #tpu.memory_space<smem>>
    %550 = vector.broadcast %549 : f32 to vector<16x16xf32>
    %551 = arith.mulf %550, %520 : vector<16x16xf32>
    %552 = arith.addf %516, %551 : vector<16x16xf32>
    %c1_i32_52 = arith.constant 1 : i32
    %553 = arith.addi %4, %c1_i32_52 : i32
    %c3_53 = arith.constant 3 : index
    %554 = arith.index_cast %553 : i32 to index
    %c0_54 = arith.constant 0 : index
    %555 = vector.load %arg5[%c3_53, %554, %c0_54] : memref<4x18x18xf32, #tpu.memory_space<vmem>>, vector<1x16x16xf32>
    %556 = vector.shape_cast %555 : vector<1x16x16xf32> to vector<16x16xf32>
    %c120 = arith.constant 120 : index
    %557 = memref.load %arg2[%c120] : memref<288xf32, #tpu.memory_space<smem>>
    %558 = vector.broadcast %557 : f32 to vector<16x16xf32>
    %559 = arith.mulf %558, %556 : vector<16x16xf32>
    %560 = arith.addf %524, %559 : vector<16x16xf32>
    %c121 = arith.constant 121 : index
    %561 = memref.load %arg2[%c121] : memref<288xf32, #tpu.memory_space<smem>>
    %562 = vector.broadcast %561 : f32 to vector<16x16xf32>
    %563 = arith.mulf %562, %556 : vector<16x16xf32>
    %564 = arith.addf %528, %563 : vector<16x16xf32>
    %c122 = arith.constant 122 : index
    %565 = memref.load %arg2[%c122] : memref<288xf32, #tpu.memory_space<smem>>
    %566 = vector.broadcast %565 : f32 to vector<16x16xf32>
    %567 = arith.mulf %566, %556 : vector<16x16xf32>
    %568 = arith.addf %532, %567 : vector<16x16xf32>
    %c123 = arith.constant 123 : index
    %569 = memref.load %arg2[%c123] : memref<288xf32, #tpu.memory_space<smem>>
    %570 = vector.broadcast %569 : f32 to vector<16x16xf32>
    %571 = arith.mulf %570, %556 : vector<16x16xf32>
    %572 = arith.addf %536, %571 : vector<16x16xf32>
    %c124 = arith.constant 124 : index
    %573 = memref.load %arg2[%c124] : memref<288xf32, #tpu.memory_space<smem>>
    %574 = vector.broadcast %573 : f32 to vector<16x16xf32>
    %575 = arith.mulf %574, %556 : vector<16x16xf32>
    %576 = arith.addf %540, %575 : vector<16x16xf32>
    %c125 = arith.constant 125 : index
    %577 = memref.load %arg2[%c125] : memref<288xf32, #tpu.memory_space<smem>>
    %578 = vector.broadcast %577 : f32 to vector<16x16xf32>
    %579 = arith.mulf %578, %556 : vector<16x16xf32>
    %580 = arith.addf %544, %579 : vector<16x16xf32>
    %c126 = arith.constant 126 : index
    %581 = memref.load %arg2[%c126] : memref<288xf32, #tpu.memory_space<smem>>
    %582 = vector.broadcast %581 : f32 to vector<16x16xf32>
    %583 = arith.mulf %582, %556 : vector<16x16xf32>
    %584 = arith.addf %548, %583 : vector<16x16xf32>
    %c127 = arith.constant 127 : index
    %585 = memref.load %arg2[%c127] : memref<288xf32, #tpu.memory_space<smem>>
    %586 = vector.broadcast %585 : f32 to vector<16x16xf32>
    %587 = arith.mulf %586, %556 : vector<16x16xf32>
    %588 = arith.addf %552, %587 : vector<16x16xf32>
    %c1_i32_55 = arith.constant 1 : i32
    %589 = arith.addi %4, %c1_i32_55 : i32
    %c0_56 = arith.constant 0 : index
    %590 = arith.index_cast %589 : i32 to index
    %c1_57 = arith.constant 1 : index
    %591 = vector.load %arg5[%c0_56, %590, %c1_57] : memref<4x18x18xf32, #tpu.memory_space<vmem>>, vector<1x16x16xf32>
    %592 = vector.shape_cast %591 : vector<1x16x16xf32> to vector<16x16xf32>
    %c128 = arith.constant 128 : index
    %593 = memref.load %arg2[%c128] : memref<288xf32, #tpu.memory_space<smem>>
    %594 = vector.broadcast %593 : f32 to vector<16x16xf32>
    %595 = arith.mulf %594, %592 : vector<16x16xf32>
    %596 = arith.addf %560, %595 : vector<16x16xf32>
    %c129 = arith.constant 129 : index
    %597 = memref.load %arg2[%c129] : memref<288xf32, #tpu.memory_space<smem>>
    %598 = vector.broadcast %597 : f32 to vector<16x16xf32>
    %599 = arith.mulf %598, %592 : vector<16x16xf32>
    %600 = arith.addf %564, %599 : vector<16x16xf32>
    %c130 = arith.constant 130 : index
    %601 = memref.load %arg2[%c130] : memref<288xf32, #tpu.memory_space<smem>>
    %602 = vector.broadcast %601 : f32 to vector<16x16xf32>
    %603 = arith.mulf %602, %592 : vector<16x16xf32>
    %604 = arith.addf %568, %603 : vector<16x16xf32>
    %c131 = arith.constant 131 : index
    %605 = memref.load %arg2[%c131] : memref<288xf32, #tpu.memory_space<smem>>
    %606 = vector.broadcast %605 : f32 to vector<16x16xf32>
    %607 = arith.mulf %606, %592 : vector<16x16xf32>
    %608 = arith.addf %572, %607 : vector<16x16xf32>
    %c132 = arith.constant 132 : index
    %609 = memref.load %arg2[%c132] : memref<288xf32, #tpu.memory_space<smem>>
    %610 = vector.broadcast %609 : f32 to vector<16x16xf32>
    %611 = arith.mulf %610, %592 : vector<16x16xf32>
    %612 = arith.addf %576, %611 : vector<16x16xf32>
    %c133 = arith.constant 133 : index
    %613 = memref.load %arg2[%c133] : memref<288xf32, #tpu.memory_space<smem>>
    %614 = vector.broadcast %613 : f32 to vector<16x16xf32>
    %615 = arith.mulf %614, %592 : vector<16x16xf32>
    %616 = arith.addf %580, %615 : vector<16x16xf32>
    %c134 = arith.constant 134 : index
    %617 = memref.load %arg2[%c134] : memref<288xf32, #tpu.memory_space<smem>>
    %618 = vector.broadcast %617 : f32 to vector<16x16xf32>
    %619 = arith.mulf %618, %592 : vector<16x16xf32>
    %620 = arith.addf %584, %619 : vector<16x16xf32>
    %c135 = arith.constant 135 : index
    %621 = memref.load %arg2[%c135] : memref<288xf32, #tpu.memory_space<smem>>
    %622 = vector.broadcast %621 : f32 to vector<16x16xf32>
    %623 = arith.mulf %622, %592 : vector<16x16xf32>
    %624 = arith.addf %588, %623 : vector<16x16xf32>
    %c1_i32_58 = arith.constant 1 : i32
    %625 = arith.addi %4, %c1_i32_58 : i32
    %c1_59 = arith.constant 1 : index
    %626 = arith.index_cast %625 : i32 to index
    %c1_60 = arith.constant 1 : index
    %627 = vector.load %arg5[%c1_59, %626, %c1_60] : memref<4x18x18xf32, #tpu.memory_space<vmem>>, vector<1x16x16xf32>
    %628 = vector.shape_cast %627 : vector<1x16x16xf32> to vector<16x16xf32>
    %c136 = arith.constant 136 : index
    %629 = memref.load %arg2[%c136] : memref<288xf32, #tpu.memory_space<smem>>
    %630 = vector.broadcast %629 : f32 to vector<16x16xf32>
    %631 = arith.mulf %630, %628 : vector<16x16xf32>
    %632 = arith.addf %596, %631 : vector<16x16xf32>
    %c137 = arith.constant 137 : index
    %633 = memref.load %arg2[%c137] : memref<288xf32, #tpu.memory_space<smem>>
    %634 = vector.broadcast %633 : f32 to vector<16x16xf32>
    %635 = arith.mulf %634, %628 : vector<16x16xf32>
    %636 = arith.addf %600, %635 : vector<16x16xf32>
    %c138 = arith.constant 138 : index
    %637 = memref.load %arg2[%c138] : memref<288xf32, #tpu.memory_space<smem>>
    %638 = vector.broadcast %637 : f32 to vector<16x16xf32>
    %639 = arith.mulf %638, %628 : vector<16x16xf32>
    %640 = arith.addf %604, %639 : vector<16x16xf32>
    %c139 = arith.constant 139 : index
    %641 = memref.load %arg2[%c139] : memref<288xf32, #tpu.memory_space<smem>>
    %642 = vector.broadcast %641 : f32 to vector<16x16xf32>
    %643 = arith.mulf %642, %628 : vector<16x16xf32>
    %644 = arith.addf %608, %643 : vector<16x16xf32>
    %c140 = arith.constant 140 : index
    %645 = memref.load %arg2[%c140] : memref<288xf32, #tpu.memory_space<smem>>
    %646 = vector.broadcast %645 : f32 to vector<16x16xf32>
    %647 = arith.mulf %646, %628 : vector<16x16xf32>
    %648 = arith.addf %612, %647 : vector<16x16xf32>
    %c141 = arith.constant 141 : index
    %649 = memref.load %arg2[%c141] : memref<288xf32, #tpu.memory_space<smem>>
    %650 = vector.broadcast %649 : f32 to vector<16x16xf32>
    %651 = arith.mulf %650, %628 : vector<16x16xf32>
    %652 = arith.addf %616, %651 : vector<16x16xf32>
    %c142 = arith.constant 142 : index
    %653 = memref.load %arg2[%c142] : memref<288xf32, #tpu.memory_space<smem>>
    %654 = vector.broadcast %653 : f32 to vector<16x16xf32>
    %655 = arith.mulf %654, %628 : vector<16x16xf32>
    %656 = arith.addf %620, %655 : vector<16x16xf32>
    %c143 = arith.constant 143 : index
    %657 = memref.load %arg2[%c143] : memref<288xf32, #tpu.memory_space<smem>>
    %658 = vector.broadcast %657 : f32 to vector<16x16xf32>
    %659 = arith.mulf %658, %628 : vector<16x16xf32>
    %660 = arith.addf %624, %659 : vector<16x16xf32>
    %c1_i32_61 = arith.constant 1 : i32
    %661 = arith.addi %4, %c1_i32_61 : i32
    %c2_62 = arith.constant 2 : index
    %662 = arith.index_cast %661 : i32 to index
    %c1_63 = arith.constant 1 : index
    %663 = vector.load %arg5[%c2_62, %662, %c1_63] : memref<4x18x18xf32, #tpu.memory_space<vmem>>, vector<1x16x16xf32>
    %664 = vector.shape_cast %663 : vector<1x16x16xf32> to vector<16x16xf32>
    %c144 = arith.constant 144 : index
    %665 = memref.load %arg2[%c144] : memref<288xf32, #tpu.memory_space<smem>>
    %666 = vector.broadcast %665 : f32 to vector<16x16xf32>
    %667 = arith.mulf %666, %664 : vector<16x16xf32>
    %668 = arith.addf %632, %667 : vector<16x16xf32>
    %c145 = arith.constant 145 : index
    %669 = memref.load %arg2[%c145] : memref<288xf32, #tpu.memory_space<smem>>
    %670 = vector.broadcast %669 : f32 to vector<16x16xf32>
    %671 = arith.mulf %670, %664 : vector<16x16xf32>
    %672 = arith.addf %636, %671 : vector<16x16xf32>
    %c146 = arith.constant 146 : index
    %673 = memref.load %arg2[%c146] : memref<288xf32, #tpu.memory_space<smem>>
    %674 = vector.broadcast %673 : f32 to vector<16x16xf32>
    %675 = arith.mulf %674, %664 : vector<16x16xf32>
    %676 = arith.addf %640, %675 : vector<16x16xf32>
    %c147 = arith.constant 147 : index
    %677 = memref.load %arg2[%c147] : memref<288xf32, #tpu.memory_space<smem>>
    %678 = vector.broadcast %677 : f32 to vector<16x16xf32>
    %679 = arith.mulf %678, %664 : vector<16x16xf32>
    %680 = arith.addf %644, %679 : vector<16x16xf32>
    %c148 = arith.constant 148 : index
    %681 = memref.load %arg2[%c148] : memref<288xf32, #tpu.memory_space<smem>>
    %682 = vector.broadcast %681 : f32 to vector<16x16xf32>
    %683 = arith.mulf %682, %664 : vector<16x16xf32>
    %684 = arith.addf %648, %683 : vector<16x16xf32>
    %c149 = arith.constant 149 : index
    %685 = memref.load %arg2[%c149] : memref<288xf32, #tpu.memory_space<smem>>
    %686 = vector.broadcast %685 : f32 to vector<16x16xf32>
    %687 = arith.mulf %686, %664 : vector<16x16xf32>
    %688 = arith.addf %652, %687 : vector<16x16xf32>
    %c150 = arith.constant 150 : index
    %689 = memref.load %arg2[%c150] : memref<288xf32, #tpu.memory_space<smem>>
    %690 = vector.broadcast %689 : f32 to vector<16x16xf32>
    %691 = arith.mulf %690, %664 : vector<16x16xf32>
    %692 = arith.addf %656, %691 : vector<16x16xf32>
    %c151 = arith.constant 151 : index
    %693 = memref.load %arg2[%c151] : memref<288xf32, #tpu.memory_space<smem>>
    %694 = vector.broadcast %693 : f32 to vector<16x16xf32>
    %695 = arith.mulf %694, %664 : vector<16x16xf32>
    %696 = arith.addf %660, %695 : vector<16x16xf32>
    %c1_i32_64 = arith.constant 1 : i32
    %697 = arith.addi %4, %c1_i32_64 : i32
    %c3_65 = arith.constant 3 : index
    %698 = arith.index_cast %697 : i32 to index
    %c1_66 = arith.constant 1 : index
    %699 = vector.load %arg5[%c3_65, %698, %c1_66] : memref<4x18x18xf32, #tpu.memory_space<vmem>>, vector<1x16x16xf32>
    %700 = vector.shape_cast %699 : vector<1x16x16xf32> to vector<16x16xf32>
    %c152 = arith.constant 152 : index
    %701 = memref.load %arg2[%c152] : memref<288xf32, #tpu.memory_space<smem>>
    %702 = vector.broadcast %701 : f32 to vector<16x16xf32>
    %703 = arith.mulf %702, %700 : vector<16x16xf32>
    %704 = arith.addf %668, %703 : vector<16x16xf32>
    %c153 = arith.constant 153 : index
    %705 = memref.load %arg2[%c153] : memref<288xf32, #tpu.memory_space<smem>>
    %706 = vector.broadcast %705 : f32 to vector<16x16xf32>
    %707 = arith.mulf %706, %700 : vector<16x16xf32>
    %708 = arith.addf %672, %707 : vector<16x16xf32>
    %c154 = arith.constant 154 : index
    %709 = memref.load %arg2[%c154] : memref<288xf32, #tpu.memory_space<smem>>
    %710 = vector.broadcast %709 : f32 to vector<16x16xf32>
    %711 = arith.mulf %710, %700 : vector<16x16xf32>
    %712 = arith.addf %676, %711 : vector<16x16xf32>
    %c155 = arith.constant 155 : index
    %713 = memref.load %arg2[%c155] : memref<288xf32, #tpu.memory_space<smem>>
    %714 = vector.broadcast %713 : f32 to vector<16x16xf32>
    %715 = arith.mulf %714, %700 : vector<16x16xf32>
    %716 = arith.addf %680, %715 : vector<16x16xf32>
    %c156 = arith.constant 156 : index
    %717 = memref.load %arg2[%c156] : memref<288xf32, #tpu.memory_space<smem>>
    %718 = vector.broadcast %717 : f32 to vector<16x16xf32>
    %719 = arith.mulf %718, %700 : vector<16x16xf32>
    %720 = arith.addf %684, %719 : vector<16x16xf32>
    %c157 = arith.constant 157 : index
    %721 = memref.load %arg2[%c157] : memref<288xf32, #tpu.memory_space<smem>>
    %722 = vector.broadcast %721 : f32 to vector<16x16xf32>
    %723 = arith.mulf %722, %700 : vector<16x16xf32>
    %724 = arith.addf %688, %723 : vector<16x16xf32>
    %c158 = arith.constant 158 : index
    %725 = memref.load %arg2[%c158] : memref<288xf32, #tpu.memory_space<smem>>
    %726 = vector.broadcast %725 : f32 to vector<16x16xf32>
    %727 = arith.mulf %726, %700 : vector<16x16xf32>
    %728 = arith.addf %692, %727 : vector<16x16xf32>
    %c159 = arith.constant 159 : index
    %729 = memref.load %arg2[%c159] : memref<288xf32, #tpu.memory_space<smem>>
    %730 = vector.broadcast %729 : f32 to vector<16x16xf32>
    %731 = arith.mulf %730, %700 : vector<16x16xf32>
    %732 = arith.addf %696, %731 : vector<16x16xf32>
    %c1_i32_67 = arith.constant 1 : i32
    %733 = arith.addi %4, %c1_i32_67 : i32
    %c0_68 = arith.constant 0 : index
    %734 = arith.index_cast %733 : i32 to index
    %c2_69 = arith.constant 2 : index
    %735 = vector.load %arg5[%c0_68, %734, %c2_69] : memref<4x18x18xf32, #tpu.memory_space<vmem>>, vector<1x16x16xf32>
    %736 = vector.shape_cast %735 : vector<1x16x16xf32> to vector<16x16xf32>
    %c160 = arith.constant 160 : index
    %737 = memref.load %arg2[%c160] : memref<288xf32, #tpu.memory_space<smem>>
    %738 = vector.broadcast %737 : f32 to vector<16x16xf32>
    %739 = arith.mulf %738, %736 : vector<16x16xf32>
    %740 = arith.addf %704, %739 : vector<16x16xf32>
    %c161 = arith.constant 161 : index
    %741 = memref.load %arg2[%c161] : memref<288xf32, #tpu.memory_space<smem>>
    %742 = vector.broadcast %741 : f32 to vector<16x16xf32>
    %743 = arith.mulf %742, %736 : vector<16x16xf32>
    %744 = arith.addf %708, %743 : vector<16x16xf32>
    %c162 = arith.constant 162 : index
    %745 = memref.load %arg2[%c162] : memref<288xf32, #tpu.memory_space<smem>>
    %746 = vector.broadcast %745 : f32 to vector<16x16xf32>
    %747 = arith.mulf %746, %736 : vector<16x16xf32>
    %748 = arith.addf %712, %747 : vector<16x16xf32>
    %c163 = arith.constant 163 : index
    %749 = memref.load %arg2[%c163] : memref<288xf32, #tpu.memory_space<smem>>
    %750 = vector.broadcast %749 : f32 to vector<16x16xf32>
    %751 = arith.mulf %750, %736 : vector<16x16xf32>
    %752 = arith.addf %716, %751 : vector<16x16xf32>
    %c164 = arith.constant 164 : index
    %753 = memref.load %arg2[%c164] : memref<288xf32, #tpu.memory_space<smem>>
    %754 = vector.broadcast %753 : f32 to vector<16x16xf32>
    %755 = arith.mulf %754, %736 : vector<16x16xf32>
    %756 = arith.addf %720, %755 : vector<16x16xf32>
    %c165 = arith.constant 165 : index
    %757 = memref.load %arg2[%c165] : memref<288xf32, #tpu.memory_space<smem>>
    %758 = vector.broadcast %757 : f32 to vector<16x16xf32>
    %759 = arith.mulf %758, %736 : vector<16x16xf32>
    %760 = arith.addf %724, %759 : vector<16x16xf32>
    %c166 = arith.constant 166 : index
    %761 = memref.load %arg2[%c166] : memref<288xf32, #tpu.memory_space<smem>>
    %762 = vector.broadcast %761 : f32 to vector<16x16xf32>
    %763 = arith.mulf %762, %736 : vector<16x16xf32>
    %764 = arith.addf %728, %763 : vector<16x16xf32>
    %c167 = arith.constant 167 : index
    %765 = memref.load %arg2[%c167] : memref<288xf32, #tpu.memory_space<smem>>
    %766 = vector.broadcast %765 : f32 to vector<16x16xf32>
    %767 = arith.mulf %766, %736 : vector<16x16xf32>
    %768 = arith.addf %732, %767 : vector<16x16xf32>
    %c1_i32_70 = arith.constant 1 : i32
    %769 = arith.addi %4, %c1_i32_70 : i32
    %c1_71 = arith.constant 1 : index
    %770 = arith.index_cast %769 : i32 to index
    %c2_72 = arith.constant 2 : index
    %771 = vector.load %arg5[%c1_71, %770, %c2_72] : memref<4x18x18xf32, #tpu.memory_space<vmem>>, vector<1x16x16xf32>
    %772 = vector.shape_cast %771 : vector<1x16x16xf32> to vector<16x16xf32>
    %c168 = arith.constant 168 : index
    %773 = memref.load %arg2[%c168] : memref<288xf32, #tpu.memory_space<smem>>
    %774 = vector.broadcast %773 : f32 to vector<16x16xf32>
    %775 = arith.mulf %774, %772 : vector<16x16xf32>
    %776 = arith.addf %740, %775 : vector<16x16xf32>
    %c169 = arith.constant 169 : index
    %777 = memref.load %arg2[%c169] : memref<288xf32, #tpu.memory_space<smem>>
    %778 = vector.broadcast %777 : f32 to vector<16x16xf32>
    %779 = arith.mulf %778, %772 : vector<16x16xf32>
    %780 = arith.addf %744, %779 : vector<16x16xf32>
    %c170 = arith.constant 170 : index
    %781 = memref.load %arg2[%c170] : memref<288xf32, #tpu.memory_space<smem>>
    %782 = vector.broadcast %781 : f32 to vector<16x16xf32>
    %783 = arith.mulf %782, %772 : vector<16x16xf32>
    %784 = arith.addf %748, %783 : vector<16x16xf32>
    %c171 = arith.constant 171 : index
    %785 = memref.load %arg2[%c171] : memref<288xf32, #tpu.memory_space<smem>>
    %786 = vector.broadcast %785 : f32 to vector<16x16xf32>
    %787 = arith.mulf %786, %772 : vector<16x16xf32>
    %788 = arith.addf %752, %787 : vector<16x16xf32>
    %c172 = arith.constant 172 : index
    %789 = memref.load %arg2[%c172] : memref<288xf32, #tpu.memory_space<smem>>
    %790 = vector.broadcast %789 : f32 to vector<16x16xf32>
    %791 = arith.mulf %790, %772 : vector<16x16xf32>
    %792 = arith.addf %756, %791 : vector<16x16xf32>
    %c173 = arith.constant 173 : index
    %793 = memref.load %arg2[%c173] : memref<288xf32, #tpu.memory_space<smem>>
    %794 = vector.broadcast %793 : f32 to vector<16x16xf32>
    %795 = arith.mulf %794, %772 : vector<16x16xf32>
    %796 = arith.addf %760, %795 : vector<16x16xf32>
    %c174 = arith.constant 174 : index
    %797 = memref.load %arg2[%c174] : memref<288xf32, #tpu.memory_space<smem>>
    %798 = vector.broadcast %797 : f32 to vector<16x16xf32>
    %799 = arith.mulf %798, %772 : vector<16x16xf32>
    %800 = arith.addf %764, %799 : vector<16x16xf32>
    %c175 = arith.constant 175 : index
    %801 = memref.load %arg2[%c175] : memref<288xf32, #tpu.memory_space<smem>>
    %802 = vector.broadcast %801 : f32 to vector<16x16xf32>
    %803 = arith.mulf %802, %772 : vector<16x16xf32>
    %804 = arith.addf %768, %803 : vector<16x16xf32>
    %c1_i32_73 = arith.constant 1 : i32
    %805 = arith.addi %4, %c1_i32_73 : i32
    %c2_74 = arith.constant 2 : index
    %806 = arith.index_cast %805 : i32 to index
    %c2_75 = arith.constant 2 : index
    %807 = vector.load %arg5[%c2_74, %806, %c2_75] : memref<4x18x18xf32, #tpu.memory_space<vmem>>, vector<1x16x16xf32>
    %808 = vector.shape_cast %807 : vector<1x16x16xf32> to vector<16x16xf32>
    %c176 = arith.constant 176 : index
    %809 = memref.load %arg2[%c176] : memref<288xf32, #tpu.memory_space<smem>>
    %810 = vector.broadcast %809 : f32 to vector<16x16xf32>
    %811 = arith.mulf %810, %808 : vector<16x16xf32>
    %812 = arith.addf %776, %811 : vector<16x16xf32>
    %c177 = arith.constant 177 : index
    %813 = memref.load %arg2[%c177] : memref<288xf32, #tpu.memory_space<smem>>
    %814 = vector.broadcast %813 : f32 to vector<16x16xf32>
    %815 = arith.mulf %814, %808 : vector<16x16xf32>
    %816 = arith.addf %780, %815 : vector<16x16xf32>
    %c178 = arith.constant 178 : index
    %817 = memref.load %arg2[%c178] : memref<288xf32, #tpu.memory_space<smem>>
    %818 = vector.broadcast %817 : f32 to vector<16x16xf32>
    %819 = arith.mulf %818, %808 : vector<16x16xf32>
    %820 = arith.addf %784, %819 : vector<16x16xf32>
    %c179 = arith.constant 179 : index
    %821 = memref.load %arg2[%c179] : memref<288xf32, #tpu.memory_space<smem>>
    %822 = vector.broadcast %821 : f32 to vector<16x16xf32>
    %823 = arith.mulf %822, %808 : vector<16x16xf32>
    %824 = arith.addf %788, %823 : vector<16x16xf32>
    %c180 = arith.constant 180 : index
    %825 = memref.load %arg2[%c180] : memref<288xf32, #tpu.memory_space<smem>>
    %826 = vector.broadcast %825 : f32 to vector<16x16xf32>
    %827 = arith.mulf %826, %808 : vector<16x16xf32>
    %828 = arith.addf %792, %827 : vector<16x16xf32>
    %c181 = arith.constant 181 : index
    %829 = memref.load %arg2[%c181] : memref<288xf32, #tpu.memory_space<smem>>
    %830 = vector.broadcast %829 : f32 to vector<16x16xf32>
    %831 = arith.mulf %830, %808 : vector<16x16xf32>
    %832 = arith.addf %796, %831 : vector<16x16xf32>
    %c182 = arith.constant 182 : index
    %833 = memref.load %arg2[%c182] : memref<288xf32, #tpu.memory_space<smem>>
    %834 = vector.broadcast %833 : f32 to vector<16x16xf32>
    %835 = arith.mulf %834, %808 : vector<16x16xf32>
    %836 = arith.addf %800, %835 : vector<16x16xf32>
    %c183 = arith.constant 183 : index
    %837 = memref.load %arg2[%c183] : memref<288xf32, #tpu.memory_space<smem>>
    %838 = vector.broadcast %837 : f32 to vector<16x16xf32>
    %839 = arith.mulf %838, %808 : vector<16x16xf32>
    %840 = arith.addf %804, %839 : vector<16x16xf32>
    %c1_i32_76 = arith.constant 1 : i32
    %841 = arith.addi %4, %c1_i32_76 : i32
    %c3_77 = arith.constant 3 : index
    %842 = arith.index_cast %841 : i32 to index
    %c2_78 = arith.constant 2 : index
    %843 = vector.load %arg5[%c3_77, %842, %c2_78] : memref<4x18x18xf32, #tpu.memory_space<vmem>>, vector<1x16x16xf32>
    %844 = vector.shape_cast %843 : vector<1x16x16xf32> to vector<16x16xf32>
    %c184 = arith.constant 184 : index
    %845 = memref.load %arg2[%c184] : memref<288xf32, #tpu.memory_space<smem>>
    %846 = vector.broadcast %845 : f32 to vector<16x16xf32>
    %847 = arith.mulf %846, %844 : vector<16x16xf32>
    %848 = arith.addf %812, %847 : vector<16x16xf32>
    %c185 = arith.constant 185 : index
    %849 = memref.load %arg2[%c185] : memref<288xf32, #tpu.memory_space<smem>>
    %850 = vector.broadcast %849 : f32 to vector<16x16xf32>
    %851 = arith.mulf %850, %844 : vector<16x16xf32>
    %852 = arith.addf %816, %851 : vector<16x16xf32>
    %c186 = arith.constant 186 : index
    %853 = memref.load %arg2[%c186] : memref<288xf32, #tpu.memory_space<smem>>
    %854 = vector.broadcast %853 : f32 to vector<16x16xf32>
    %855 = arith.mulf %854, %844 : vector<16x16xf32>
    %856 = arith.addf %820, %855 : vector<16x16xf32>
    %c187 = arith.constant 187 : index
    %857 = memref.load %arg2[%c187] : memref<288xf32, #tpu.memory_space<smem>>
    %858 = vector.broadcast %857 : f32 to vector<16x16xf32>
    %859 = arith.mulf %858, %844 : vector<16x16xf32>
    %860 = arith.addf %824, %859 : vector<16x16xf32>
    %c188 = arith.constant 188 : index
    %861 = memref.load %arg2[%c188] : memref<288xf32, #tpu.memory_space<smem>>
    %862 = vector.broadcast %861 : f32 to vector<16x16xf32>
    %863 = arith.mulf %862, %844 : vector<16x16xf32>
    %864 = arith.addf %828, %863 : vector<16x16xf32>
    %c189 = arith.constant 189 : index
    %865 = memref.load %arg2[%c189] : memref<288xf32, #tpu.memory_space<smem>>
    %866 = vector.broadcast %865 : f32 to vector<16x16xf32>
    %867 = arith.mulf %866, %844 : vector<16x16xf32>
    %868 = arith.addf %832, %867 : vector<16x16xf32>
    %c190 = arith.constant 190 : index
    %869 = memref.load %arg2[%c190] : memref<288xf32, #tpu.memory_space<smem>>
    %870 = vector.broadcast %869 : f32 to vector<16x16xf32>
    %871 = arith.mulf %870, %844 : vector<16x16xf32>
    %872 = arith.addf %836, %871 : vector<16x16xf32>
    %c191 = arith.constant 191 : index
    %873 = memref.load %arg2[%c191] : memref<288xf32, #tpu.memory_space<smem>>
    %874 = vector.broadcast %873 : f32 to vector<16x16xf32>
    %875 = arith.mulf %874, %844 : vector<16x16xf32>
    %876 = arith.addf %840, %875 : vector<16x16xf32>
    %c2_i32 = arith.constant 2 : i32
    %877 = arith.addi %4, %c2_i32 : i32
    %c0_79 = arith.constant 0 : index
    %878 = arith.index_cast %877 : i32 to index
    %c0_80 = arith.constant 0 : index
    %879 = vector.load %arg5[%c0_79, %878, %c0_80] : memref<4x18x18xf32, #tpu.memory_space<vmem>>, vector<1x16x16xf32>
    %880 = vector.shape_cast %879 : vector<1x16x16xf32> to vector<16x16xf32>
    %c192 = arith.constant 192 : index
    %881 = memref.load %arg2[%c192] : memref<288xf32, #tpu.memory_space<smem>>
    %882 = vector.broadcast %881 : f32 to vector<16x16xf32>
    %883 = arith.mulf %882, %880 : vector<16x16xf32>
    %884 = arith.addf %848, %883 : vector<16x16xf32>
    %c193 = arith.constant 193 : index
    %885 = memref.load %arg2[%c193] : memref<288xf32, #tpu.memory_space<smem>>
    %886 = vector.broadcast %885 : f32 to vector<16x16xf32>
    %887 = arith.mulf %886, %880 : vector<16x16xf32>
    %888 = arith.addf %852, %887 : vector<16x16xf32>
    %c194 = arith.constant 194 : index
    %889 = memref.load %arg2[%c194] : memref<288xf32, #tpu.memory_space<smem>>
    %890 = vector.broadcast %889 : f32 to vector<16x16xf32>
    %891 = arith.mulf %890, %880 : vector<16x16xf32>
    %892 = arith.addf %856, %891 : vector<16x16xf32>
    %c195 = arith.constant 195 : index
    %893 = memref.load %arg2[%c195] : memref<288xf32, #tpu.memory_space<smem>>
    %894 = vector.broadcast %893 : f32 to vector<16x16xf32>
    %895 = arith.mulf %894, %880 : vector<16x16xf32>
    %896 = arith.addf %860, %895 : vector<16x16xf32>
    %c196 = arith.constant 196 : index
    %897 = memref.load %arg2[%c196] : memref<288xf32, #tpu.memory_space<smem>>
    %898 = vector.broadcast %897 : f32 to vector<16x16xf32>
    %899 = arith.mulf %898, %880 : vector<16x16xf32>
    %900 = arith.addf %864, %899 : vector<16x16xf32>
    %c197 = arith.constant 197 : index
    %901 = memref.load %arg2[%c197] : memref<288xf32, #tpu.memory_space<smem>>
    %902 = vector.broadcast %901 : f32 to vector<16x16xf32>
    %903 = arith.mulf %902, %880 : vector<16x16xf32>
    %904 = arith.addf %868, %903 : vector<16x16xf32>
    %c198 = arith.constant 198 : index
    %905 = memref.load %arg2[%c198] : memref<288xf32, #tpu.memory_space<smem>>
    %906 = vector.broadcast %905 : f32 to vector<16x16xf32>
    %907 = arith.mulf %906, %880 : vector<16x16xf32>
    %908 = arith.addf %872, %907 : vector<16x16xf32>
    %c199 = arith.constant 199 : index
    %909 = memref.load %arg2[%c199] : memref<288xf32, #tpu.memory_space<smem>>
    %910 = vector.broadcast %909 : f32 to vector<16x16xf32>
    %911 = arith.mulf %910, %880 : vector<16x16xf32>
    %912 = arith.addf %876, %911 : vector<16x16xf32>
    %c2_i32_81 = arith.constant 2 : i32
    %913 = arith.addi %4, %c2_i32_81 : i32
    %c1_82 = arith.constant 1 : index
    %914 = arith.index_cast %913 : i32 to index
    %c0_83 = arith.constant 0 : index
    %915 = vector.load %arg5[%c1_82, %914, %c0_83] : memref<4x18x18xf32, #tpu.memory_space<vmem>>, vector<1x16x16xf32>
    %916 = vector.shape_cast %915 : vector<1x16x16xf32> to vector<16x16xf32>
    %c200 = arith.constant 200 : index
    %917 = memref.load %arg2[%c200] : memref<288xf32, #tpu.memory_space<smem>>
    %918 = vector.broadcast %917 : f32 to vector<16x16xf32>
    %919 = arith.mulf %918, %916 : vector<16x16xf32>
    %920 = arith.addf %884, %919 : vector<16x16xf32>
    %c201 = arith.constant 201 : index
    %921 = memref.load %arg2[%c201] : memref<288xf32, #tpu.memory_space<smem>>
    %922 = vector.broadcast %921 : f32 to vector<16x16xf32>
    %923 = arith.mulf %922, %916 : vector<16x16xf32>
    %924 = arith.addf %888, %923 : vector<16x16xf32>
    %c202 = arith.constant 202 : index
    %925 = memref.load %arg2[%c202] : memref<288xf32, #tpu.memory_space<smem>>
    %926 = vector.broadcast %925 : f32 to vector<16x16xf32>
    %927 = arith.mulf %926, %916 : vector<16x16xf32>
    %928 = arith.addf %892, %927 : vector<16x16xf32>
    %c203 = arith.constant 203 : index
    %929 = memref.load %arg2[%c203] : memref<288xf32, #tpu.memory_space<smem>>
    %930 = vector.broadcast %929 : f32 to vector<16x16xf32>
    %931 = arith.mulf %930, %916 : vector<16x16xf32>
    %932 = arith.addf %896, %931 : vector<16x16xf32>
    %c204 = arith.constant 204 : index
    %933 = memref.load %arg2[%c204] : memref<288xf32, #tpu.memory_space<smem>>
    %934 = vector.broadcast %933 : f32 to vector<16x16xf32>
    %935 = arith.mulf %934, %916 : vector<16x16xf32>
    %936 = arith.addf %900, %935 : vector<16x16xf32>
    %c205 = arith.constant 205 : index
    %937 = memref.load %arg2[%c205] : memref<288xf32, #tpu.memory_space<smem>>
    %938 = vector.broadcast %937 : f32 to vector<16x16xf32>
    %939 = arith.mulf %938, %916 : vector<16x16xf32>
    %940 = arith.addf %904, %939 : vector<16x16xf32>
    %c206 = arith.constant 206 : index
    %941 = memref.load %arg2[%c206] : memref<288xf32, #tpu.memory_space<smem>>
    %942 = vector.broadcast %941 : f32 to vector<16x16xf32>
    %943 = arith.mulf %942, %916 : vector<16x16xf32>
    %944 = arith.addf %908, %943 : vector<16x16xf32>
    %c207 = arith.constant 207 : index
    %945 = memref.load %arg2[%c207] : memref<288xf32, #tpu.memory_space<smem>>
    %946 = vector.broadcast %945 : f32 to vector<16x16xf32>
    %947 = arith.mulf %946, %916 : vector<16x16xf32>
    %948 = arith.addf %912, %947 : vector<16x16xf32>
    %c2_i32_84 = arith.constant 2 : i32
    %949 = arith.addi %4, %c2_i32_84 : i32
    %c2_85 = arith.constant 2 : index
    %950 = arith.index_cast %949 : i32 to index
    %c0_86 = arith.constant 0 : index
    %951 = vector.load %arg5[%c2_85, %950, %c0_86] : memref<4x18x18xf32, #tpu.memory_space<vmem>>, vector<1x16x16xf32>
    %952 = vector.shape_cast %951 : vector<1x16x16xf32> to vector<16x16xf32>
    %c208 = arith.constant 208 : index
    %953 = memref.load %arg2[%c208] : memref<288xf32, #tpu.memory_space<smem>>
    %954 = vector.broadcast %953 : f32 to vector<16x16xf32>
    %955 = arith.mulf %954, %952 : vector<16x16xf32>
    %956 = arith.addf %920, %955 : vector<16x16xf32>
    %c209 = arith.constant 209 : index
    %957 = memref.load %arg2[%c209] : memref<288xf32, #tpu.memory_space<smem>>
    %958 = vector.broadcast %957 : f32 to vector<16x16xf32>
    %959 = arith.mulf %958, %952 : vector<16x16xf32>
    %960 = arith.addf %924, %959 : vector<16x16xf32>
    %c210 = arith.constant 210 : index
    %961 = memref.load %arg2[%c210] : memref<288xf32, #tpu.memory_space<smem>>
    %962 = vector.broadcast %961 : f32 to vector<16x16xf32>
    %963 = arith.mulf %962, %952 : vector<16x16xf32>
    %964 = arith.addf %928, %963 : vector<16x16xf32>
    %c211 = arith.constant 211 : index
    %965 = memref.load %arg2[%c211] : memref<288xf32, #tpu.memory_space<smem>>
    %966 = vector.broadcast %965 : f32 to vector<16x16xf32>
    %967 = arith.mulf %966, %952 : vector<16x16xf32>
    %968 = arith.addf %932, %967 : vector<16x16xf32>
    %c212 = arith.constant 212 : index
    %969 = memref.load %arg2[%c212] : memref<288xf32, #tpu.memory_space<smem>>
    %970 = vector.broadcast %969 : f32 to vector<16x16xf32>
    %971 = arith.mulf %970, %952 : vector<16x16xf32>
    %972 = arith.addf %936, %971 : vector<16x16xf32>
    %c213 = arith.constant 213 : index
    %973 = memref.load %arg2[%c213] : memref<288xf32, #tpu.memory_space<smem>>
    %974 = vector.broadcast %973 : f32 to vector<16x16xf32>
    %975 = arith.mulf %974, %952 : vector<16x16xf32>
    %976 = arith.addf %940, %975 : vector<16x16xf32>
    %c214 = arith.constant 214 : index
    %977 = memref.load %arg2[%c214] : memref<288xf32, #tpu.memory_space<smem>>
    %978 = vector.broadcast %977 : f32 to vector<16x16xf32>
    %979 = arith.mulf %978, %952 : vector<16x16xf32>
    %980 = arith.addf %944, %979 : vector<16x16xf32>
    %c215 = arith.constant 215 : index
    %981 = memref.load %arg2[%c215] : memref<288xf32, #tpu.memory_space<smem>>
    %982 = vector.broadcast %981 : f32 to vector<16x16xf32>
    %983 = arith.mulf %982, %952 : vector<16x16xf32>
    %984 = arith.addf %948, %983 : vector<16x16xf32>
    %c2_i32_87 = arith.constant 2 : i32
    %985 = arith.addi %4, %c2_i32_87 : i32
    %c3_88 = arith.constant 3 : index
    %986 = arith.index_cast %985 : i32 to index
    %c0_89 = arith.constant 0 : index
    %987 = vector.load %arg5[%c3_88, %986, %c0_89] : memref<4x18x18xf32, #tpu.memory_space<vmem>>, vector<1x16x16xf32>
    %988 = vector.shape_cast %987 : vector<1x16x16xf32> to vector<16x16xf32>
    %c216 = arith.constant 216 : index
    %989 = memref.load %arg2[%c216] : memref<288xf32, #tpu.memory_space<smem>>
    %990 = vector.broadcast %989 : f32 to vector<16x16xf32>
    %991 = arith.mulf %990, %988 : vector<16x16xf32>
    %992 = arith.addf %956, %991 : vector<16x16xf32>
    %c217 = arith.constant 217 : index
    %993 = memref.load %arg2[%c217] : memref<288xf32, #tpu.memory_space<smem>>
    %994 = vector.broadcast %993 : f32 to vector<16x16xf32>
    %995 = arith.mulf %994, %988 : vector<16x16xf32>
    %996 = arith.addf %960, %995 : vector<16x16xf32>
    %c218 = arith.constant 218 : index
    %997 = memref.load %arg2[%c218] : memref<288xf32, #tpu.memory_space<smem>>
    %998 = vector.broadcast %997 : f32 to vector<16x16xf32>
    %999 = arith.mulf %998, %988 : vector<16x16xf32>
    %1000 = arith.addf %964, %999 : vector<16x16xf32>
    %c219 = arith.constant 219 : index
    %1001 = memref.load %arg2[%c219] : memref<288xf32, #tpu.memory_space<smem>>
    %1002 = vector.broadcast %1001 : f32 to vector<16x16xf32>
    %1003 = arith.mulf %1002, %988 : vector<16x16xf32>
    %1004 = arith.addf %968, %1003 : vector<16x16xf32>
    %c220 = arith.constant 220 : index
    %1005 = memref.load %arg2[%c220] : memref<288xf32, #tpu.memory_space<smem>>
    %1006 = vector.broadcast %1005 : f32 to vector<16x16xf32>
    %1007 = arith.mulf %1006, %988 : vector<16x16xf32>
    %1008 = arith.addf %972, %1007 : vector<16x16xf32>
    %c221 = arith.constant 221 : index
    %1009 = memref.load %arg2[%c221] : memref<288xf32, #tpu.memory_space<smem>>
    %1010 = vector.broadcast %1009 : f32 to vector<16x16xf32>
    %1011 = arith.mulf %1010, %988 : vector<16x16xf32>
    %1012 = arith.addf %976, %1011 : vector<16x16xf32>
    %c222 = arith.constant 222 : index
    %1013 = memref.load %arg2[%c222] : memref<288xf32, #tpu.memory_space<smem>>
    %1014 = vector.broadcast %1013 : f32 to vector<16x16xf32>
    %1015 = arith.mulf %1014, %988 : vector<16x16xf32>
    %1016 = arith.addf %980, %1015 : vector<16x16xf32>
    %c223 = arith.constant 223 : index
    %1017 = memref.load %arg2[%c223] : memref<288xf32, #tpu.memory_space<smem>>
    %1018 = vector.broadcast %1017 : f32 to vector<16x16xf32>
    %1019 = arith.mulf %1018, %988 : vector<16x16xf32>
    %1020 = arith.addf %984, %1019 : vector<16x16xf32>
    %c2_i32_90 = arith.constant 2 : i32
    %1021 = arith.addi %4, %c2_i32_90 : i32
    %c0_91 = arith.constant 0 : index
    %1022 = arith.index_cast %1021 : i32 to index
    %c1_92 = arith.constant 1 : index
    %1023 = vector.load %arg5[%c0_91, %1022, %c1_92] : memref<4x18x18xf32, #tpu.memory_space<vmem>>, vector<1x16x16xf32>
    %1024 = vector.shape_cast %1023 : vector<1x16x16xf32> to vector<16x16xf32>
    %c224 = arith.constant 224 : index
    %1025 = memref.load %arg2[%c224] : memref<288xf32, #tpu.memory_space<smem>>
    %1026 = vector.broadcast %1025 : f32 to vector<16x16xf32>
    %1027 = arith.mulf %1026, %1024 : vector<16x16xf32>
    %1028 = arith.addf %992, %1027 : vector<16x16xf32>
    %c225 = arith.constant 225 : index
    %1029 = memref.load %arg2[%c225] : memref<288xf32, #tpu.memory_space<smem>>
    %1030 = vector.broadcast %1029 : f32 to vector<16x16xf32>
    %1031 = arith.mulf %1030, %1024 : vector<16x16xf32>
    %1032 = arith.addf %996, %1031 : vector<16x16xf32>
    %c226 = arith.constant 226 : index
    %1033 = memref.load %arg2[%c226] : memref<288xf32, #tpu.memory_space<smem>>
    %1034 = vector.broadcast %1033 : f32 to vector<16x16xf32>
    %1035 = arith.mulf %1034, %1024 : vector<16x16xf32>
    %1036 = arith.addf %1000, %1035 : vector<16x16xf32>
    %c227 = arith.constant 227 : index
    %1037 = memref.load %arg2[%c227] : memref<288xf32, #tpu.memory_space<smem>>
    %1038 = vector.broadcast %1037 : f32 to vector<16x16xf32>
    %1039 = arith.mulf %1038, %1024 : vector<16x16xf32>
    %1040 = arith.addf %1004, %1039 : vector<16x16xf32>
    %c228 = arith.constant 228 : index
    %1041 = memref.load %arg2[%c228] : memref<288xf32, #tpu.memory_space<smem>>
    %1042 = vector.broadcast %1041 : f32 to vector<16x16xf32>
    %1043 = arith.mulf %1042, %1024 : vector<16x16xf32>
    %1044 = arith.addf %1008, %1043 : vector<16x16xf32>
    %c229 = arith.constant 229 : index
    %1045 = memref.load %arg2[%c229] : memref<288xf32, #tpu.memory_space<smem>>
    %1046 = vector.broadcast %1045 : f32 to vector<16x16xf32>
    %1047 = arith.mulf %1046, %1024 : vector<16x16xf32>
    %1048 = arith.addf %1012, %1047 : vector<16x16xf32>
    %c230 = arith.constant 230 : index
    %1049 = memref.load %arg2[%c230] : memref<288xf32, #tpu.memory_space<smem>>
    %1050 = vector.broadcast %1049 : f32 to vector<16x16xf32>
    %1051 = arith.mulf %1050, %1024 : vector<16x16xf32>
    %1052 = arith.addf %1016, %1051 : vector<16x16xf32>
    %c231 = arith.constant 231 : index
    %1053 = memref.load %arg2[%c231] : memref<288xf32, #tpu.memory_space<smem>>
    %1054 = vector.broadcast %1053 : f32 to vector<16x16xf32>
    %1055 = arith.mulf %1054, %1024 : vector<16x16xf32>
    %1056 = arith.addf %1020, %1055 : vector<16x16xf32>
    %c2_i32_93 = arith.constant 2 : i32
    %1057 = arith.addi %4, %c2_i32_93 : i32
    %c1_94 = arith.constant 1 : index
    %1058 = arith.index_cast %1057 : i32 to index
    %c1_95 = arith.constant 1 : index
    %1059 = vector.load %arg5[%c1_94, %1058, %c1_95] : memref<4x18x18xf32, #tpu.memory_space<vmem>>, vector<1x16x16xf32>
    %1060 = vector.shape_cast %1059 : vector<1x16x16xf32> to vector<16x16xf32>
    %c232 = arith.constant 232 : index
    %1061 = memref.load %arg2[%c232] : memref<288xf32, #tpu.memory_space<smem>>
    %1062 = vector.broadcast %1061 : f32 to vector<16x16xf32>
    %1063 = arith.mulf %1062, %1060 : vector<16x16xf32>
    %1064 = arith.addf %1028, %1063 : vector<16x16xf32>
    %c233 = arith.constant 233 : index
    %1065 = memref.load %arg2[%c233] : memref<288xf32, #tpu.memory_space<smem>>
    %1066 = vector.broadcast %1065 : f32 to vector<16x16xf32>
    %1067 = arith.mulf %1066, %1060 : vector<16x16xf32>
    %1068 = arith.addf %1032, %1067 : vector<16x16xf32>
    %c234 = arith.constant 234 : index
    %1069 = memref.load %arg2[%c234] : memref<288xf32, #tpu.memory_space<smem>>
    %1070 = vector.broadcast %1069 : f32 to vector<16x16xf32>
    %1071 = arith.mulf %1070, %1060 : vector<16x16xf32>
    %1072 = arith.addf %1036, %1071 : vector<16x16xf32>
    %c235 = arith.constant 235 : index
    %1073 = memref.load %arg2[%c235] : memref<288xf32, #tpu.memory_space<smem>>
    %1074 = vector.broadcast %1073 : f32 to vector<16x16xf32>
    %1075 = arith.mulf %1074, %1060 : vector<16x16xf32>
    %1076 = arith.addf %1040, %1075 : vector<16x16xf32>
    %c236 = arith.constant 236 : index
    %1077 = memref.load %arg2[%c236] : memref<288xf32, #tpu.memory_space<smem>>
    %1078 = vector.broadcast %1077 : f32 to vector<16x16xf32>
    %1079 = arith.mulf %1078, %1060 : vector<16x16xf32>
    %1080 = arith.addf %1044, %1079 : vector<16x16xf32>
    %c237 = arith.constant 237 : index
    %1081 = memref.load %arg2[%c237] : memref<288xf32, #tpu.memory_space<smem>>
    %1082 = vector.broadcast %1081 : f32 to vector<16x16xf32>
    %1083 = arith.mulf %1082, %1060 : vector<16x16xf32>
    %1084 = arith.addf %1048, %1083 : vector<16x16xf32>
    %c238 = arith.constant 238 : index
    %1085 = memref.load %arg2[%c238] : memref<288xf32, #tpu.memory_space<smem>>
    %1086 = vector.broadcast %1085 : f32 to vector<16x16xf32>
    %1087 = arith.mulf %1086, %1060 : vector<16x16xf32>
    %1088 = arith.addf %1052, %1087 : vector<16x16xf32>
    %c239 = arith.constant 239 : index
    %1089 = memref.load %arg2[%c239] : memref<288xf32, #tpu.memory_space<smem>>
    %1090 = vector.broadcast %1089 : f32 to vector<16x16xf32>
    %1091 = arith.mulf %1090, %1060 : vector<16x16xf32>
    %1092 = arith.addf %1056, %1091 : vector<16x16xf32>
    %c2_i32_96 = arith.constant 2 : i32
    %1093 = arith.addi %4, %c2_i32_96 : i32
    %c2_97 = arith.constant 2 : index
    %1094 = arith.index_cast %1093 : i32 to index
    %c1_98 = arith.constant 1 : index
    %1095 = vector.load %arg5[%c2_97, %1094, %c1_98] : memref<4x18x18xf32, #tpu.memory_space<vmem>>, vector<1x16x16xf32>
    %1096 = vector.shape_cast %1095 : vector<1x16x16xf32> to vector<16x16xf32>
    %c240 = arith.constant 240 : index
    %1097 = memref.load %arg2[%c240] : memref<288xf32, #tpu.memory_space<smem>>
    %1098 = vector.broadcast %1097 : f32 to vector<16x16xf32>
    %1099 = arith.mulf %1098, %1096 : vector<16x16xf32>
    %1100 = arith.addf %1064, %1099 : vector<16x16xf32>
    %c241 = arith.constant 241 : index
    %1101 = memref.load %arg2[%c241] : memref<288xf32, #tpu.memory_space<smem>>
    %1102 = vector.broadcast %1101 : f32 to vector<16x16xf32>
    %1103 = arith.mulf %1102, %1096 : vector<16x16xf32>
    %1104 = arith.addf %1068, %1103 : vector<16x16xf32>
    %c242 = arith.constant 242 : index
    %1105 = memref.load %arg2[%c242] : memref<288xf32, #tpu.memory_space<smem>>
    %1106 = vector.broadcast %1105 : f32 to vector<16x16xf32>
    %1107 = arith.mulf %1106, %1096 : vector<16x16xf32>
    %1108 = arith.addf %1072, %1107 : vector<16x16xf32>
    %c243 = arith.constant 243 : index
    %1109 = memref.load %arg2[%c243] : memref<288xf32, #tpu.memory_space<smem>>
    %1110 = vector.broadcast %1109 : f32 to vector<16x16xf32>
    %1111 = arith.mulf %1110, %1096 : vector<16x16xf32>
    %1112 = arith.addf %1076, %1111 : vector<16x16xf32>
    %c244 = arith.constant 244 : index
    %1113 = memref.load %arg2[%c244] : memref<288xf32, #tpu.memory_space<smem>>
    %1114 = vector.broadcast %1113 : f32 to vector<16x16xf32>
    %1115 = arith.mulf %1114, %1096 : vector<16x16xf32>
    %1116 = arith.addf %1080, %1115 : vector<16x16xf32>
    %c245 = arith.constant 245 : index
    %1117 = memref.load %arg2[%c245] : memref<288xf32, #tpu.memory_space<smem>>
    %1118 = vector.broadcast %1117 : f32 to vector<16x16xf32>
    %1119 = arith.mulf %1118, %1096 : vector<16x16xf32>
    %1120 = arith.addf %1084, %1119 : vector<16x16xf32>
    %c246 = arith.constant 246 : index
    %1121 = memref.load %arg2[%c246] : memref<288xf32, #tpu.memory_space<smem>>
    %1122 = vector.broadcast %1121 : f32 to vector<16x16xf32>
    %1123 = arith.mulf %1122, %1096 : vector<16x16xf32>
    %1124 = arith.addf %1088, %1123 : vector<16x16xf32>
    %c247 = arith.constant 247 : index
    %1125 = memref.load %arg2[%c247] : memref<288xf32, #tpu.memory_space<smem>>
    %1126 = vector.broadcast %1125 : f32 to vector<16x16xf32>
    %1127 = arith.mulf %1126, %1096 : vector<16x16xf32>
    %1128 = arith.addf %1092, %1127 : vector<16x16xf32>
    %c2_i32_99 = arith.constant 2 : i32
    %1129 = arith.addi %4, %c2_i32_99 : i32
    %c3_100 = arith.constant 3 : index
    %1130 = arith.index_cast %1129 : i32 to index
    %c1_101 = arith.constant 1 : index
    %1131 = vector.load %arg5[%c3_100, %1130, %c1_101] : memref<4x18x18xf32, #tpu.memory_space<vmem>>, vector<1x16x16xf32>
    %1132 = vector.shape_cast %1131 : vector<1x16x16xf32> to vector<16x16xf32>
    %c248 = arith.constant 248 : index
    %1133 = memref.load %arg2[%c248] : memref<288xf32, #tpu.memory_space<smem>>
    %1134 = vector.broadcast %1133 : f32 to vector<16x16xf32>
    %1135 = arith.mulf %1134, %1132 : vector<16x16xf32>
    %1136 = arith.addf %1100, %1135 : vector<16x16xf32>
    %c249 = arith.constant 249 : index
    %1137 = memref.load %arg2[%c249] : memref<288xf32, #tpu.memory_space<smem>>
    %1138 = vector.broadcast %1137 : f32 to vector<16x16xf32>
    %1139 = arith.mulf %1138, %1132 : vector<16x16xf32>
    %1140 = arith.addf %1104, %1139 : vector<16x16xf32>
    %c250 = arith.constant 250 : index
    %1141 = memref.load %arg2[%c250] : memref<288xf32, #tpu.memory_space<smem>>
    %1142 = vector.broadcast %1141 : f32 to vector<16x16xf32>
    %1143 = arith.mulf %1142, %1132 : vector<16x16xf32>
    %1144 = arith.addf %1108, %1143 : vector<16x16xf32>
    %c251 = arith.constant 251 : index
    %1145 = memref.load %arg2[%c251] : memref<288xf32, #tpu.memory_space<smem>>
    %1146 = vector.broadcast %1145 : f32 to vector<16x16xf32>
    %1147 = arith.mulf %1146, %1132 : vector<16x16xf32>
    %1148 = arith.addf %1112, %1147 : vector<16x16xf32>
    %c252 = arith.constant 252 : index
    %1149 = memref.load %arg2[%c252] : memref<288xf32, #tpu.memory_space<smem>>
    %1150 = vector.broadcast %1149 : f32 to vector<16x16xf32>
    %1151 = arith.mulf %1150, %1132 : vector<16x16xf32>
    %1152 = arith.addf %1116, %1151 : vector<16x16xf32>
    %c253 = arith.constant 253 : index
    %1153 = memref.load %arg2[%c253] : memref<288xf32, #tpu.memory_space<smem>>
    %1154 = vector.broadcast %1153 : f32 to vector<16x16xf32>
    %1155 = arith.mulf %1154, %1132 : vector<16x16xf32>
    %1156 = arith.addf %1120, %1155 : vector<16x16xf32>
    %c254 = arith.constant 254 : index
    %1157 = memref.load %arg2[%c254] : memref<288xf32, #tpu.memory_space<smem>>
    %1158 = vector.broadcast %1157 : f32 to vector<16x16xf32>
    %1159 = arith.mulf %1158, %1132 : vector<16x16xf32>
    %1160 = arith.addf %1124, %1159 : vector<16x16xf32>
    %c255 = arith.constant 255 : index
    %1161 = memref.load %arg2[%c255] : memref<288xf32, #tpu.memory_space<smem>>
    %1162 = vector.broadcast %1161 : f32 to vector<16x16xf32>
    %1163 = arith.mulf %1162, %1132 : vector<16x16xf32>
    %1164 = arith.addf %1128, %1163 : vector<16x16xf32>
    %c2_i32_102 = arith.constant 2 : i32
    %1165 = arith.addi %4, %c2_i32_102 : i32
    %c0_103 = arith.constant 0 : index
    %1166 = arith.index_cast %1165 : i32 to index
    %c2_104 = arith.constant 2 : index
    %1167 = vector.load %arg5[%c0_103, %1166, %c2_104] : memref<4x18x18xf32, #tpu.memory_space<vmem>>, vector<1x16x16xf32>
    %1168 = vector.shape_cast %1167 : vector<1x16x16xf32> to vector<16x16xf32>
    %c256 = arith.constant 256 : index
    %1169 = memref.load %arg2[%c256] : memref<288xf32, #tpu.memory_space<smem>>
    %1170 = vector.broadcast %1169 : f32 to vector<16x16xf32>
    %1171 = arith.mulf %1170, %1168 : vector<16x16xf32>
    %1172 = arith.addf %1136, %1171 : vector<16x16xf32>
    %c257 = arith.constant 257 : index
    %1173 = memref.load %arg2[%c257] : memref<288xf32, #tpu.memory_space<smem>>
    %1174 = vector.broadcast %1173 : f32 to vector<16x16xf32>
    %1175 = arith.mulf %1174, %1168 : vector<16x16xf32>
    %1176 = arith.addf %1140, %1175 : vector<16x16xf32>
    %c258 = arith.constant 258 : index
    %1177 = memref.load %arg2[%c258] : memref<288xf32, #tpu.memory_space<smem>>
    %1178 = vector.broadcast %1177 : f32 to vector<16x16xf32>
    %1179 = arith.mulf %1178, %1168 : vector<16x16xf32>
    %1180 = arith.addf %1144, %1179 : vector<16x16xf32>
    %c259 = arith.constant 259 : index
    %1181 = memref.load %arg2[%c259] : memref<288xf32, #tpu.memory_space<smem>>
    %1182 = vector.broadcast %1181 : f32 to vector<16x16xf32>
    %1183 = arith.mulf %1182, %1168 : vector<16x16xf32>
    %1184 = arith.addf %1148, %1183 : vector<16x16xf32>
    %c260 = arith.constant 260 : index
    %1185 = memref.load %arg2[%c260] : memref<288xf32, #tpu.memory_space<smem>>
    %1186 = vector.broadcast %1185 : f32 to vector<16x16xf32>
    %1187 = arith.mulf %1186, %1168 : vector<16x16xf32>
    %1188 = arith.addf %1152, %1187 : vector<16x16xf32>
    %c261 = arith.constant 261 : index
    %1189 = memref.load %arg2[%c261] : memref<288xf32, #tpu.memory_space<smem>>
    %1190 = vector.broadcast %1189 : f32 to vector<16x16xf32>
    %1191 = arith.mulf %1190, %1168 : vector<16x16xf32>
    %1192 = arith.addf %1156, %1191 : vector<16x16xf32>
    %c262 = arith.constant 262 : index
    %1193 = memref.load %arg2[%c262] : memref<288xf32, #tpu.memory_space<smem>>
    %1194 = vector.broadcast %1193 : f32 to vector<16x16xf32>
    %1195 = arith.mulf %1194, %1168 : vector<16x16xf32>
    %1196 = arith.addf %1160, %1195 : vector<16x16xf32>
    %c263 = arith.constant 263 : index
    %1197 = memref.load %arg2[%c263] : memref<288xf32, #tpu.memory_space<smem>>
    %1198 = vector.broadcast %1197 : f32 to vector<16x16xf32>
    %1199 = arith.mulf %1198, %1168 : vector<16x16xf32>
    %1200 = arith.addf %1164, %1199 : vector<16x16xf32>
    %c2_i32_105 = arith.constant 2 : i32
    %1201 = arith.addi %4, %c2_i32_105 : i32
    %c1_106 = arith.constant 1 : index
    %1202 = arith.index_cast %1201 : i32 to index
    %c2_107 = arith.constant 2 : index
    %1203 = vector.load %arg5[%c1_106, %1202, %c2_107] : memref<4x18x18xf32, #tpu.memory_space<vmem>>, vector<1x16x16xf32>
    %1204 = vector.shape_cast %1203 : vector<1x16x16xf32> to vector<16x16xf32>
    %c264 = arith.constant 264 : index
    %1205 = memref.load %arg2[%c264] : memref<288xf32, #tpu.memory_space<smem>>
    %1206 = vector.broadcast %1205 : f32 to vector<16x16xf32>
    %1207 = arith.mulf %1206, %1204 : vector<16x16xf32>
    %1208 = arith.addf %1172, %1207 : vector<16x16xf32>
    %c265 = arith.constant 265 : index
    %1209 = memref.load %arg2[%c265] : memref<288xf32, #tpu.memory_space<smem>>
    %1210 = vector.broadcast %1209 : f32 to vector<16x16xf32>
    %1211 = arith.mulf %1210, %1204 : vector<16x16xf32>
    %1212 = arith.addf %1176, %1211 : vector<16x16xf32>
    %c266 = arith.constant 266 : index
    %1213 = memref.load %arg2[%c266] : memref<288xf32, #tpu.memory_space<smem>>
    %1214 = vector.broadcast %1213 : f32 to vector<16x16xf32>
    %1215 = arith.mulf %1214, %1204 : vector<16x16xf32>
    %1216 = arith.addf %1180, %1215 : vector<16x16xf32>
    %c267 = arith.constant 267 : index
    %1217 = memref.load %arg2[%c267] : memref<288xf32, #tpu.memory_space<smem>>
    %1218 = vector.broadcast %1217 : f32 to vector<16x16xf32>
    %1219 = arith.mulf %1218, %1204 : vector<16x16xf32>
    %1220 = arith.addf %1184, %1219 : vector<16x16xf32>
    %c268 = arith.constant 268 : index
    %1221 = memref.load %arg2[%c268] : memref<288xf32, #tpu.memory_space<smem>>
    %1222 = vector.broadcast %1221 : f32 to vector<16x16xf32>
    %1223 = arith.mulf %1222, %1204 : vector<16x16xf32>
    %1224 = arith.addf %1188, %1223 : vector<16x16xf32>
    %c269 = arith.constant 269 : index
    %1225 = memref.load %arg2[%c269] : memref<288xf32, #tpu.memory_space<smem>>
    %1226 = vector.broadcast %1225 : f32 to vector<16x16xf32>
    %1227 = arith.mulf %1226, %1204 : vector<16x16xf32>
    %1228 = arith.addf %1192, %1227 : vector<16x16xf32>
    %c270 = arith.constant 270 : index
    %1229 = memref.load %arg2[%c270] : memref<288xf32, #tpu.memory_space<smem>>
    %1230 = vector.broadcast %1229 : f32 to vector<16x16xf32>
    %1231 = arith.mulf %1230, %1204 : vector<16x16xf32>
    %1232 = arith.addf %1196, %1231 : vector<16x16xf32>
    %c271 = arith.constant 271 : index
    %1233 = memref.load %arg2[%c271] : memref<288xf32, #tpu.memory_space<smem>>
    %1234 = vector.broadcast %1233 : f32 to vector<16x16xf32>
    %1235 = arith.mulf %1234, %1204 : vector<16x16xf32>
    %1236 = arith.addf %1200, %1235 : vector<16x16xf32>
    %c2_i32_108 = arith.constant 2 : i32
    %1237 = arith.addi %4, %c2_i32_108 : i32
    %c2_109 = arith.constant 2 : index
    %1238 = arith.index_cast %1237 : i32 to index
    %c2_110 = arith.constant 2 : index
    %1239 = vector.load %arg5[%c2_109, %1238, %c2_110] : memref<4x18x18xf32, #tpu.memory_space<vmem>>, vector<1x16x16xf32>
    %1240 = vector.shape_cast %1239 : vector<1x16x16xf32> to vector<16x16xf32>
    %c272 = arith.constant 272 : index
    %1241 = memref.load %arg2[%c272] : memref<288xf32, #tpu.memory_space<smem>>
    %1242 = vector.broadcast %1241 : f32 to vector<16x16xf32>
    %1243 = arith.mulf %1242, %1240 : vector<16x16xf32>
    %1244 = arith.addf %1208, %1243 : vector<16x16xf32>
    %c273 = arith.constant 273 : index
    %1245 = memref.load %arg2[%c273] : memref<288xf32, #tpu.memory_space<smem>>
    %1246 = vector.broadcast %1245 : f32 to vector<16x16xf32>
    %1247 = arith.mulf %1246, %1240 : vector<16x16xf32>
    %1248 = arith.addf %1212, %1247 : vector<16x16xf32>
    %c274 = arith.constant 274 : index
    %1249 = memref.load %arg2[%c274] : memref<288xf32, #tpu.memory_space<smem>>
    %1250 = vector.broadcast %1249 : f32 to vector<16x16xf32>
    %1251 = arith.mulf %1250, %1240 : vector<16x16xf32>
    %1252 = arith.addf %1216, %1251 : vector<16x16xf32>
    %c275 = arith.constant 275 : index
    %1253 = memref.load %arg2[%c275] : memref<288xf32, #tpu.memory_space<smem>>
    %1254 = vector.broadcast %1253 : f32 to vector<16x16xf32>
    %1255 = arith.mulf %1254, %1240 : vector<16x16xf32>
    %1256 = arith.addf %1220, %1255 : vector<16x16xf32>
    %c276 = arith.constant 276 : index
    %1257 = memref.load %arg2[%c276] : memref<288xf32, #tpu.memory_space<smem>>
    %1258 = vector.broadcast %1257 : f32 to vector<16x16xf32>
    %1259 = arith.mulf %1258, %1240 : vector<16x16xf32>
    %1260 = arith.addf %1224, %1259 : vector<16x16xf32>
    %c277 = arith.constant 277 : index
    %1261 = memref.load %arg2[%c277] : memref<288xf32, #tpu.memory_space<smem>>
    %1262 = vector.broadcast %1261 : f32 to vector<16x16xf32>
    %1263 = arith.mulf %1262, %1240 : vector<16x16xf32>
    %1264 = arith.addf %1228, %1263 : vector<16x16xf32>
    %c278 = arith.constant 278 : index
    %1265 = memref.load %arg2[%c278] : memref<288xf32, #tpu.memory_space<smem>>
    %1266 = vector.broadcast %1265 : f32 to vector<16x16xf32>
    %1267 = arith.mulf %1266, %1240 : vector<16x16xf32>
    %1268 = arith.addf %1232, %1267 : vector<16x16xf32>
    %c279 = arith.constant 279 : index
    %1269 = memref.load %arg2[%c279] : memref<288xf32, #tpu.memory_space<smem>>
    %1270 = vector.broadcast %1269 : f32 to vector<16x16xf32>
    %1271 = arith.mulf %1270, %1240 : vector<16x16xf32>
    %1272 = arith.addf %1236, %1271 : vector<16x16xf32>
    %c2_i32_111 = arith.constant 2 : i32
    %1273 = arith.addi %4, %c2_i32_111 : i32
    %c3_112 = arith.constant 3 : index
    %1274 = arith.index_cast %1273 : i32 to index
    %c2_113 = arith.constant 2 : index
    %1275 = vector.load %arg5[%c3_112, %1274, %c2_113] : memref<4x18x18xf32, #tpu.memory_space<vmem>>, vector<1x16x16xf32>
    %1276 = vector.shape_cast %1275 : vector<1x16x16xf32> to vector<16x16xf32>
    %c280 = arith.constant 280 : index
    %1277 = memref.load %arg2[%c280] : memref<288xf32, #tpu.memory_space<smem>>
    %1278 = vector.broadcast %1277 : f32 to vector<16x16xf32>
    %1279 = arith.mulf %1278, %1276 : vector<16x16xf32>
    %1280 = arith.addf %1244, %1279 : vector<16x16xf32>
    %c281 = arith.constant 281 : index
    %1281 = memref.load %arg2[%c281] : memref<288xf32, #tpu.memory_space<smem>>
    %1282 = vector.broadcast %1281 : f32 to vector<16x16xf32>
    %1283 = arith.mulf %1282, %1276 : vector<16x16xf32>
    %1284 = arith.addf %1248, %1283 : vector<16x16xf32>
    %c282 = arith.constant 282 : index
    %1285 = memref.load %arg2[%c282] : memref<288xf32, #tpu.memory_space<smem>>
    %1286 = vector.broadcast %1285 : f32 to vector<16x16xf32>
    %1287 = arith.mulf %1286, %1276 : vector<16x16xf32>
    %1288 = arith.addf %1252, %1287 : vector<16x16xf32>
    %c283 = arith.constant 283 : index
    %1289 = memref.load %arg2[%c283] : memref<288xf32, #tpu.memory_space<smem>>
    %1290 = vector.broadcast %1289 : f32 to vector<16x16xf32>
    %1291 = arith.mulf %1290, %1276 : vector<16x16xf32>
    %1292 = arith.addf %1256, %1291 : vector<16x16xf32>
    %c284 = arith.constant 284 : index
    %1293 = memref.load %arg2[%c284] : memref<288xf32, #tpu.memory_space<smem>>
    %1294 = vector.broadcast %1293 : f32 to vector<16x16xf32>
    %1295 = arith.mulf %1294, %1276 : vector<16x16xf32>
    %1296 = arith.addf %1260, %1295 : vector<16x16xf32>
    %c285 = arith.constant 285 : index
    %1297 = memref.load %arg2[%c285] : memref<288xf32, #tpu.memory_space<smem>>
    %1298 = vector.broadcast %1297 : f32 to vector<16x16xf32>
    %1299 = arith.mulf %1298, %1276 : vector<16x16xf32>
    %1300 = arith.addf %1264, %1299 : vector<16x16xf32>
    %c286 = arith.constant 286 : index
    %1301 = memref.load %arg2[%c286] : memref<288xf32, #tpu.memory_space<smem>>
    %1302 = vector.broadcast %1301 : f32 to vector<16x16xf32>
    %1303 = arith.mulf %1302, %1276 : vector<16x16xf32>
    %1304 = arith.addf %1268, %1303 : vector<16x16xf32>
    %c287 = arith.constant 287 : index
    %1305 = memref.load %arg2[%c287] : memref<288xf32, #tpu.memory_space<smem>>
    %1306 = vector.broadcast %1305 : f32 to vector<16x16xf32>
    %1307 = arith.mulf %1306, %1276 : vector<16x16xf32>
    %1308 = arith.addf %1272, %1307 : vector<16x16xf32>
    %c0_114 = arith.constant 0 : index
    %c0_115 = arith.constant 0 : index
    %c0_116 = arith.constant 0 : index
    %c0_117 = arith.constant 0 : index
    %1309 = vector.load %arg4[%c0_114, %c0_115, %c0_116, %c0_117] : memref<1x8x16x16xf32, #tpu.memory_space<vmem>>, vector<1x1x16x16xf32>
    %1310 = vector.shape_cast %1309 : vector<1x1x16x16xf32> to vector<16x16xf32>
    %1311 = vector.shape_cast %1280 : vector<16x16xf32> to vector<1x1x16x16xf32>
    tpu.vector_store %arg4[%c0_114, %c0_115, %c0_116, %c0_117], %1311 {strides = array<i32>} : memref<1x8x16x16xf32, #tpu.memory_space<vmem>>, vector<1x1x16x16xf32>,
    %c0_118 = arith.constant 0 : index
    %c1_119 = arith.constant 1 : index
    %c0_120 = arith.constant 0 : index
    %c0_121 = arith.constant 0 : index
    %1312 = vector.load %arg4[%c0_118, %c1_119, %c0_120, %c0_121] : memref<1x8x16x16xf32, #tpu.memory_space<vmem>>, vector<1x1x16x16xf32>
    %1313 = vector.shape_cast %1312 : vector<1x1x16x16xf32> to vector<16x16xf32>
    %1314 = vector.shape_cast %1284 : vector<16x16xf32> to vector<1x1x16x16xf32>
    tpu.vector_store %arg4[%c0_118, %c1_119, %c0_120, %c0_121], %1314 {strides = array<i32>} : memref<1x8x16x16xf32, #tpu.memory_space<vmem>>, vector<1x1x16x16xf32>,
    %c0_122 = arith.constant 0 : index
    %c2_123 = arith.constant 2 : index
    %c0_124 = arith.constant 0 : index
    %c0_125 = arith.constant 0 : index
    %1315 = vector.load %arg4[%c0_122, %c2_123, %c0_124, %c0_125] : memref<1x8x16x16xf32, #tpu.memory_space<vmem>>, vector<1x1x16x16xf32>
    %1316 = vector.shape_cast %1315 : vector<1x1x16x16xf32> to vector<16x16xf32>
    %1317 = vector.shape_cast %1288 : vector<16x16xf32> to vector<1x1x16x16xf32>
    tpu.vector_store %arg4[%c0_122, %c2_123, %c0_124, %c0_125], %1317 {strides = array<i32>} : memref<1x8x16x16xf32, #tpu.memory_space<vmem>>, vector<1x1x16x16xf32>,
    %c0_126 = arith.constant 0 : index
    %c3_127 = arith.constant 3 : index
    %c0_128 = arith.constant 0 : index
    %c0_129 = arith.constant 0 : index
    %1318 = vector.load %arg4[%c0_126, %c3_127, %c0_128, %c0_129] : memref<1x8x16x16xf32, #tpu.memory_space<vmem>>, vector<1x1x16x16xf32>
    %1319 = vector.shape_cast %1318 : vector<1x1x16x16xf32> to vector<16x16xf32>
    %1320 = vector.shape_cast %1292 : vector<16x16xf32> to vector<1x1x16x16xf32>
    tpu.vector_store %arg4[%c0_126, %c3_127, %c0_128, %c0_129], %1320 {strides = array<i32>} : memref<1x8x16x16xf32, #tpu.memory_space<vmem>>, vector<1x1x16x16xf32>,
    %c0_130 = arith.constant 0 : index
    %c4_131 = arith.constant 4 : index
    %c0_132 = arith.constant 0 : index
    %c0_133 = arith.constant 0 : index
    %1321 = vector.load %arg4[%c0_130, %c4_131, %c0_132, %c0_133] : memref<1x8x16x16xf32, #tpu.memory_space<vmem>>, vector<1x1x16x16xf32>
    %1322 = vector.shape_cast %1321 : vector<1x1x16x16xf32> to vector<16x16xf32>
    %1323 = vector.shape_cast %1296 : vector<16x16xf32> to vector<1x1x16x16xf32>
    tpu.vector_store %arg4[%c0_130, %c4_131, %c0_132, %c0_133], %1323 {strides = array<i32>} : memref<1x8x16x16xf32, #tpu.memory_space<vmem>>, vector<1x1x16x16xf32>,
    %c0_134 = arith.constant 0 : index
    %c5_135 = arith.constant 5 : index
    %c0_136 = arith.constant 0 : index
    %c0_137 = arith.constant 0 : index
    %1324 = vector.load %arg4[%c0_134, %c5_135, %c0_136, %c0_137] : memref<1x8x16x16xf32, #tpu.memory_space<vmem>>, vector<1x1x16x16xf32>
    %1325 = vector.shape_cast %1324 : vector<1x1x16x16xf32> to vector<16x16xf32>
    %1326 = vector.shape_cast %1300 : vector<16x16xf32> to vector<1x1x16x16xf32>
    tpu.vector_store %arg4[%c0_134, %c5_135, %c0_136, %c0_137], %1326 {strides = array<i32>} : memref<1x8x16x16xf32, #tpu.memory_space<vmem>>, vector<1x1x16x16xf32>,
    %c0_138 = arith.constant 0 : index
    %c6_139 = arith.constant 6 : index
    %c0_140 = arith.constant 0 : index
    %c0_141 = arith.constant 0 : index
    %1327 = vector.load %arg4[%c0_138, %c6_139, %c0_140, %c0_141] : memref<1x8x16x16xf32, #tpu.memory_space<vmem>>, vector<1x1x16x16xf32>
    %1328 = vector.shape_cast %1327 : vector<1x1x16x16xf32> to vector<16x16xf32>
    %1329 = vector.shape_cast %1304 : vector<16x16xf32> to vector<1x1x16x16xf32>
    tpu.vector_store %arg4[%c0_138, %c6_139, %c0_140, %c0_141], %1329 {strides = array<i32>} : memref<1x8x16x16xf32, #tpu.memory_space<vmem>>, vector<1x1x16x16xf32>,
    %c0_142 = arith.constant 0 : index
    %c7_143 = arith.constant 7 : index
    %c0_144 = arith.constant 0 : index
    %c0_145 = arith.constant 0 : index
    %1330 = vector.load %arg4[%c0_142, %c7_143, %c0_144, %c0_145] : memref<1x8x16x16xf32, #tpu.memory_space<vmem>>, vector<1x1x16x16xf32>
    %1331 = vector.shape_cast %1330 : vector<1x1x16x16xf32> to vector<16x16xf32>
    %1332 = vector.shape_cast %1308 : vector<16x16xf32> to vector<1x1x16x16xf32>
    tpu.vector_store %arg4[%c0_142, %c7_143, %c0_144, %c0_145], %1332 {strides = array<i32>} : memref<1x8x16x16xf32, #tpu.memory_space<vmem>>, vector<1x1x16x16xf32>,
    return
  }
  func.func @transform_0(%arg0: i32, %arg1: i32, %arg2: memref<288xf32, #tpu.memory_space<smem>>) -> (i32, i32, i32, i32) {
    %c0_i32 = arith.constant 0 : i32
    %c0_i32_0 = arith.constant 0 : i32
    %c0_i32_1 = arith.constant 0 : i32
    %c0_i32_2 = arith.constant 0 : i32
    return %arg0, %c0_i32, %c0_i32_0, %c0_i32_1 : i32, i32, i32, i32
  }
  func.func @transform_1(%arg0: i32, %arg1: i32, %arg2: memref<288xf32, #tpu.memory_space<smem>>) -> (i32, i32, i32, i32) {
    %c0_i32 = arith.constant 0 : i32
    %c0_i32_0 = arith.constant 0 : i32
    %c0_i32_1 = arith.constant 0 : i32
    return %arg0, %c0_i32, %arg1, %c0_i32_0 : i32, i32, i32, i32
  }
}

</mosaic_0001>

<llo_original>
// kernel: tpu_custom_call.1
$region0: #{tpu_custom_call.1}
  #allocation0 [shape = 'u32[]', space=smem, size = 0x4, offset = 0x4, fixed_abs, tag = 'smem constant byte address 0x4 - core index']
  #allocation1 [shape = 'u32[144,128]{1,0:T(1,128)}', space=vmem, size = 0x12000, scoped, tag = 'internal scratch']
  #allocation2 [shape = 'f32[4,18,18]{2,1,0:T(8,128)}', space=vmem, size = 0xc000, scoped, tag = 'scratch operand']
  #allocation3 [shape = 's32[1]{0}', space=sflag, size = 0x4, scoped, tag = 'scoped memory for tpu_custom_call.1']
  #allocation4 [shape = 'u8[1536]{0}', space=smem, size = 0x600, scoped, tag = 'prefetched SMEM operand 0']
  %s0 = inlined_call_operand.hbm [shape: f32[288], index: 0, kind: input, shape index: {}]
  %s1 = inlined_call_operand.hbm [shape: f32[2,4,16,16], index: 1, kind: input, shape index: {}]
  %s2 = inlined_call_operand.hbm [shape: f32[2,8,16,16], index: 2, kind: output, shape index: {}]
  %s3 = sld [smem:[#allocation0]]
  $region45: #{tpu_custom_call.1} parent=0
    _
  %s5 = ssub.s32 1, %s3
  %s6 = scalar_select 0, %s5, %s3
  %8 = dma.hbm_to_smem %s0, 48, [#allocation4], [#allocation3]
  %9 = dma.done [#allocation3], 48
  %10 = sfence
  $region1: #{tpu_custom_call.1} parent=0
    #allocation5 [shape = 'u8[65536]{0}', space=vmem, size = 0x10000, scoped, tag = 'input window, operand 1']
    #allocation6 [shape = 's32[2]{0}', space=sflag, size = 0x8, scoped, tag = 'scoped memory for tpu_custom_call.1']
    #allocation7 [shape = 's32[2]{0}', space=sflag, size = 0x8, scoped, tag = 'scoped memory for tpu_custom_call.1']
    #allocation8 [shape = 'u8[131072]{0}', space=vmem, size = 0x20000, scoped, tag = 'output window, operand 0']
    %11 = vsyncpa [#allocation6], 0
    %s12 = scalar_lea.sflag [#allocation6], 1
    %13 = vsyncpa %s12, 0
    %14 = vsyncpa [#allocation7], 0
    %s15 = scalar_lea.sflag [#allocation7], 1
    %16 = vsyncpa %s15, 0
    loop: start=0, step=1, limit=4
    $region2: #{tpu_custom_call.1} parent=1 // loop_pre_header
      _
    $region3: #{tpu_custom_call.1} parent=1 // loop_header
      %s18 = sphi 0, %s22
      %p19 = scmp.ge.s32.totalorder %s18, 4
      %s25 = sphi 0, %s37
      %s26 = sphi 0, %s33
      %s27 = sphi 0, %s25
      %s28 = sphi 0, %s26
      %s29 = sphi 0, %s27
      %s30 = sphi 0, %s28
      %s40 = sphi 0, %s42
      %s43 = sphi 0, %s40
      %s44 = sphi 0, %s43
      %s60 = sphi 0, %s44
      %s68 = sphi 0, %s70
      %s71 = sphi 0, %s68
      %s72 = sphi 0, %s71
      %s88 = sphi 0, %s72
    $region4: #{tpu_custom_call.1} parent=1 // loop_header_branch
      %21 = sbr.rel (%p19) target = $region8
    $region5: #{tpu_custom_call.1} parent=1 // loop_body
      %s23 = ssub.s32 %s18, 1
      %s24 = ssub.s32 %s18, 2
      %s31 = sadd.s32 1, %s26
      %p32 = scmp.ge.s32.totalorder %s31, 1
      %s33 = scalar_select %p32, 0, %s31
      %s34 = sadd.s32 1, %s25
      %s35 = scalar_select %p32, %s34, %s25
      %p36 = scmp.ge.s32.totalorder %s35, 2
      %s37 = scalar_select %p36, 0, %s35
      %s38 = ssub.s32 %s25, %s37
      %p39 = scmp.eq.s32.totalorder %s38, 0
      %s41 = sadd.s32 %s40, 1
      %s42 = scalar_select %p39, %s40, %s41
      %p45 = pneg %p39
      %p46 = scmp.eq.s32.totalorder %s18, 1
      %p47 = por %p45, %p46
      %p48 = scmp.ne.s32.totalorder %s40, %s43
      %p49 = scmp.eq.s32.totalorder %s18, 0
      %p50 = por %p48, %p49
      %p51 = scmp.ne.s32.totalorder %s40, %s43
      %p52 = scmp.eq.s32.totalorder %s23, 1
      %p53 = por %p51, %p52
      %p54 = scmp.ne.s32.totalorder %s43, %s44
      %p55 = scmp.eq.s32.totalorder %s23, 0
      %p56 = por %p54, %p55
      %p57 = scmp.ne.s32.totalorder %s43, %s44
      %p58 = scmp.eq.s32.totalorder %s24, 1
      %p59 = por %p57, %p58
      %p61 = scmp.ne.s32.totalorder %s44, %s60
      %p62 = scmp.eq.s32.totalorder %s24, 0
      %p63 = por %p61, %p62
      %s64 = ssub.s32 %s25, %s37
      %s65 = ssub.s32 %s26, %s33
      %s66 = sor.u32 %s64, %s65
      %p67 = scmp.eq.s32.totalorder %s66, 0
      %s69 = sadd.s32 %s68, 1
      %s70 = scalar_select %p67, %s68, %s69
      %p73 = pneg %p67
      %p74 = scmp.eq.s32.totalorder %s18, 1
      %p75 = por %p73, %p74
      %p76 = scmp.ne.s32.totalorder %s68, %s71
      %p77 = scmp.eq.s32.totalorder %s18, 0
      %p78 = por %p76, %p77
      %p79 = scmp.ne.s32.totalorder %s68, %s71
      %p80 = scmp.eq.s32.totalorder %s23, 1
      %p81 = por %p79, %p80
      %p82 = scmp.ne.s32.totalorder %s71, %s72
      %p83 = scmp.eq.s32.totalorder %s23, 0
      %p84 = por %p82, %p83
      %p85 = scmp.ne.s32.totalorder %s71, %s72
      %p86 = scmp.eq.s32.totalorder %s24, 1
      %p87 = por %p85, %p86
      %p89 = scmp.ne.s32.totalorder %s72, %s88
      %p90 = scmp.eq.s32.totalorder %s24, 0
      %p91 = por %p89, %p90
      %p92 = scmp.le.s32.totalorder 1, %s18
      %p93 = scmp.lt.s32.totalorder %s18, 3
      %p94 = pnand %p92, %p93
      %p95 = pneg %p94
      // Predicated region
      $region9: #{tpu_custom_call.1} parent=5 // pred_check
        _
      $region10: #{tpu_custom_call.1} parent=5 // pred_check_branch
        %97 = sbr.rel (%p94) target = $region12
      $region11: #{tpu_custom_call.1} parent=5 // pred_region
        %s98 = ssub.s32 %s18, 1
      $region12: #{tpu_custom_call.1} parent=5 // pred_fallthru
        _
      %p99 = scmp.lt.s32.totalorder %s18, 2
      // Predicated region
      $region13: #{tpu_custom_call.1} parent=5 // pred_check
        %p100 = pneg %p99
      $region14: #{tpu_custom_call.1} parent=5 // pred_check_branch
        %102 = sbr.rel (%p100) target = $region16
      $region15: #{tpu_custom_call.1} parent=5 // pred_region
        // Predicated region
        $region17: #{tpu_custom_call.1} parent=15 // pred_check
          %p103 = pneg %p50
        $region18: #{tpu_custom_call.1} parent=15 // pred_check_branch
          %105 = sbr.rel (%p103) target = $region20
        $region19: #{tpu_custom_call.1} parent=15 // pred_region
          %s106 = sand.u32 %s40, 1
          %s107 = scalar_lea.sflag [#allocation6], %s106
          %s108 = sand.u32 %s40, 1
          %s109 = smul.addr %s108, 64
          %s110 = scalar_lea.vmem [#allocation5], %s109
          %s112 = ssub.s32 1024, 1024
          %113 = vsyncadd %s107, %s112
          %s114 = smul.addr %s25, 8
          %s115 = smul.addr %s114, 128
          %s116 = scalar_lea.hbm %s1, %s115
          %s117 = sshll.u32 %s110, 4
          %s118 = int_to_ptr.vmem [resolvable:$true] %s117
          %123 = dma.hbm_to_vmem [thread:$0]  %s116, 1024, %s118, %s107, 128, 128, 8
        $region20: #{tpu_custom_call.1} parent=15 // pred_fallthru
          _
      $region16: #{tpu_custom_call.1} parent=5 // pred_fallthru
        _
      %p124 = scmp.le.s32.totalorder 1, %s18
      %p125 = scmp.lt.s32.totalorder %s18, 3
      %p126 = pnand %p124, %p125
      %p127 = pneg %p126
      // Predicated region
      $region21: #{tpu_custom_call.1} parent=5 // pred_check
        _
      $region22: #{tpu_custom_call.1} parent=5 // pred_check_branch
        %129 = sbr.rel (%p126) target = $region24
      $region23: #{tpu_custom_call.1} parent=5 // pred_region
        %s130 = ssub.s32 %s18, 1
        %s131 = sand.u32 %s43, 1
        %s132 = scalar_lea.sflag [#allocation6], %s131
        %s133 = sand.u32 %s43, 1
        %s134 = smul.addr %s133, 64
        %s135 = scalar_lea.vmem [#allocation5], %s134
        // Predicated region
        $region25: #{tpu_custom_call.1} parent=23 // pred_check
          %p136 = pneg %p56
        $region26: #{tpu_custom_call.1} parent=23 // pred_check_branch
          %138 = sbr.rel (%p136) target = $region28
        $region27: #{tpu_custom_call.1} parent=23 // pred_region
          %139 = dma.done %s132, 1024
        $region28: #{tpu_custom_call.1} parent=23 // pred_fallthru
          _
        %s140 = sand.u32 %s43, 1
        %s141 = scalar_lea.sflag [#allocation6], %s140
        %s142 = sand.u32 %s43, 1
        %s143 = smul.addr %s142, 64
        %s144 = scalar_lea.vmem [#allocation5], %s143
        %p145 = pneg %p56
        %p146 = pneg %p53
        %p147 = pneg %p84
        %p148 = pneg %p81
        %s149 = sand.u32 %s71, 1
        %s150 = scalar_lea.sflag [#allocation7], %s149
        %s151 = sand.u32 %s71, 1
        %s152 = smul.addr %s151, 128
        %s153 = scalar_lea.vmem [#allocation8], %s152
        %s154 = smul.u32 2, %s28
        %p155 = scmp.eq.s32.totalorder %s28, 0
        // Predicated region
        $region29: #{tpu_custom_call.1} parent=23 // pred_check
          %p156 = pneg %p155
        $region30: #{tpu_custom_call.1} parent=23 // pred_check_branch
          %158 = sbr.rel (%p156) target = $region32
        $region31: #{tpu_custom_call.1} parent=23 // pred_region
          %vm159 = vcmask 146432
          %160 = vst.msk [vmem:[#allocation2] sm:$0xff] %vm159, 0.0
          %161 = vst.msk [vmem:[#allocation2 + $0x8] sm:$0xff] %vm159, 0.0
          %vm162 = vcmask 140288
          %163 = vst.msk [vmem:[#allocation2 + $0x10] sm:$0x3] %vm162, 0.0
          %164 = vst.msk [vmem:[#allocation2 + $0x18] sm:$0xff] %vm159, 0.0
          %165 = vst.msk [vmem:[#allocation2 + $0x20] sm:$0xff] %vm159, 0.0
          %166 = vst.msk [vmem:[#allocation2 + $0x28] sm:$0x3] %vm162, 0.0
          %167 = vst.msk [vmem:[#allocation2 + $0x30] sm:$0xff] %vm159, 0.0
          %168 = vst.msk [vmem:[#allocation2 + $0x38] sm:$0xff] %vm159, 0.0
          %169 = vst.msk [vmem:[#allocation2 + $0x40] sm:$0x3] %vm162, 0.0
          %170 = vst.msk [vmem:[#allocation2 + $0x48] sm:$0xff] %vm159, 0.0
          %171 = vst.msk [vmem:[#allocation2 + $0x50] sm:$0xff] %vm159, 0.0
          %172 = vst.msk [vmem:[#allocation2 + $0x58] sm:$0x3] %vm162, 0.0
          %v173 = vld [vmem:[%s135] sm:$0xff]
          %v174 = vld [vmem:[%s135 + $0x8] sm:$0xff]
          %v175 = vld [vmem:[%s135 + $0x10] sm:$0xff]
          %v176 = vld [vmem:[%s135 + $0x18] sm:$0xff]
          %v177 = vld [vmem:[%s135 + $0x20] sm:$0xff]
          %v178 = vld [vmem:[%s135 + $0x28] sm:$0xff]
          %v179 = vld [vmem:[%s135 + $0x30] sm:$0xff]
          %v180 = vld [vmem:[%s135 + $0x38] sm:$0xff]
          %189 = vrot.lane.b32.xlu0 %v173, 1
          %v190 = vpop.permute.xlu0 %189
          %191 = vrot.lane.b32.xlu0 %v174, 1
          %v192 = vpop.permute.xlu0 %191
          %193 = vrot.lane.b32.xlu0 %v175, 1
          %v194 = vpop.permute.xlu0 %193
          %195 = vrot.lane.b32.xlu0 %v176, 1
          %v196 = vpop.permute.xlu0 %195
          %197 = vrot.lane.b32.xlu0 %v177, 1
          %v198 = vpop.permute.xlu0 %197
          %199 = vrot.lane.b32.xlu0 %v178, 1
          %v200 = vpop.permute.xlu0 %199
          %201 = vrot.lane.b32.xlu0 %v179, 1
          %v202 = vpop.permute.xlu0 %201
          %203 = vrot.lane.b32.xlu0 %v180, 1
          %v204 = vpop.permute.xlu0 %203
          %vm213 = vcmask 138248
          %214 = vst.msk [vmem:[#allocation2 + $0x1] sm:$0xff] %vm213, %v190
          %215 = vst.msk [vmem:[#allocation2 + $0x9] sm:$0xff] %vm213, %v192
          %216 = vst.msk [vmem:[#allocation2 + $0x19] sm:$0xff] %vm213, %v194
          %217 = vst.msk [vmem:[#allocation2 + $0x21] sm:$0xff] %vm213, %v196
          %218 = vst.msk [vmem:[#allocation2 + $0x31] sm:$0xff] %vm213, %v198
          %219 = vst.msk [vmem:[#allocation2 + $0x39] sm:$0xff] %vm213, %v200
          %220 = vst.msk [vmem:[#allocation2 + $0x49] sm:$0xff] %vm213, %v202
          %221 = vst.msk [vmem:[#allocation2 + $0x51] sm:$0xff] %vm213, %v204
        $region32: #{tpu_custom_call.1} parent=23 // pred_fallthru
          _
        %s222 = smul.u32 %s28, 16
        %s223 = scalar_lea.vmem [#allocation2], %s222
        %v224 = vld [vmem:[%s223] sm:$0xff]
        %v225 = vld [vmem:[%s223 + $0x8] sm:$0xff]
        %s226 = sld [smem:[#allocation4]]
        %v227 = vstv %s226
        %v228 = vmul.f32 %v227, %v224
        %v229 = vmul.f32 %v227, %v225
        %v230 = vadd.f32 %v228, 0.0
        %v231 = vadd.f32 %v229, 0.0
        %s232 = sld [smem:[#allocation4 + $0x1]]
        %v233 = vstv %s232
        %v234 = vmul.f32 %v233, %v224
        %v235 = vmul.f32 %v233, %v225
        %v236 = vadd.f32 %v234, 0.0
        %v237 = vadd.f32 %v235, 0.0
        %s238 = sld [smem:[#allocation4 + $0x2]]
        %v239 = vstv %s238
        %v240 = vmul.f32 %v239, %v224
        %v241 = vmul.f32 %v239, %v225
        %v242 = vadd.f32 %v240, 0.0
        %v243 = vadd.f32 %v241, 0.0
        %s244 = sld [smem:[#allocation4 + $0x3]]
        %v245 = vstv %s244
        %v246 = vmul.f32 %v245, %v224
        %v247 = vmul.f32 %v245, %v225
        %v248 = vadd.f32 %v246, 0.0
        %v249 = vadd.f32 %v247, 0.0
        %s250 = sld [smem:[#allocation4 + $0x4]]
        %v251 = vstv %s250
        %v252 = vmul.f32 %v251, %v224
        %v253 = vmul.f32 %v251, %v225
        %v254 = vadd.f32 %v252, 0.0
        %v255 = vadd.f32 %v253, 0.0
        %s256 = sld [smem:[#allocation4 + $0x5]]
        %v257 = vstv %s256
        %v258 = vmul.f32 %v257, %v224
        %v259 = vmul.f32 %v257, %v225
        %v260 = vadd.f32 %v258, 0.0
        %v261 = vadd.f32 %v259, 0.0
        %s262 = sld [smem:[#allocation4 + $0x6]]
        %v263 = vstv %s262
        %v264 = vmul.f32 %v263, %v224
        %v265 = vmul.f32 %v263, %v225
        %v266 = vadd.f32 %v264, 0.0
        %v267 = vadd.f32 %v265, 0.0
        %s268 = sld [smem:[#allocation4 + $0x7]]
        %v269 = vstv %s268
        %v270 = vmul.f32 %v269, %v224
        %v271 = vmul.f32 %v269, %v225
        %v272 = vadd.f32 %v270, 0.0
        %v273 = vadd.f32 %v271, 0.0
        %s274 = sadd.s32 %s222, 24
        %s275 = scalar_lea.vmem [#allocation2], %s274
        %v276 = vld [vmem:[%s275] sm:$0xff]
        %v277 = vld [vmem:[%s275 + $0x8] sm:$0xff]
        %s278 = sld [smem:[#allocation4 + $0x8]]
        %v279 = vstv %s278
        %v280 = vmul.f32 %v279, %v276
        %v281 = vmul.f32 %v279, %v277
        %v282 = vadd.f32 %v230, %v280
        %v283 = vadd.f32 %v231, %v281
        %s284 = sld [smem:[#allocation4 + $0x9]]
        %v285 = vstv %s284
        %v286 = vmul.f32 %v285, %v276
        %v287 = vmul.f32 %v285, %v277
        %v288 = vadd.f32 %v236, %v286
        %v289 = vadd.f32 %v237, %v287
        %s290 = sld [smem:[#allocation4 + $0xa]]
        %v291 = vstv %s290
        %v292 = vmul.f32 %v291, %v276
        %v293 = vmul.f32 %v291, %v277
        %v294 = vadd.f32 %v242, %v292
        %v295 = vadd.f32 %v243, %v293
        %s296 = sld [smem:[#allocation4 + $0xb]]
        %v297 = vstv %s296
        %v298 = vmul.f32 %v297, %v276
        %v299 = vmul.f32 %v297, %v277
        %v300 = vadd.f32 %v248, %v298
        %v301 = vadd.f32 %v249, %v299
        %s302 = sld [smem:[#allocation4 + $0xc]]
        %v303 = vstv %s302
        %v304 = vmul.f32 %v303, %v276
        %v305 = vmul.f32 %v303, %v277
        %v306 = vadd.f32 %v254, %v304
        %v307 = vadd.f32 %v255, %v305
        %s308 = sld [smem:[#allocation4 + $0xd]]
        %v309 = vstv %s308
        %v310 = vmul.f32 %v309, %v276
        %v311 = vmul.f32 %v309, %v277
        %v312 = vadd.f32 %v260, %v310
        %v313 = vadd.f32 %v261, %v311
        %s314 = sld [smem:[#allocation4 + $0xe]]
        %v315 = vstv %s314
        %v316 = vmul.f32 %v315, %v276
        %v317 = vmul.f32 %v315, %v277
        %v318 = vadd.f32 %v266, %v316
        %v319 = vadd.f32 %v267, %v317
        %s320 = sld [smem:[#allocation4 + $0xf]]
        %v321 = vstv %s320
        %v322 = vmul.f32 %v321, %v276
        %v323 = vmul.f32 %v321, %v277
        %v324 = vadd.f32 %v272, %v322
        %v325 = vadd.f32 %v273, %v323
        %s326 = sadd.s32 %s222, 48
        %s327 = scalar_lea.vmem [#allocation2], %s326
        %v328 = vld [vmem:[%s327] sm:$0xff]
        %v329 = vld [vmem:[%s327 + $0x8] sm:$0xff]
        %s330 = sld [smem:[#allocation4 + $0x10]]
        %v331 = vstv %s330
        %v332 = vmul.f32 %v331, %v328
        %v333 = vmul.f32 %v331, %v329
        %v334 = vadd.f32 %v282, %v332
        %v335 = vadd.f32 %v283, %v333
        %s336 = sld [smem:[#allocation4 + $0x11]]
        %v337 = vstv %s336
        %v338 = vmul.f32 %v337, %v328
        %v339 = vmul.f32 %v337, %v329
        %v340 = vadd.f32 %v288, %v338
        %v341 = vadd.f32 %v289, %v339
        %s342 = sld [smem:[#allocation4 + $0x12]]
        %v343 = vstv %s342
        %v344 = vmul.f32 %v343, %v328
        %v345 = vmul.f32 %v343, %v329
        %v346 = vadd.f32 %v294, %v344
        %v347 = vadd.f32 %v295, %v345
        %s348 = sld [smem:[#allocation4 + $0x13]]
        %v349 = vstv %s348
        %v350 = vmul.f32 %v349, %v328
        %v351 = vmul.f32 %v349, %v329
        %v352 = vadd.f32 %v300, %v350
        %v353 = vadd.f32 %v301, %v351
        %s354 = sld [smem:[#allocation4 + $0x14]]
        %v355 = vstv %s354
        %v356 = vmul.f32 %v355, %v328
        %v357 = vmul.f32 %v355, %v329
        %v358 = vadd.f32 %v306, %v356
        %v359 = vadd.f32 %v307, %v357
        %s360 = sld [smem:[#allocation4 + $0x15]]
        %v361 = vstv %s360
        %v362 = vmul.f32 %v361, %v328
        %v363 = vmul.f32 %v361, %v329
        %v364 = vadd.f32 %v312, %v362
        %v365 = vadd.f32 %v313, %v363
        %s366 = sld [smem:[#allocation4 + $0x16]]
        %v367 = vstv %s366
        %v368 = vmul.f32 %v367, %v328
        %v369 = vmul.f32 %v367, %v329
        %v370 = vadd.f32 %v318, %v368
        %v371 = vadd.f32 %v319, %v369
        %s372 = sld [smem:[#allocation4 + $0x17]]
        %v373 = vstv %s372
        %v374 = vmul.f32 %v373, %v328
        %v375 = vmul.f32 %v373, %v329
        %v376 = vadd.f32 %v324, %v374
        %v377 = vadd.f32 %v325, %v375
        %s378 = sadd.s32 %s222, 72
        %s379 = scalar_lea.vmem [#allocation2], %s378
        %v380 = vld [vmem:[%s379] sm:$0xff]
        %v381 = vld [vmem:[%s379 + $0x8] sm:$0xff]
        %s382 = sld [smem:[#allocation4 + $0x18]]
        %v383 = vstv %s382
        %v384 = vmul.f32 %v383, %v380
        %v385 = vmul.f32 %v383, %v381
        %v386 = vadd.f32 %v334, %v384
        %v387 = vadd.f32 %v335, %v385
        %s388 = sld [smem:[#allocation4 + $0x19]]
        %v389 = vstv %s388
        %v390 = vmul.f32 %v389, %v380
        %v391 = vmul.f32 %v389, %v381
        %v392 = vadd.f32 %v340, %v390
        %v393 = vadd.f32 %v341, %v391
        %s394 = sld [smem:[#allocation4 + $0x1a]]
        %v395 = vstv %s394
        %v396 = vmul.f32 %v395, %v380
        %v397 = vmul.f32 %v395, %v381
        %v398 = vadd.f32 %v346, %v396
        %v399 = vadd.f32 %v347, %v397
        %s400 = sld [smem:[#allocation4 + $0x1b]]
        %v401 = vstv %s400
        %v402 = vmul.f32 %v401, %v380
        %v403 = vmul.f32 %v401, %v381
        %v404 = vadd.f32 %v352, %v402
        %v405 = vadd.f32 %v353, %v403
        %s406 = sld [smem:[#allocation4 + $0x1c]]
        %v407 = vstv %s406
        %v408 = vmul.f32 %v407, %v380
        %v409 = vmul.f32 %v407, %v381
        %v410 = vadd.f32 %v358, %v408
        %v411 = vadd.f32 %v359, %v409
        %s412 = sld [smem:[#allocation4 + $0x1d]]
        %v413 = vstv %s412
        %v414 = vmul.f32 %v413, %v380
        %v415 = vmul.f32 %v413, %v381
        %v416 = vadd.f32 %v364, %v414
        %v417 = vadd.f32 %v365, %v415
        %s418 = sld [smem:[#allocation4 + $0x1e]]
        %v419 = vstv %s418
        %v420 = vmul.f32 %v419, %v380
        %v421 = vmul.f32 %v419, %v381
        %v422 = vadd.f32 %v370, %v420
        %v423 = vadd.f32 %v371, %v421
        %s424 = sld [smem:[#allocation4 + $0x1f]]
        %v425 = vstv %s424
        %v426 = vmul.f32 %v425, %v380
        %v427 = vmul.f32 %v425, %v381
        %v428 = vadd.f32 %v376, %v426
        %v429 = vadd.f32 %v377, %v427
        %s430 = sld [smem:[#allocation4 + $0x20]]
        %v431 = vstv %s430
        %v432 = vmul.f32 %v431, %v224
        %v433 = vmul.f32 %v431, %v225
        %436 = vrot.lane.b32.xlu0 %v432, 127
        %v437 = vpop.permute.xlu0 %436
        %438 = vrot.lane.b32.xlu0 %v433, 127
        %v439 = vpop.permute.xlu0 %438
        %v442 = vadd.f32 %v386, %v437
        %v443 = vadd.f32 %v387, %v439
        %s444 = sld [smem:[#allocation4 + $0x21]]
        %v445 = vstv %s444
        %v446 = vmul.f32 %v445, %v224
        %v447 = vmul.f32 %v445, %v225
        %450 = vrot.lane.b32.xlu0 %v446, 127
        %v451 = vpop.permute.xlu0 %450
        %452 = vrot.lane.b32.xlu0 %v447, 127
        %v453 = vpop.permute.xlu0 %452
        %v456 = vadd.f32 %v392, %v451
        %v457 = vadd.f32 %v393, %v453
        %s458 = sld [smem:[#allocation4 + $0x22]]
        %v459 = vstv %s458
        %v460 = vmul.f32 %v459, %v224
        %v461 = vmul.f32 %v459, %v225
        %464 = vrot.lane.b32.xlu0 %v460, 127
        %v465 = vpop.permute.xlu0 %464
        %466 = vrot.lane.b32.xlu0 %v461, 127
        %v467 = vpop.permute.xlu0 %466
        %v470 = vadd.f32 %v398, %v465
        %v471 = vadd.f32 %v399, %v467
        %s472 = sld [smem:[#allocation4 + $0x23]]
        %v473 = vstv %s472
        %v474 = vmul.f32 %v473, %v224
        %v475 = vmul.f32 %v473, %v225
        %478 = vrot.lane.b32.xlu0 %v474, 127
        %v479 = vpop.permute.xlu0 %478
        %480 = vrot.lane.b32.xlu0 %v475, 127
        %v481 = vpop.permute.xlu0 %480
        %v484 = vadd.f32 %v404, %v479
        %v485 = vadd.f32 %v405, %v481
        %s486 = sld [smem:[#allocation4 + $0x24]]
        %v487 = vstv %s486
        %v488 = vmul.f32 %v487, %v224
        %v489 = vmul.f32 %v487, %v225
        %492 = vrot.lane.b32.xlu0 %v488, 127
        %v493 = vpop.permute.xlu0 %492
        %494 = vrot.lane.b32.xlu0 %v489, 127
        %v495 = vpop.permute.xlu0 %494
        %v498 = vadd.f32 %v410, %v493
        %v499 = vadd.f32 %v411, %v495
        %s500 = sld [smem:[#allocation4 + $0x25]]
        %v501 = vstv %s500
        %v502 = vmul.f32 %v501, %v224
        %v503 = vmul.f32 %v501, %v225
        %506 = vrot.lane.b32.xlu0 %v502, 127
        %v507 = vpop.permute.xlu0 %506
        %508 = vrot.lane.b32.xlu0 %v503, 127
        %v509 = vpop.permute.xlu0 %508
        %v512 = vadd.f32 %v416, %v507
        %v513 = vadd.f32 %v417, %v509
        %s514 = sld [smem:[#allocation4 + $0x26]]
        %v515 = vstv %s514
        %v516 = vmul.f32 %v515, %v224
        %v517 = vmul.f32 %v515, %v225
        %520 = vrot.lane.b32.xlu0 %v516, 127
        %v521 = vpop.permute.xlu0 %520
        %522 = vrot.lane.b32.xlu0 %v517, 127
        %v523 = vpop.permute.xlu0 %522
        %v526 = vadd.f32 %v422, %v521
        %v527 = vadd.f32 %v423, %v523
        %s528 = sld [smem:[#allocation4 + $0x27]]
        %v529 = vstv %s528
        %v530 = vmul.f32 %v529, %v224
        %v531 = vmul.f32 %v529, %v225
        %534 = vrot.lane.b32.xlu0 %v530, 127
        %v535 = vpop.permute.xlu0 %534
        %536 = vrot.lane.b32.xlu0 %v531, 127
        %v537 = vpop.permute.xlu0 %536
        %v540 = vadd.f32 %v428, %v535
        %v541 = vadd.f32 %v429, %v537
        %s542 = sld [smem:[#allocation4 + $0x28]]
        %v543 = vstv %s542
        %v544 = vmul.f32 %v543, %v276
        %v545 = vmul.f32 %v543, %v277
        %548 = vrot.lane.b32.xlu0 %v544, 127
        %v549 = vpop.permute.xlu0 %548
        %550 = vrot.lane.b32.xlu0 %v545, 127
        %v551 = vpop.permute.xlu0 %550
        %v554 = vadd.f32 %v442, %v549
        %v555 = vadd.f32 %v443, %v551
        %s556 = sld [smem:[#allocation4 + $0x29]]
        %v557 = vstv %s556
        %v558 = vmul.f32 %v557, %v276
        %v559 = vmul.f32 %v557, %v277
        %562 = vrot.lane.b32.xlu0 %v558, 127
        %v563 = vpop.permute.xlu0 %562
        %564 = vrot.lane.b32.xlu0 %v559, 127
        %v565 = vpop.permute.xlu0 %564
        %v568 = vadd.f32 %v456, %v563
        %v569 = vadd.f32 %v457, %v565
        %s570 = sld [smem:[#allocation4 + $0x2a]]
        %v571 = vstv %s570
        %v572 = vmul.f32 %v571, %v276
        %v573 = vmul.f32 %v571, %v277
        %576 = vrot.lane.b32.xlu0 %v572, 127
        %v577 = vpop.permute.xlu0 %576
        %578 = vrot.lane.b32.xlu0 %v573, 127
        %v579 = vpop.permute.xlu0 %578
        %v582 = vadd.f32 %v470, %v577
        %v583 = vadd.f32 %v471, %v579
        %s584 = sld [smem:[#allocation4 + $0x2b]]
        %v585 = vstv %s584
        %v586 = vmul.f32 %v585, %v276
        %v587 = vmul.f32 %v585, %v277
        %590 = vrot.lane.b32.xlu0 %v586, 127
        %v591 = vpop.permute.xlu0 %590
        %592 = vrot.lane.b32.xlu0 %v587, 127
        %v593 = vpop.permute.xlu0 %592
        %v596 = vadd.f32 %v484, %v591
        %v597 = vadd.f32 %v485, %v593
        %s598 = sld [smem:[#allocation4 + $0x2c]]
        %v599 = vstv %s598
        %v600 = vmul.f32 %v599, %v276
        %v601 = vmul.f32 %v599, %v277
        %604 = vrot.lane.b32.xlu0 %v600, 127
        %v605 = vpop.permute.xlu0 %604
        %606 = vrot.lane.b32.xlu0 %v601, 127
        %v607 = vpop.permute.xlu0 %606
        %v610 = vadd.f32 %v498, %v605
        %v611 = vadd.f32 %v499, %v607
        %s612 = sld [smem:[#allocation4 + $0x2d]]
        %v613 = vstv %s612
        %v614 = vmul.f32 %v613, %v276
        %v615 = vmul.f32 %v613, %v277
        %618 = vrot.lane.b32.xlu0 %v614, 127
        %v619 = vpop.permute.xlu0 %618
        %620 = vrot.lane.b32.xlu0 %v615, 127
        %v621 = vpop.permute.xlu0 %620
        %v624 = vadd.f32 %v512, %v619
        %v625 = vadd.f32 %v513, %v621
        %s626 = sld [smem:[#allocation4 + $0x2e]]
        %v627 = vstv %s626
        %v628 = vmul.f32 %v627, %v276
        %v629 = vmul.f32 %v627, %v277
        %632 = vrot.lane.b32.xlu0 %v628, 127
        %v633 = vpop.permute.xlu0 %632
        %634 = vrot.lane.b32.xlu0 %v629, 127
        %v635 = vpop.permute.xlu0 %634
        %v638 = vadd.f32 %v526, %v633
        %v639 = vadd.f32 %v527, %v635
        %s640 = sld [smem:[#allocation4 + $0x2f]]
        %v641 = vstv %s640
        %v642 = vmul.f32 %v641, %v276
        %v643 = vmul.f32 %v641, %v277
        %646 = vrot.lane.b32.xlu0 %v642, 127
        %v647 = vpop.permute.xlu0 %646
        %648 = vrot.lane.b32.xlu0 %v643, 127
        %v649 = vpop.permute.xlu0 %648
        %v652 = vadd.f32 %v540, %v647
        %v653 = vadd.f32 %v541, %v649
        %s654 = sld [smem:[#allocation4 + $0x30]]
        %v655 = vstv %s654
        %v656 = vmul.f32 %v655, %v328
        %v657 = vmul.f32 %v655, %v329
        %660 = vrot.lane.b32.xlu0 %v656, 127
        %v661 = vpop.permute.xlu0 %660
        %662 = vrot.lane.b32.xlu0 %v657, 127
        %v663 = vpop.permute.xlu0 %662
        %v666 = vadd.f32 %v554, %v661
        %v667 = vadd.f32 %v555, %v663
        %s668 = sld [smem:[#allocation4 + $0x31]]
        %v669 = vstv %s668
        %v670 = vmul.f32 %v669, %v328
        %v671 = vmul.f32 %v669, %v329
        %674 = vrot.lane.b32.xlu0 %v670, 127
        %v675 = vpop.permute.xlu0 %674
        %676 = vrot.lane.b32.xlu0 %v671, 127
        %v677 = vpop.permute.xlu0 %676
        %v680 = vadd.f32 %v568, %v675
        %v681 = vadd.f32 %v569, %v677
        %s682 = sld [smem:[#allocation4 + $0x32]]
        %v683 = vstv %s682
        %v684 = vmul.f32 %v683, %v328
        %v685 = vmul.f32 %v683, %v329
        %688 = vrot.lane.b32.xlu0 %v684, 127
        %v689 = vpop.permute.xlu0 %688
        %690 = vrot.lane.b32.xlu0 %v685, 127
        %v691 = vpop.permute.xlu0 %690
        %v694 = vadd.f32 %v582, %v689
        %v695 = vadd.f32 %v583, %v691
        %s696 = sld [smem:[#allocation4 + $0x33]]
        %v697 = vstv %s696
        %v698 = vmul.f32 %v697, %v328
        %v699 = vmul.f32 %v697, %v329
        %702 = vrot.lane.b32.xlu0 %v698, 127
        %v703 = vpop.permute.xlu0 %702
        %704 = vrot.lane.b32.xlu0 %v699, 127
        %v705 = vpop.permute.xlu0 %704
        %v708 = vadd.f32 %v596, %v703
        %v709 = vadd.f32 %v597, %v705
        %s710 = sld [smem:[#allocation4 + $0x34]]
        %v711 = vstv %s710
        %v712 = vmul.f32 %v711, %v328
        %v713 = vmul.f32 %v711, %v329
        %716 = vrot.lane.b32.xlu0 %v712, 127
        %v717 = vpop.permute.xlu0 %716
        %718 = vrot.lane.b32.xlu0 %v713, 127
        %v719 = vpop.permute.xlu0 %718
        %v722 = vadd.f32 %v610, %v717
        %v723 = vadd.f32 %v611, %v719
        %s724 = sld [smem:[#allocation4 + $0x35]]
        %v725 = vstv %s724
        %v726 = vmul.f32 %v725, %v328
        %v727 = vmul.f32 %v725, %v329
        %730 = vrot.lane.b32.xlu0 %v726, 127
        %v731 = vpop.permute.xlu0 %730
        %732 = vrot.lane.b32.xlu0 %v727, 127
        %v733 = vpop.permute.xlu0 %732
        %v736 = vadd.f32 %v624, %v731
        %v737 = vadd.f32 %v625, %v733
        %s738 = sld [smem:[#allocation4 + $0x36]]
        %v739 = vstv %s738
        %v740 = vmul.f32 %v739, %v328
        %v741 = vmul.f32 %v739, %v329
        %744 = vrot.lane.b32.xlu0 %v740, 127
        %v745 = vpop.permute.xlu0 %744
        %746 = vrot.lane.b32.xlu0 %v741, 127
        %v747 = vpop.permute.xlu0 %746
        %v750 = vadd.f32 %v638, %v745
        %v751 = vadd.f32 %v639, %v747
        %s752 = sld [smem:[#allocation4 + $0x37]]
        %v753 = vstv %s752
        %v754 = vmul.f32 %v753, %v328
        %v755 = vmul.f32 %v753, %v329
        %758 = vrot.lane.b32.xlu0 %v754, 127
        %v759 = vpop.permute.xlu0 %758
        %760 = vrot.lane.b32.xlu0 %v755, 127
        %v761 = vpop.permute.xlu0 %760
        %v764 = vadd.f32 %v652, %v759
        %v765 = vadd.f32 %v653, %v761
        %s766 = sld [smem:[#allocation4 + $0x38]]
        %v767 = vstv %s766
        %v768 = vmul.f32 %v767, %v380
        %v769 = vmul.f32 %v767, %v381
        %772 = vrot.lane.b32.xlu0 %v768, 127
        %v773 = vpop.permute.xlu0 %772
        %774 = vrot.lane.b32.xlu0 %v769, 127
        %v775 = vpop.permute.xlu0 %774
        %v778 = vadd.f32 %v666, %v773
        %v779 = vadd.f32 %v667, %v775
        %s780 = sld [smem:[#allocation4 + $0x39]]
        %v781 = vstv %s780
        %v782 = vmul.f32 %v781, %v380
        %v783 = vmul.f32 %v781, %v381
        %786 = vrot.lane.b32.xlu0 %v782, 127
        %v787 = vpop.permute.xlu0 %786
        %788 = vrot.lane.b32.xlu0 %v783, 127
        %v789 = vpop.permute.xlu0 %788
        %v792 = vadd.f32 %v680, %v787
        %v793 = vadd.f32 %v681, %v789
        %s794 = sld [smem:[#allocation4 + $0x3a]]
        %v795 = vstv %s794
        %v796 = vmul.f32 %v795, %v380
        %v797 = vmul.f32 %v795, %v381
        %800 = vrot.lane.b32.xlu0 %v796, 127
        %v801 = vpop.permute.xlu0 %800
        %802 = vrot.lane.b32.xlu0 %v797, 127
        %v803 = vpop.permute.xlu0 %802
        %v806 = vadd.f32 %v694, %v801
        %v807 = vadd.f32 %v695, %v803
        %s808 = sld [smem:[#allocation4 + $0x3b]]
        %v809 = vstv %s808
        %v810 = vmul.f32 %v809, %v380
        %v811 = vmul.f32 %v809, %v381
        %814 = vrot.lane.b32.xlu0 %v810, 127
        %v815 = vpop.permute.xlu0 %814
        %816 = vrot.lane.b32.xlu0 %v811, 127
        %v817 = vpop.permute.xlu0 %816
        %v820 = vadd.f32 %v708, %v815
        %v821 = vadd.f32 %v709, %v817
        %s822 = sld [smem:[#allocation4 + $0x3c]]
        %v823 = vstv %s822
        %v824 = vmul.f32 %v823, %v380
        %v825 = vmul.f32 %v823, %v381
        %828 = vrot.lane.b32.xlu0 %v824, 127
        %v829 = vpop.permute.xlu0 %828
        %830 = vrot.lane.b32.xlu0 %v825, 127
        %v831 = vpop.permute.xlu0 %830
        %v834 = vadd.f32 %v722, %v829
        %v835 = vadd.f32 %v723, %v831
        %s836 = sld [smem:[#allocation4 + $0x3d]]
        %v837 = vstv %s836
        %v838 = vmul.f32 %v837, %v380
        %v839 = vmul.f32 %v837, %v381
        %842 = vrot.lane.b32.xlu0 %v838, 127
        %v843 = vpop.permute.xlu0 %842
        %844 = vrot.lane.b32.xlu0 %v839, 127
        %v845 = vpop.permute.xlu0 %844
        %v848 = vadd.f32 %v736, %v843
        %v849 = vadd.f32 %v737, %v845
        %s850 = sld [smem:[#allocation4 + $0x3e]]
        %v851 = vstv %s850
        %v852 = vmul.f32 %v851, %v380
        %v853 = vmul.f32 %v851, %v381
        %856 = vrot.lane.b32.xlu0 %v852, 127
        %v857 = vpop.permute.xlu0 %856
        %858 = vrot.lane.b32.xlu0 %v853, 127
        %v859 = vpop.permute.xlu0 %858
        %v862 = vadd.f32 %v750, %v857
        %v863 = vadd.f32 %v751, %v859
        %s864 = sld [smem:[#allocation4 + $0x3f]]
        %v865 = vstv %s864
        %v866 = vmul.f32 %v865, %v380
        %v867 = vmul.f32 %v865, %v381
        %870 = vrot.lane.b32.xlu0 %v866, 127
        %v871 = vpop.permute.xlu0 %870
        %872 = vrot.lane.b32.xlu0 %v867, 127
        %v873 = vpop.permute.xlu0 %872
        %v876 = vadd.f32 %v764, %v871
        %v877 = vadd.f32 %v765, %v873
        %s878 = sld [smem:[#allocation4 + $0x40]]
        %v879 = vstv %s878
        %v880 = vmul.f32 %v879, %v224
        %v881 = vmul.f32 %v879, %v225
        %884 = vrot.lane.b32.xlu0 %v880, 126
        %v885 = vpop.permute.xlu0 %884
        %886 = vrot.lane.b32.xlu0 %v881, 126
        %v887 = vpop.permute.xlu0 %886
        %v890 = vadd.f32 %v778, %v885
        %v891 = vadd.f32 %v779, %v887
        %s892 = sld [smem:[#allocation4 + $0x41]]
        %v893 = vstv %s892
        %v894 = vmul.f32 %v893, %v224
        %v895 = vmul.f32 %v893, %v225
        %898 = vrot.lane.b32.xlu0 %v894, 126
        %v899 = vpop.permute.xlu0 %898
        %900 = vrot.lane.b32.xlu0 %v895, 126
        %v901 = vpop.permute.xlu0 %900
        %v904 = vadd.f32 %v792, %v899
        %v905 = vadd.f32 %v793, %v901
        %s906 = sld [smem:[#allocation4 + $0x42]]
        %v907 = vstv %s906
        %v908 = vmul.f32 %v907, %v224
        %v909 = vmul.f32 %v907, %v225
        %912 = vrot.lane.b32.xlu0 %v908, 126
        %v913 = vpop.permute.xlu0 %912
        %914 = vrot.lane.b32.xlu0 %v909, 126
        %v915 = vpop.permute.xlu0 %914
        %v918 = vadd.f32 %v806, %v913
        %v919 = vadd.f32 %v807, %v915
        %s920 = sld [smem:[#allocation4 + $0x43]]
        %v921 = vstv %s920
        %v922 = vmul.f32 %v921, %v224
        %v923 = vmul.f32 %v921, %v225
        %926 = vrot.lane.b32.xlu0 %v922, 126
        %v927 = vpop.permute.xlu0 %926
        %928 = vrot.lane.b32.xlu0 %v923, 126
        %v929 = vpop.permute.xlu0 %928
        %v932 = vadd.f32 %v820, %v927
        %v933 = vadd.f32 %v821, %v929
        %s934 = sld [smem:[#allocation4 + $0x44]]
        %v935 = vstv %s934
        %v936 = vmul.f32 %v935, %v224
        %v937 = vmul.f32 %v935, %v225
        %940 = vrot.lane.b32.xlu0 %v936, 126
        %v941 = vpop.permute.xlu0 %940
        %942 = vrot.lane.b32.xlu0 %v937, 126
        %v943 = vpop.permute.xlu0 %942
        %v946 = vadd.f32 %v834, %v941
        %v947 = vadd.f32 %v835, %v943
        %s948 = sld [smem:[#allocation4 + $0x45]]
        %v949 = vstv %s948
        %v950 = vmul.f32 %v949, %v224
        %v951 = vmul.f32 %v949, %v225
        %954 = vrot.lane.b32.xlu0 %v950, 126
        %v955 = vpop.permute.xlu0 %954
        %956 = vrot.lane.b32.xlu0 %v951, 126
        %v957 = vpop.permute.xlu0 %956
        %v960 = vadd.f32 %v848, %v955
        %v961 = vadd.f32 %v849, %v957
        %s962 = sld [smem:[#allocation4 + $0x46]]
        %v963 = vstv %s962
        %v964 = vmul.f32 %v963, %v224
        %v965 = vmul.f32 %v963, %v225
        %968 = vrot.lane.b32.xlu0 %v964, 126
        %v969 = vpop.permute.xlu0 %968
        %970 = vrot.lane.b32.xlu0 %v965, 126
        %v971 = vpop.permute.xlu0 %970
        %v974 = vadd.f32 %v862, %v969
        %v975 = vadd.f32 %v863, %v971
        %s976 = sld [smem:[#allocation4 + $0x47]]
        %v977 = vstv %s976
        %v978 = vmul.f32 %v977, %v224
        %v979 = vmul.f32 %v977, %v225
        %982 = vrot.lane.b32.xlu0 %v978, 126
        %v983 = vpop.permute.xlu0 %982
        %984 = vrot.lane.b32.xlu0 %v979, 126
        %v985 = vpop.permute.xlu0 %984
        %v988 = vadd.f32 %v876, %v983
        %v989 = vadd.f32 %v877, %v985
        %s990 = sld [smem:[#allocation4 + $0x48]]
        %v991 = vstv %s990
        %v992 = vmul.f32 %v991, %v276
        %v993 = vmul.f32 %v991, %v277
        %996 = vrot.lane.b32.xlu0 %v992, 126
        %v997 = vpop.permute.xlu0 %996
        %998 = vrot.lane.b32.xlu0 %v993, 126
        %v999 = vpop.permute.xlu0 %998
        %v1002 = vadd.f32 %v890, %v997
        %v1003 = vadd.f32 %v891, %v999
        %s1004 = sld [smem:[#allocation4 + $0x49]]
        %v1005 = vstv %s1004
        %v1006 = vmul.f32 %v1005, %v276
        %v1007 = vmul.f32 %v1005, %v277
        %1010 = vrot.lane.b32.xlu0 %v1006, 126
        %v1011 = vpop.permute.xlu0 %1010
        %1012 = vrot.lane.b32.xlu0 %v1007, 126
        %v1013 = vpop.permute.xlu0 %1012
        %v1016 = vadd.f32 %v904, %v1011
        %v1017 = vadd.f32 %v905, %v1013
        %s1018 = sld [smem:[#allocation4 + $0x4a]]
        %v1019 = vstv %s1018
        %v1020 = vmul.f32 %v1019, %v276
        %v1021 = vmul.f32 %v1019, %v277
        %1024 = vrot.lane.b32.xlu0 %v1020, 126
        %v1025 = vpop.permute.xlu0 %1024
        %1026 = vrot.lane.b32.xlu0 %v1021, 126
        %v1027 = vpop.permute.xlu0 %1026
        %v1030 = vadd.f32 %v918, %v1025
        %v1031 = vadd.f32 %v919, %v1027
        %s1032 = sld [smem:[#allocation4 + $0x4b]]
        %v1033 = vstv %s1032
        %v1034 = vmul.f32 %v1033, %v276
        %v1035 = vmul.f32 %v1033, %v277
        %1038 = vrot.lane.b32.xlu0 %v1034, 126
        %v1039 = vpop.permute.xlu0 %1038
        %1040 = vrot.lane.b32.xlu0 %v1035, 126
        %v1041 = vpop.permute.xlu0 %1040
        %v1044 = vadd.f32 %v932, %v1039
        %v1045 = vadd.f32 %v933, %v1041
        %s1046 = sld [smem:[#allocation4 + $0x4c]]
        %v1047 = vstv %s1046
        %v1048 = vmul.f32 %v1047, %v276
        %v1049 = vmul.f32 %v1047, %v277
        %1052 = vrot.lane.b32.xlu0 %v1048, 126
        %v1053 = vpop.permute.xlu0 %1052
        %1054 = vrot.lane.b32.xlu0 %v1049, 126
        %v1055 = vpop.permute.xlu0 %1054
        %v1058 = vadd.f32 %v946, %v1053
        %v1059 = vadd.f32 %v947, %v1055
        %s1060 = sld [smem:[#allocation4 + $0x4d]]
        %v1061 = vstv %s1060
        %v1062 = vmul.f32 %v1061, %v276
        %v1063 = vmul.f32 %v1061, %v277
        %1066 = vrot.lane.b32.xlu0 %v1062, 126
        %v1067 = vpop.permute.xlu0 %1066
        %1068 = vrot.lane.b32.xlu0 %v1063, 126
        %v1069 = vpop.permute.xlu0 %1068
        %v1072 = vadd.f32 %v960, %v1067
        %v1073 = vadd.f32 %v961, %v1069
        %s1074 = sld [smem:[#allocation4 + $0x4e]]
        %v1075 = vstv %s1074
        %v1076 = vmul.f32 %v1075, %v276
        %v1077 = vmul.f32 %v1075, %v277
        %1080 = vrot.lane.b32.xlu0 %v1076, 126
        %v1081 = vpop.permute.xlu0 %1080
        %1082 = vrot.lane.b32.xlu0 %v1077, 126
        %v1083 = vpop.permute.xlu0 %1082
        %v1086 = vadd.f32 %v974, %v1081
        %v1087 = vadd.f32 %v975, %v1083
        %s1088 = sld [smem:[#allocation4 + $0x4f]]
        %v1089 = vstv %s1088
        %v1090 = vmul.f32 %v1089, %v276
        %v1091 = vmul.f32 %v1089, %v277
        %1094 = vrot.lane.b32.xlu0 %v1090, 126
        %v1095 = vpop.permute.xlu0 %1094
        %1096 = vrot.lane.b32.xlu0 %v1091, 126
        %v1097 = vpop.permute.xlu0 %1096
        %v1100 = vadd.f32 %v988, %v1095
        %v1101 = vadd.f32 %v989, %v1097
        %s1102 = sld [smem:[#allocation4 + $0x50]]
        %v1103 = vstv %s1102
        %v1104 = vmul.f32 %v1103, %v328
        %v1105 = vmul.f32 %v1103, %v329
        %1108 = vrot.lane.b32.xlu0 %v1104, 126
        %v1109 = vpop.permute.xlu0 %1108
        %1110 = vrot.lane.b32.xlu0 %v1105, 126
        %v1111 = vpop.permute.xlu0 %1110
        %v1114 = vadd.f32 %v1002, %v1109
        %v1115 = vadd.f32 %v1003, %v1111
        %s1116 = sld [smem:[#allocation4 + $0x51]]
        %v1117 = vstv %s1116
        %v1118 = vmul.f32 %v1117, %v328
        %v1119 = vmul.f32 %v1117, %v329
        %1122 = vrot.lane.b32.xlu0 %v1118, 126
        %v1123 = vpop.permute.xlu0 %1122
        %1124 = vrot.lane.b32.xlu0 %v1119, 126
        %v1125 = vpop.permute.xlu0 %1124
        %v1128 = vadd.f32 %v1016, %v1123
        %v1129 = vadd.f32 %v1017, %v1125
        %s1130 = sld [smem:[#allocation4 + $0x52]]
        %v1131 = vstv %s1130
        %v1132 = vmul.f32 %v1131, %v328
        %v1133 = vmul.f32 %v1131, %v329
        %1136 = vrot.lane.b32.xlu0 %v1132, 126
        %v1137 = vpop.permute.xlu0 %1136
        %1138 = vrot.lane.b32.xlu0 %v1133, 126
        %v1139 = vpop.permute.xlu0 %1138
        %v1142 = vadd.f32 %v1030, %v1137
        %v1143 = vadd.f32 %v1031, %v1139
        %s1144 = sld [smem:[#allocation4 + $0x53]]
        %v1145 = vstv %s1144
        %v1146 = vmul.f32 %v1145, %v328
        %v1147 = vmul.f32 %v1145, %v329
        %1150 = vrot.lane.b32.xlu0 %v1146, 126
        %v1151 = vpop.permute.xlu0 %1150
        %1152 = vrot.lane.b32.xlu0 %v1147, 126
        %v1153 = vpop.permute.xlu0 %1152
        %v1156 = vadd.f32 %v1044, %v1151
        %v1157 = vadd.f32 %v1045, %v1153
        %s1158 = sld [smem:[#allocation4 + $0x54]]
        %v1159 = vstv %s1158
        %v1160 = vmul.f32 %v1159, %v328
        %v1161 = vmul.f32 %v1159, %v329
        %1164 = vrot.lane.b32.xlu0 %v1160, 126
        %v1165 = vpop.permute.xlu0 %1164
        %1166 = vrot.lane.b32.xlu0 %v1161, 126
        %v1167 = vpop.permute.xlu0 %1166
        %v1170 = vadd.f32 %v1058, %v1165
        %v1171 = vadd.f32 %v1059, %v1167
        %s1172 = sld [smem:[#allocation4 + $0x55]]
        %v1173 = vstv %s1172
        %v1174 = vmul.f32 %v1173, %v328
        %v1175 = vmul.f32 %v1173, %v329
        %1178 = vrot.lane.b32.xlu0 %v1174, 126
        %v1179 = vpop.permute.xlu0 %1178
        %1180 = vrot.lane.b32.xlu0 %v1175, 126
        %v1181 = vpop.permute.xlu0 %1180
        %v1184 = vadd.f32 %v1072, %v1179
        %v1185 = vadd.f32 %v1073, %v1181
        %s1186 = sld [smem:[#allocation4 + $0x56]]
        %v1187 = vstv %s1186
        %v1188 = vmul.f32 %v1187, %v328
        %v1189 = vmul.f32 %v1187, %v329
        %1192 = vrot.lane.b32.xlu0 %v1188, 126
        %v1193 = vpop.permute.xlu0 %1192
        %1194 = vrot.lane.b32.xlu0 %v1189, 126
        %v1195 = vpop.permute.xlu0 %1194
        %v1198 = vadd.f32 %v1086, %v1193
        %v1199 = vadd.f32 %v1087, %v1195
        %s1200 = sld [smem:[#allocation4 + $0x57]]
        %v1201 = vstv %s1200
        %v1202 = vmul.f32 %v1201, %v328
        %v1203 = vmul.f32 %v1201, %v329
        %1206 = vrot.lane.b32.xlu0 %v1202, 126
        %v1207 = vpop.permute.xlu0 %1206
        %1208 = vrot.lane.b32.xlu0 %v1203, 126
        %v1209 = vpop.permute.xlu0 %1208
        %v1212 = vadd.f32 %v1100, %v1207
        %v1213 = vadd.f32 %v1101, %v1209
        %s1214 = sld [smem:[#allocation4 + $0x58]]
        %v1215 = vstv %s1214
        %v1216 = vmul.f32 %v1215, %v380
        %v1217 = vmul.f32 %v1215, %v381
        %1220 = vrot.lane.b32.xlu0 %v1216, 126
        %v1221 = vpop.permute.xlu0 %1220
        %1222 = vrot.lane.b32.xlu0 %v1217, 126
        %v1223 = vpop.permute.xlu0 %1222
        %v1226 = vadd.f32 %v1114, %v1221
        %v1227 = vadd.f32 %v1115, %v1223
        %s1228 = sld [smem:[#allocation4 + $0x59]]
        %v1229 = vstv %s1228
        %v1230 = vmul.f32 %v1229, %v380
        %v1231 = vmul.f32 %v1229, %v381
        %1234 = vrot.lane.b32.xlu0 %v1230, 126
        %v1235 = vpop.permute.xlu0 %1234
        %1236 = vrot.lane.b32.xlu0 %v1231, 126
        %v1237 = vpop.permute.xlu0 %1236
        %v1240 = vadd.f32 %v1128, %v1235
        %v1241 = vadd.f32 %v1129, %v1237
        %s1242 = sld [smem:[#allocation4 + $0x5a]]
        %v1243 = vstv %s1242
        %v1244 = vmul.f32 %v1243, %v380
        %v1245 = vmul.f32 %v1243, %v381
        %1248 = vrot.lane.b32.xlu0 %v1244, 126
        %v1249 = vpop.permute.xlu0 %1248
        %1250 = vrot.lane.b32.xlu0 %v1245, 126
        %v1251 = vpop.permute.xlu0 %1250
        %v1254 = vadd.f32 %v1142, %v1249
        %v1255 = vadd.f32 %v1143, %v1251
        %s1256 = sld [smem:[#allocation4 + $0x5b]]
        %v1257 = vstv %s1256
        %v1258 = vmul.f32 %v1257, %v380
        %v1259 = vmul.f32 %v1257, %v381
        %1262 = vrot.lane.b32.xlu0 %v1258, 126
        %v1263 = vpop.permute.xlu0 %1262
        %1264 = vrot.lane.b32.xlu0 %v1259, 126
        %v1265 = vpop.permute.xlu0 %1264
        %v1268 = vadd.f32 %v1156, %v1263
        %v1269 = vadd.f32 %v1157, %v1265
        %s1270 = sld [smem:[#allocation4 + $0x5c]]
        %v1271 = vstv %s1270
        %v1272 = vmul.f32 %v1271, %v380
        %v1273 = vmul.f32 %v1271, %v381
        %1276 = vrot.lane.b32.xlu0 %v1272, 126
        %v1277 = vpop.permute.xlu0 %1276
        %1278 = vrot.lane.b32.xlu0 %v1273, 126
        %v1279 = vpop.permute.xlu0 %1278
        %v1282 = vadd.f32 %v1170, %v1277
        %v1283 = vadd.f32 %v1171, %v1279
        %s1284 = sld [smem:[#allocation4 + $0x5d]]
        %v1285 = vstv %s1284
        %v1286 = vmul.f32 %v1285, %v380
        %v1287 = vmul.f32 %v1285, %v381
        %1290 = vrot.lane.b32.xlu0 %v1286, 126
        %v1291 = vpop.permute.xlu0 %1290
        %1292 = vrot.lane.b32.xlu0 %v1287, 126
        %v1293 = vpop.permute.xlu0 %1292
        %v1296 = vadd.f32 %v1184, %v1291
        %v1297 = vadd.f32 %v1185, %v1293
        %s1298 = sld [smem:[#allocation4 + $0x5e]]
        %v1299 = vstv %s1298
        %v1300 = vmul.f32 %v1299, %v380
        %v1301 = vmul.f32 %v1299, %v381
        %1304 = vrot.lane.b32.xlu0 %v1300, 126
        %v1305 = vpop.permute.xlu0 %1304
        %1306 = vrot.lane.b32.xlu0 %v1301, 126
        %v1307 = vpop.permute.xlu0 %1306
        %v1310 = vadd.f32 %v1198, %v1305
        %v1311 = vadd.f32 %v1199, %v1307
        %s1312 = sld [smem:[#allocation4 + $0x5f]]
        %v1313 = vstv %s1312
        %v1314 = vmul.f32 %v1313, %v380
        %v1315 = vmul.f32 %v1313, %v381
        %1318 = vrot.lane.b32.xlu0 %v1314, 126
        %v1319 = vpop.permute.xlu0 %1318
        %1320 = vrot.lane.b32.xlu0 %v1315, 126
        %v1321 = vpop.permute.xlu0 %1320
        %v1324 = vadd.f32 %v1212, %v1319
        %v1325 = vadd.f32 %v1213, %v1321
        %s1326 = sadd.s32 %s222, 1
        %s1327 = scalar_lea.vmem [#allocation2], %s1326
        %v1328 = vld [vmem:[%s1327] sm:$0xff]
        %v1329 = vld [vmem:[%s1327 + $0x8] sm:$0xff]
        %s1330 = sld [smem:[#allocation4 + $0x60]]
        %v1331 = vstv %s1330
        %v1332 = vmul.f32 %v1331, %v1328
        %v1333 = vmul.f32 %v1331, %v1329
        %v1334 = vadd.f32 %v1226, %v1332
        %v1335 = vadd.f32 %v1227, %v1333
        %s1336 = sld [smem:[#allocation4 + $0x61]]
        %v1337 = vstv %s1336
        %v1338 = vmul.f32 %v1337, %v1328
        %v1339 = vmul.f32 %v1337, %v1329
        %v1340 = vadd.f32 %v1240, %v1338
        %v1341 = vadd.f32 %v1241, %v1339
        %s1342 = sld [smem:[#allocation4 + $0x62]]
        %v1343 = vstv %s1342
        %v1344 = vmul.f32 %v1343, %v1328
        %v1345 = vmul.f32 %v1343, %v1329
        %v1346 = vadd.f32 %v1254, %v1344
        %v1347 = vadd.f32 %v1255, %v1345
        %s1348 = sld [smem:[#allocation4 + $0x63]]
        %v1349 = vstv %s1348
        %v1350 = vmul.f32 %v1349, %v1328
        %v1351 = vmul.f32 %v1349, %v1329
        %v1352 = vadd.f32 %v1268, %v1350
        %v1353 = vadd.f32 %v1269, %v1351
        %s1354 = sld [smem:[#allocation4 + $0x64]]
        %v1355 = vstv %s1354
        %v1356 = vmul.f32 %v1355, %v1328
        %v1357 = vmul.f32 %v1355, %v1329
        %v1358 = vadd.f32 %v1282, %v1356
        %v1359 = vadd.f32 %v1283, %v1357
        %s1360 = sld [smem:[#allocation4 + $0x65]]
        %v1361 = vstv %s1360
        %v1362 = vmul.f32 %v1361, %v1328
        %v1363 = vmul.f32 %v1361, %v1329
        %v1364 = vadd.f32 %v1296, %v1362
        %v1365 = vadd.f32 %v1297, %v1363
        %s1366 = sld [smem:[#allocation4 + $0x66]]
        %v1367 = vstv %s1366
        %v1368 = vmul.f32 %v1367, %v1328
        %v1369 = vmul.f32 %v1367, %v1329
        %v1370 = vadd.f32 %v1310, %v1368
        %v1371 = vadd.f32 %v1311, %v1369
        %s1372 = sld [smem:[#allocation4 + $0x67]]
        %v1373 = vstv %s1372
        %v1374 = vmul.f32 %v1373, %v1328
        %v1375 = vmul.f32 %v1373, %v1329
        %v1376 = vadd.f32 %v1324, %v1374
        %v1377 = vadd.f32 %v1325, %v1375
        %s1378 = sadd.s32 %s1326, 24
        %s1379 = scalar_lea.vmem [#allocation2], %s1378
        %v1380 = vld [vmem:[%s1379] sm:$0xff]
        %v1381 = vld [vmem:[%s1379 + $0x8] sm:$0xff]
        %s1382 = sld [smem:[#allocation4 + $0x68]]
        %v1383 = vstv %s1382
        %v1384 = vmul.f32 %v1383, %v1380
        %v1385 = vmul.f32 %v1383, %v1381
        %v1386 = vadd.f32 %v1334, %v1384
        %v1387 = vadd.f32 %v1335, %v1385
        %s1388 = sld [smem:[#allocation4 + $0x69]]
        %v1389 = vstv %s1388
        %v1390 = vmul.f32 %v1389, %v1380
        %v1391 = vmul.f32 %v1389, %v1381
        %v1392 = vadd.f32 %v1340, %v1390
        %v1393 = vadd.f32 %v1341, %v1391
        %s1394 = sld [smem:[#allocation4 + $0x6a]]
        %v1395 = vstv %s1394
        %v1396 = vmul.f32 %v1395, %v1380
        %v1397 = vmul.f32 %v1395, %v1381
        %v1398 = vadd.f32 %v1346, %v1396
        %v1399 = vadd.f32 %v1347, %v1397
        %s1400 = sld [smem:[#allocation4 + $0x6b]]
        %v1401 = vstv %s1400
        %v1402 = vmul.f32 %v1401, %v1380
        %v1403 = vmul.f32 %v1401, %v1381
        %v1404 = vadd.f32 %v1352, %v1402
        %v1405 = vadd.f32 %v1353, %v1403
        %s1406 = sld [smem:[#allocation4 + $0x6c]]
        %v1407 = vstv %s1406
        %v1408 = vmul.f32 %v1407, %v1380
        %v1409 = vmul.f32 %v1407, %v1381
        %v1410 = vadd.f32 %v1358, %v1408
        %v1411 = vadd.f32 %v1359, %v1409
        %s1412 = sld [smem:[#allocation4 + $0x6d]]
        %v1413 = vstv %s1412
        %v1414 = vmul.f32 %v1413, %v1380
        %v1415 = vmul.f32 %v1413, %v1381
        %v1416 = vadd.f32 %v1364, %v1414
        %v1417 = vadd.f32 %v1365, %v1415
        %s1418 = sld [smem:[#allocation4 + $0x6e]]
        %v1419 = vstv %s1418
        %v1420 = vmul.f32 %v1419, %v1380
        %v1421 = vmul.f32 %v1419, %v1381
        %v1422 = vadd.f32 %v1370, %v1420
        %v1423 = vadd.f32 %v1371, %v1421
        %s1424 = sld [smem:[#allocation4 + $0x6f]]
        %v1425 = vstv %s1424
        %v1426 = vmul.f32 %v1425, %v1380
        %v1427 = vmul.f32 %v1425, %v1381
        %v1428 = vadd.f32 %v1376, %v1426
        %v1429 = vadd.f32 %v1377, %v1427
        %s1430 = sadd.s32 %s1326, 48
        %s1431 = scalar_lea.vmem [#allocation2], %s1430
        %v1432 = vld [vmem:[%s1431] sm:$0xff]
        %v1433 = vld [vmem:[%s1431 + $0x8] sm:$0xff]
        %s1434 = sld [smem:[#allocation4 + $0x70]]
        %v1435 = vstv %s1434
        %v1436 = vmul.f32 %v1435, %v1432
        %v1437 = vmul.f32 %v1435, %v1433
        %v1438 = vadd.f32 %v1386, %v1436
        %v1439 = vadd.f32 %v1387, %v1437
        %s1440 = sld [smem:[#allocation4 + $0x71]]
        %v1441 = vstv %s1440
        %v1442 = vmul.f32 %v1441, %v1432
        %v1443 = vmul.f32 %v1441, %v1433
        %v1444 = vadd.f32 %v1392, %v1442
        %v1445 = vadd.f32 %v1393, %v1443
        %s1446 = sld [smem:[#allocation4 + $0x72]]
        %v1447 = vstv %s1446
        %v1448 = vmul.f32 %v1447, %v1432
        %v1449 = vmul.f32 %v1447, %v1433
        %v1450 = vadd.f32 %v1398, %v1448
        %v1451 = vadd.f32 %v1399, %v1449
        %s1452 = sld [smem:[#allocation4 + $0x73]]
        %v1453 = vstv %s1452
        %v1454 = vmul.f32 %v1453, %v1432
        %v1455 = vmul.f32 %v1453, %v1433
        %v1456 = vadd.f32 %v1404, %v1454
        %v1457 = vadd.f32 %v1405, %v1455
        %s1458 = sld [smem:[#allocation4 + $0x74]]
        %v1459 = vstv %s1458
        %v1460 = vmul.f32 %v1459, %v1432
        %v1461 = vmul.f32 %v1459, %v1433
        %v1462 = vadd.f32 %v1410, %v1460
        %v1463 = vadd.f32 %v1411, %v1461
        %s1464 = sld [smem:[#allocation4 + $0x75]]
        %v1465 = vstv %s1464
        %v1466 = vmul.f32 %v1465, %v1432
        %v1467 = vmul.f32 %v1465, %v1433
        %v1468 = vadd.f32 %v1416, %v1466
        %v1469 = vadd.f32 %v1417, %v1467
        %s1470 = sld [smem:[#allocation4 + $0x76]]
        %v1471 = vstv %s1470
        %v1472 = vmul.f32 %v1471, %v1432
        %v1473 = vmul.f32 %v1471, %v1433
        %v1474 = vadd.f32 %v1422, %v1472
        %v1475 = vadd.f32 %v1423, %v1473
        %s1476 = sld [smem:[#allocation4 + $0x77]]
        %v1477 = vstv %s1476
        %v1478 = vmul.f32 %v1477, %v1432
        %v1479 = vmul.f32 %v1477, %v1433
        %v1480 = vadd.f32 %v1428, %v1478
        %v1481 = vadd.f32 %v1429, %v1479
        %s1482 = sadd.s32 %s1326, 72
        %s1483 = scalar_lea.vmem [#allocation2], %s1482
        %v1484 = vld [vmem:[%s1483] sm:$0xff]
        %v1485 = vld [vmem:[%s1483 + $0x8] sm:$0xff]
        %s1486 = sld [smem:[#allocation4 + $0x78]]
        %v1487 = vstv %s1486
        %v1488 = vmul.f32 %v1487, %v1484
        %v1489 = vmul.f32 %v1487, %v1485
        %v1490 = vadd.f32 %v1438, %v1488
        %v1491 = vadd.f32 %v1439, %v1489
        %s1492 = sld [smem:[#allocation4 + $0x79]]
        %v1493 = vstv %s1492
        %v1494 = vmul.f32 %v1493, %v1484
        %v1495 = vmul.f32 %v1493, %v1485
        %v1496 = vadd.f32 %v1444, %v1494
        %v1497 = vadd.f32 %v1445, %v1495
        %s1498 = sld [smem:[#allocation4 + $0x7a]]
        %v1499 = vstv %s1498
        %v1500 = vmul.f32 %v1499, %v1484
        %v1501 = vmul.f32 %v1499, %v1485
        %v1502 = vadd.f32 %v1450, %v1500
        %v1503 = vadd.f32 %v1451, %v1501
        %s1504 = sld [smem:[#allocation4 + $0x7b]]
        %v1505 = vstv %s1504
        %v1506 = vmul.f32 %v1505, %v1484
        %v1507 = vmul.f32 %v1505, %v1485
        %v1508 = vadd.f32 %v1456, %v1506
        %v1509 = vadd.f32 %v1457, %v1507
        %s1510 = sld [smem:[#allocation4 + $0x7c]]
        %v1511 = vstv %s1510
        %v1512 = vmul.f32 %v1511, %v1484
        %v1513 = vmul.f32 %v1511, %v1485
        %v1514 = vadd.f32 %v1462, %v1512
        %v1515 = vadd.f32 %v1463, %v1513
        %s1516 = sld [smem:[#allocation4 + $0x7d]]
        %v1517 = vstv %s1516
        %v1518 = vmul.f32 %v1517, %v1484
        %v1519 = vmul.f32 %v1517, %v1485
        %v1520 = vadd.f32 %v1468, %v1518
        %v1521 = vadd.f32 %v1469, %v1519
        %s1522 = sld [smem:[#allocation4 + $0x7e]]
        %v1523 = vstv %s1522
        %v1524 = vmul.f32 %v1523, %v1484
        %v1525 = vmul.f32 %v1523, %v1485
        %v1526 = vadd.f32 %v1474, %v1524
        %v1527 = vadd.f32 %v1475, %v1525
        %s1528 = sld [smem:[#allocation4 + $0x7f]]
        %v1529 = vstv %s1528
        %v1530 = vmul.f32 %v1529, %v1484
        %v1531 = vmul.f32 %v1529, %v1485
        %v1532 = vadd.f32 %v1480, %v1530
        %v1533 = vadd.f32 %v1481, %v1531
        %s1534 = sld [smem:[#allocation4 + $0x80]]
        %v1535 = vstv %s1534
        %v1536 = vmul.f32 %v1535, %v1328
        %v1537 = vmul.f32 %v1535, %v1329
        %1540 = vrot.lane.b32.xlu0 %v1536, 127
        %v1541 = vpop.permute.xlu0 %1540
        %1542 = vrot.lane.b32.xlu0 %v1537, 127
        %v1543 = vpop.permute.xlu0 %1542
        %v1546 = vadd.f32 %v1490, %v1541
        %v1547 = vadd.f32 %v1491, %v1543
        %s1548 = sld [smem:[#allocation4 + $0x81]]
        %v1549 = vstv %s1548
        %v1550 = vmul.f32 %v1549, %v1328
        %v1551 = vmul.f32 %v1549, %v1329
        %1554 = vrot.lane.b32.xlu0 %v1550, 127
        %v1555 = vpop.permute.xlu0 %1554
        %1556 = vrot.lane.b32.xlu0 %v1551, 127
        %v1557 = vpop.permute.xlu0 %1556
        %v1560 = vadd.f32 %v1496, %v1555
        %v1561 = vadd.f32 %v1497, %v1557
        %s1562 = sld [smem:[#allocation4 + $0x82]]
        %v1563 = vstv %s1562
        %v1564 = vmul.f32 %v1563, %v1328
        %v1565 = vmul.f32 %v1563, %v1329
        %1568 = vrot.lane.b32.xlu0 %v1564, 127
        %v1569 = vpop.permute.xlu0 %1568
        %1570 = vrot.lane.b32.xlu0 %v1565, 127
        %v1571 = vpop.permute.xlu0 %1570
        %v1574 = vadd.f32 %v1502, %v1569
        %v1575 = vadd.f32 %v1503, %v1571
        %s1576 = sld [smem:[#allocation4 + $0x83]]
        %v1577 = vstv %s1576
        %v1578 = vmul.f32 %v1577, %v1328
        %v1579 = vmul.f32 %v1577, %v1329
        %1582 = vrot.lane.b32.xlu0 %v1578, 127
        %v1583 = vpop.permute.xlu0 %1582
        %1584 = vrot.lane.b32.xlu0 %v1579, 127
        %v1585 = vpop.permute.xlu0 %1584
        %v1588 = vadd.f32 %v1508, %v1583
        %v1589 = vadd.f32 %v1509, %v1585
        %s1590 = sld [smem:[#allocation4 + $0x84]]
        %v1591 = vstv %s1590
        %v1592 = vmul.f32 %v1591, %v1328
        %v1593 = vmul.f32 %v1591, %v1329
        %1596 = vrot.lane.b32.xlu0 %v1592, 127
        %v1597 = vpop.permute.xlu0 %1596
        %1598 = vrot.lane.b32.xlu0 %v1593, 127
        %v1599 = vpop.permute.xlu0 %1598
        %v1602 = vadd.f32 %v1514, %v1597
        %v1603 = vadd.f32 %v1515, %v1599
        %s1604 = sld [smem:[#allocation4 + $0x85]]
        %v1605 = vstv %s1604
        %v1606 = vmul.f32 %v1605, %v1328
        %v1607 = vmul.f32 %v1605, %v1329
        %1610 = vrot.lane.b32.xlu0 %v1606, 127
        %v1611 = vpop.permute.xlu0 %1610
        %1612 = vrot.lane.b32.xlu0 %v1607, 127
        %v1613 = vpop.permute.xlu0 %1612
        %v1616 = vadd.f32 %v1520, %v1611
        %v1617 = vadd.f32 %v1521, %v1613
        %s1618 = sld [smem:[#allocation4 + $0x86]]
        %v1619 = vstv %s1618
        %v1620 = vmul.f32 %v1619, %v1328
        %v1621 = vmul.f32 %v1619, %v1329
        %1624 = vrot.lane.b32.xlu0 %v1620, 127
        %v1625 = vpop.permute.xlu0 %1624
        %1626 = vrot.lane.b32.xlu0 %v1621, 127
        %v1627 = vpop.permute.xlu0 %1626
        %v1630 = vadd.f32 %v1526, %v1625
        %v1631 = vadd.f32 %v1527, %v1627
        %s1632 = sld [smem:[#allocation4 + $0x87]]
        %v1633 = vstv %s1632
        %v1634 = vmul.f32 %v1633, %v1328
        %v1635 = vmul.f32 %v1633, %v1329
        %1638 = vrot.lane.b32.xlu0 %v1634, 127
        %v1639 = vpop.permute.xlu0 %1638
        %1640 = vrot.lane.b32.xlu0 %v1635, 127
        %v1641 = vpop.permute.xlu0 %1640
        %v1644 = vadd.f32 %v1532, %v1639
        %v1645 = vadd.f32 %v1533, %v1641
        %s1646 = sld [smem:[#allocation4 + $0x88]]
        %v1647 = vstv %s1646
        %v1648 = vmul.f32 %v1647, %v1380
        %v1649 = vmul.f32 %v1647, %v1381
        %1652 = vrot.lane.b32.xlu0 %v1648, 127
        %v1653 = vpop.permute.xlu0 %1652
        %1654 = vrot.lane.b32.xlu0 %v1649, 127
        %v1655 = vpop.permute.xlu0 %1654
        %v1658 = vadd.f32 %v1546, %v1653
        %v1659 = vadd.f32 %v1547, %v1655
        %s1660 = sld [smem:[#allocation4 + $0x89]]
        %v1661 = vstv %s1660
        %v1662 = vmul.f32 %v1661, %v1380
        %v1663 = vmul.f32 %v1661, %v1381
        %1666 = vrot.lane.b32.xlu0 %v1662, 127
        %v1667 = vpop.permute.xlu0 %1666
        %1668 = vrot.lane.b32.xlu0 %v1663, 127
        %v1669 = vpop.permute.xlu0 %1668
        %v1672 = vadd.f32 %v1560, %v1667
        %v1673 = vadd.f32 %v1561, %v1669
        %s1674 = sld [smem:[#allocation4 + $0x8a]]
        %v1675 = vstv %s1674
        %v1676 = vmul.f32 %v1675, %v1380
        %v1677 = vmul.f32 %v1675, %v1381
        %1680 = vrot.lane.b32.xlu0 %v1676, 127
        %v1681 = vpop.permute.xlu0 %1680
        %1682 = vrot.lane.b32.xlu0 %v1677, 127
        %v1683 = vpop.permute.xlu0 %1682
        %v1686 = vadd.f32 %v1574, %v1681
        %v1687 = vadd.f32 %v1575, %v1683
        %s1688 = sld [smem:[#allocation4 + $0x8b]]
        %v1689 = vstv %s1688
        %v1690 = vmul.f32 %v1689, %v1380
        %v1691 = vmul.f32 %v1689, %v1381
        %1694 = vrot.lane.b32.xlu0 %v1690, 127
        %v1695 = vpop.permute.xlu0 %1694
        %1696 = vrot.lane.b32.xlu0 %v1691, 127
        %v1697 = vpop.permute.xlu0 %1696
        %v1700 = vadd.f32 %v1588, %v1695
        %v1701 = vadd.f32 %v1589, %v1697
        %s1702 = sld [smem:[#allocation4 + $0x8c]]
        %v1703 = vstv %s1702
        %v1704 = vmul.f32 %v1703, %v1380
        %v1705 = vmul.f32 %v1703, %v1381
        %1708 = vrot.lane.b32.xlu0 %v1704, 127
        %v1709 = vpop.permute.xlu0 %1708
        %1710 = vrot.lane.b32.xlu0 %v1705, 127
        %v1711 = vpop.permute.xlu0 %1710
        %v1714 = vadd.f32 %v1602, %v1709
        %v1715 = vadd.f32 %v1603, %v1711
        %s1716 = sld [smem:[#allocation4 + $0x8d]]
        %v1717 = vstv %s1716
        %v1718 = vmul.f32 %v1717, %v1380
        %v1719 = vmul.f32 %v1717, %v1381
        %1722 = vrot.lane.b32.xlu0 %v1718, 127
        %v1723 = vpop.permute.xlu0 %1722
        %1724 = vrot.lane.b32.xlu0 %v1719, 127
        %v1725 = vpop.permute.xlu0 %1724
        %v1728 = vadd.f32 %v1616, %v1723
        %v1729 = vadd.f32 %v1617, %v1725
        %s1730 = sld [smem:[#allocation4 + $0x8e]]
        %v1731 = vstv %s1730
        %v1732 = vmul.f32 %v1731, %v1380
        %v1733 = vmul.f32 %v1731, %v1381
        %1736 = vrot.lane.b32.xlu0 %v1732, 127
        %v1737 = vpop.permute.xlu0 %1736
        %1738 = vrot.lane.b32.xlu0 %v1733, 127
        %v1739 = vpop.permute.xlu0 %1738
        %v1742 = vadd.f32 %v1630, %v1737
        %v1743 = vadd.f32 %v1631, %v1739
        %s1744 = sld [smem:[#allocation4 + $0x8f]]
        %v1745 = vstv %s1744
        %v1746 = vmul.f32 %v1745, %v1380
        %v1747 = vmul.f32 %v1745, %v1381
        %1750 = vrot.lane.b32.xlu0 %v1746, 127
        %v1751 = vpop.permute.xlu0 %1750
        %1752 = vrot.lane.b32.xlu0 %v1747, 127
        %v1753 = vpop.permute.xlu0 %1752
        %v1756 = vadd.f32 %v1644, %v1751
        %v1757 = vadd.f32 %v1645, %v1753
        %s1758 = sld [smem:[#allocation4 + $0x90]]
        %v1759 = vstv %s1758
        %v1760 = vmul.f32 %v1759, %v1432
        %v1761 = vmul.f32 %v1759, %v1433
        %1764 = vrot.lane.b32.xlu0 %v1760, 127
        %v1765 = vpop.permute.xlu0 %1764
        %1766 = vrot.lane.b32.xlu0 %v1761, 127
        %v1767 = vpop.permute.xlu0 %1766
        %v1770 = vadd.f32 %v1658, %v1765
        %v1771 = vadd.f32 %v1659, %v1767
        %s1772 = sld [smem:[#allocation4 + $0x91]]
        %v1773 = vstv %s1772
        %v1774 = vmul.f32 %v1773, %v1432
        %v1775 = vmul.f32 %v1773, %v1433
        %1778 = vrot.lane.b32.xlu0 %v1774, 127
        %v1779 = vpop.permute.xlu0 %1778
        %1780 = vrot.lane.b32.xlu0 %v1775, 127
        %v1781 = vpop.permute.xlu0 %1780
        %v1784 = vadd.f32 %v1672, %v1779
        %v1785 = vadd.f32 %v1673, %v1781
        %s1786 = sld [smem:[#allocation4 + $0x92]]
        %v1787 = vstv %s1786
        %v1788 = vmul.f32 %v1787, %v1432
        %v1789 = vmul.f32 %v1787, %v1433
        %1792 = vrot.lane.b32.xlu0 %v1788, 127
        %v1793 = vpop.permute.xlu0 %1792
        %1794 = vrot.lane.b32.xlu0 %v1789, 127
        %v1795 = vpop.permute.xlu0 %1794
        %v1798 = vadd.f32 %v1686, %v1793
        %v1799 = vadd.f32 %v1687, %v1795
        %s1800 = sld [smem:[#allocation4 + $0x93]]
        %v1801 = vstv %s1800
        %v1802 = vmul.f32 %v1801, %v1432
        %v1803 = vmul.f32 %v1801, %v1433
        %1806 = vrot.lane.b32.xlu0 %v1802, 127
        %v1807 = vpop.permute.xlu0 %1806
        %1808 = vrot.lane.b32.xlu0 %v1803, 127
        %v1809 = vpop.permute.xlu0 %1808
        %v1812 = vadd.f32 %v1700, %v1807
        %v1813 = vadd.f32 %v1701, %v1809
        %s1814 = sld [smem:[#allocation4 + $0x94]]
        %v1815 = vstv %s1814
        %v1816 = vmul.f32 %v1815, %v1432
        %v1817 = vmul.f32 %v1815, %v1433
        %1820 = vrot.lane.b32.xlu0 %v1816, 127
        %v1821 = vpop.permute.xlu0 %1820
        %1822 = vrot.lane.b32.xlu0 %v1817, 127
        %v1823 = vpop.permute.xlu0 %1822
        %v1826 = vadd.f32 %v1714, %v1821
        %v1827 = vadd.f32 %v1715, %v1823
        %s1828 = sld [smem:[#allocation4 + $0x95]]
        %v1829 = vstv %s1828
        %v1830 = vmul.f32 %v1829, %v1432
        %v1831 = vmul.f32 %v1829, %v1433
        %1834 = vrot.lane.b32.xlu0 %v1830, 127
        %v1835 = vpop.permute.xlu0 %1834
        %1836 = vrot.lane.b32.xlu0 %v1831, 127
        %v1837 = vpop.permute.xlu0 %1836
        %v1840 = vadd.f32 %v1728, %v1835
        %v1841 = vadd.f32 %v1729, %v1837
        %s1842 = sld [smem:[#allocation4 + $0x96]]
        %v1843 = vstv %s1842
        %v1844 = vmul.f32 %v1843, %v1432
        %v1845 = vmul.f32 %v1843, %v1433
        %1848 = vrot.lane.b32.xlu0 %v1844, 127
        %v1849 = vpop.permute.xlu0 %1848
        %1850 = vrot.lane.b32.xlu0 %v1845, 127
        %v1851 = vpop.permute.xlu0 %1850
        %v1854 = vadd.f32 %v1742, %v1849
        %v1855 = vadd.f32 %v1743, %v1851
        %s1856 = sld [smem:[#allocation4 + $0x97]]
        %v1857 = vstv %s1856
        %v1858 = vmul.f32 %v1857, %v1432
        %v1859 = vmul.f32 %v1857, %v1433
        %1862 = vrot.lane.b32.xlu0 %v1858, 127
        %v1863 = vpop.permute.xlu0 %1862
        %1864 = vrot.lane.b32.xlu0 %v1859, 127
        %v1865 = vpop.permute.xlu0 %1864
        %v1868 = vadd.f32 %v1756, %v1863
        %v1869 = vadd.f32 %v1757, %v1865
        %s1870 = sld [smem:[#allocation4 + $0x98]]
        %v1871 = vstv %s1870
        %v1872 = vmul.f32 %v1871, %v1484
        %v1873 = vmul.f32 %v1871, %v1485
        %1876 = vrot.lane.b32.xlu0 %v1872, 127
        %v1877 = vpop.permute.xlu0 %1876
        %1878 = vrot.lane.b32.xlu0 %v1873, 127
        %v1879 = vpop.permute.xlu0 %1878
        %v1882 = vadd.f32 %v1770, %v1877
        %v1883 = vadd.f32 %v1771, %v1879
        %s1884 = sld [smem:[#allocation4 + $0x99]]
        %v1885 = vstv %s1884
        %v1886 = vmul.f32 %v1885, %v1484
        %v1887 = vmul.f32 %v1885, %v1485
        %1890 = vrot.lane.b32.xlu0 %v1886, 127
        %v1891 = vpop.permute.xlu0 %1890
        %1892 = vrot.lane.b32.xlu0 %v1887, 127
        %v1893 = vpop.permute.xlu0 %1892
        %v1896 = vadd.f32 %v1784, %v1891
        %v1897 = vadd.f32 %v1785, %v1893
        %s1898 = sld [smem:[#allocation4 + $0x9a]]
        %v1899 = vstv %s1898
        %v1900 = vmul.f32 %v1899, %v1484
        %v1901 = vmul.f32 %v1899, %v1485
        %1904 = vrot.lane.b32.xlu0 %v1900, 127
        %v1905 = vpop.permute.xlu0 %1904
        %1906 = vrot.lane.b32.xlu0 %v1901, 127
        %v1907 = vpop.permute.xlu0 %1906
        %v1910 = vadd.f32 %v1798, %v1905
        %v1911 = vadd.f32 %v1799, %v1907
        %s1912 = sld [smem:[#allocation4 + $0x9b]]
        %v1913 = vstv %s1912
        %v1914 = vmul.f32 %v1913, %v1484
        %v1915 = vmul.f32 %v1913, %v1485
        %1918 = vrot.lane.b32.xlu0 %v1914, 127
        %v1919 = vpop.permute.xlu0 %1918
        %1920 = vrot.lane.b32.xlu0 %v1915, 127
        %v1921 = vpop.permute.xlu0 %1920
        %v1924 = vadd.f32 %v1812, %v1919
        %v1925 = vadd.f32 %v1813, %v1921
        %s1926 = sld [smem:[#allocation4 + $0x9c]]
        %v1927 = vstv %s1926
        %v1928 = vmul.f32 %v1927, %v1484
        %v1929 = vmul.f32 %v1927, %v1485
        %1932 = vrot.lane.b32.xlu0 %v1928, 127
        %v1933 = vpop.permute.xlu0 %1932
        %1934 = vrot.lane.b32.xlu0 %v1929, 127
        %v1935 = vpop.permute.xlu0 %1934
        %v1938 = vadd.f32 %v1826, %v1933
        %v1939 = vadd.f32 %v1827, %v1935
        %s1940 = sld [smem:[#allocation4 + $0x9d]]
        %v1941 = vstv %s1940
        %v1942 = vmul.f32 %v1941, %v1484
        %v1943 = vmul.f32 %v1941, %v1485
        %1946 = vrot.lane.b32.xlu0 %v1942, 127
        %v1947 = vpop.permute.xlu0 %1946
        %1948 = vrot.lane.b32.xlu0 %v1943, 127
        %v1949 = vpop.permute.xlu0 %1948
        %v1952 = vadd.f32 %v1840, %v1947
        %v1953 = vadd.f32 %v1841, %v1949
        %s1954 = sld [smem:[#allocation4 + $0x9e]]
        %v1955 = vstv %s1954
        %v1956 = vmul.f32 %v1955, %v1484
        %v1957 = vmul.f32 %v1955, %v1485
        %1960 = vrot.lane.b32.xlu0 %v1956, 127
        %v1961 = vpop.permute.xlu0 %1960
        %1962 = vrot.lane.b32.xlu0 %v1957, 127
        %v1963 = vpop.permute.xlu0 %1962
        %v1966 = vadd.f32 %v1854, %v1961
        %v1967 = vadd.f32 %v1855, %v1963
        %s1968 = sld [smem:[#allocation4 + $0x9f]]
        %v1969 = vstv %s1968
        %v1970 = vmul.f32 %v1969, %v1484
        %v1971 = vmul.f32 %v1969, %v1485
        %1974 = vrot.lane.b32.xlu0 %v1970, 127
        %v1975 = vpop.permute.xlu0 %1974
        %1976 = vrot.lane.b32.xlu0 %v1971, 127
        %v1977 = vpop.permute.xlu0 %1976
        %v1980 = vadd.f32 %v1868, %v1975
        %v1981 = vadd.f32 %v1869, %v1977
        %s1982 = sld [smem:[#allocation4 + $0xa0]]
        %v1983 = vstv %s1982
        %v1984 = vmul.f32 %v1983, %v1328
        %v1985 = vmul.f32 %v1983, %v1329
        %1988 = vrot.lane.b32.xlu0 %v1984, 126
        %v1989 = vpop.permute.xlu0 %1988
        %1990 = vrot.lane.b32.xlu0 %v1985, 126
        %v1991 = vpop.permute.xlu0 %1990
        %v1994 = vadd.f32 %v1882, %v1989
        %v1995 = vadd.f32 %v1883, %v1991
        %s1996 = sld [smem:[#allocation4 + $0xa1]]
        %v1997 = vstv %s1996
        %v1998 = vmul.f32 %v1997, %v1328
        %v1999 = vmul.f32 %v1997, %v1329
        %2002 = vrot.lane.b32.xlu0 %v1998, 126
        %v2003 = vpop.permute.xlu0 %2002
        %2004 = vrot.lane.b32.xlu0 %v1999, 126
        %v2005 = vpop.permute.xlu0 %2004
        %v2008 = vadd.f32 %v1896, %v2003
        %v2009 = vadd.f32 %v1897, %v2005
        %s2010 = sld [smem:[#allocation4 + $0xa2]]
        %v2011 = vstv %s2010
        %v2012 = vmul.f32 %v2011, %v1328
        %v2013 = vmul.f32 %v2011, %v1329
        %2016 = vrot.lane.b32.xlu0 %v2012, 126
        %v2017 = vpop.permute.xlu0 %2016
        %2018 = vrot.lane.b32.xlu0 %v2013, 126
        %v2019 = vpop.permute.xlu0 %2018
        %v2022 = vadd.f32 %v1910, %v2017
        %v2023 = vadd.f32 %v1911, %v2019
        %s2024 = sld [smem:[#allocation4 + $0xa3]]
        %v2025 = vstv %s2024
        %v2026 = vmul.f32 %v2025, %v1328
        %v2027 = vmul.f32 %v2025, %v1329
        %2030 = vrot.lane.b32.xlu0 %v2026, 126
        %v2031 = vpop.permute.xlu0 %2030
        %2032 = vrot.lane.b32.xlu0 %v2027, 126
        %v2033 = vpop.permute.xlu0 %2032
        %v2036 = vadd.f32 %v1924, %v2031
        %v2037 = vadd.f32 %v1925, %v2033
        %s2038 = sld [smem:[#allocation4 + $0xa4]]
        %v2039 = vstv %s2038
        %v2040 = vmul.f32 %v2039, %v1328
        %v2041 = vmul.f32 %v2039, %v1329
        %2044 = vrot.lane.b32.xlu0 %v2040, 126
        %v2045 = vpop.permute.xlu0 %2044
        %2046 = vrot.lane.b32.xlu0 %v2041, 126
        %v2047 = vpop.permute.xlu0 %2046
        %v2050 = vadd.f32 %v1938, %v2045
        %v2051 = vadd.f32 %v1939, %v2047
        %s2052 = sld [smem:[#allocation4 + $0xa5]]
        %v2053 = vstv %s2052
        %v2054 = vmul.f32 %v2053, %v1328
        %v2055 = vmul.f32 %v2053, %v1329
        %2058 = vrot.lane.b32.xlu0 %v2054, 126
        %v2059 = vpop.permute.xlu0 %2058
        %2060 = vrot.lane.b32.xlu0 %v2055, 126
        %v2061 = vpop.permute.xlu0 %2060
        %v2064 = vadd.f32 %v1952, %v2059
        %v2065 = vadd.f32 %v1953, %v2061
        %s2066 = sld [smem:[#allocation4 + $0xa6]]
        %v2067 = vstv %s2066
        %v2068 = vmul.f32 %v2067, %v1328
        %v2069 = vmul.f32 %v2067, %v1329
        %2072 = vrot.lane.b32.xlu0 %v2068, 126
        %v2073 = vpop.permute.xlu0 %2072
        %2074 = vrot.lane.b32.xlu0 %v2069, 126
        %v2075 = vpop.permute.xlu0 %2074
        %v2078 = vadd.f32 %v1966, %v2073
        %v2079 = vadd.f32 %v1967, %v2075
        %s2080 = sld [smem:[#allocation4 + $0xa7]]
        %v2081 = vstv %s2080
        %v2082 = vmul.f32 %v2081, %v1328
        %v2083 = vmul.f32 %v2081, %v1329
        %2086 = vrot.lane.b32.xlu0 %v2082, 126
        %v2087 = vpop.permute.xlu0 %2086
        %2088 = vrot.lane.b32.xlu0 %v2083, 126
        %v2089 = vpop.permute.xlu0 %2088
        %v2092 = vadd.f32 %v1980, %v2087
        %v2093 = vadd.f32 %v1981, %v2089
        %s2094 = sld [smem:[#allocation4 + $0xa8]]
        %v2095 = vstv %s2094
        %v2096 = vmul.f32 %v2095, %v1380
        %v2097 = vmul.f32 %v2095, %v1381
        %2100 = vrot.lane.b32.xlu0 %v2096, 126
        %v2101 = vpop.permute.xlu0 %2100
        %2102 = vrot.lane.b32.xlu0 %v2097, 126
        %v2103 = vpop.permute.xlu0 %2102
        %v2106 = vadd.f32 %v1994, %v2101
        %v2107 = vadd.f32 %v1995, %v2103
        %s2108 = sld [smem:[#allocation4 + $0xa9]]
        %v2109 = vstv %s2108
        %v2110 = vmul.f32 %v2109, %v1380
        %v2111 = vmul.f32 %v2109, %v1381
        %2114 = vrot.lane.b32.xlu0 %v2110, 126
        %v2115 = vpop.permute.xlu0 %2114
        %2116 = vrot.lane.b32.xlu0 %v2111, 126
        %v2117 = vpop.permute.xlu0 %2116
        %v2120 = vadd.f32 %v2008, %v2115
        %v2121 = vadd.f32 %v2009, %v2117
        %s2122 = sld [smem:[#allocation4 + $0xaa]]
        %v2123 = vstv %s2122
        %v2124 = vmul.f32 %v2123, %v1380
        %v2125 = vmul.f32 %v2123, %v1381
        %2128 = vrot.lane.b32.xlu0 %v2124, 126
        %v2129 = vpop.permute.xlu0 %2128
        %2130 = vrot.lane.b32.xlu0 %v2125, 126
        %v2131 = vpop.permute.xlu0 %2130
        %v2134 = vadd.f32 %v2022, %v2129
        %v2135 = vadd.f32 %v2023, %v2131
        %s2136 = sld [smem:[#allocation4 + $0xab]]
        %v2137 = vstv %s2136
        %v2138 = vmul.f32 %v2137, %v1380
        %v2139 = vmul.f32 %v2137, %v1381
        %2142 = vrot.lane.b32.xlu0 %v2138, 126
        %v2143 = vpop.permute.xlu0 %2142
        %2144 = vrot.lane.b32.xlu0 %v2139, 126
        %v2145 = vpop.permute.xlu0 %2144
        %v2148 = vadd.f32 %v2036, %v2143
        %v2149 = vadd.f32 %v2037, %v2145
        %s2150 = sld [smem:[#allocation4 + $0xac]]
        %v2151 = vstv %s2150
        %v2152 = vmul.f32 %v2151, %v1380
        %v2153 = vmul.f32 %v2151, %v1381
        %2156 = vrot.lane.b32.xlu0 %v2152, 126
        %v2157 = vpop.permute.xlu0 %2156
        %2158 = vrot.lane.b32.xlu0 %v2153, 126
        %v2159 = vpop.permute.xlu0 %2158
        %v2162 = vadd.f32 %v2050, %v2157
        %v2163 = vadd.f32 %v2051, %v2159
        %s2164 = sld [smem:[#allocation4 + $0xad]]
        %v2165 = vstv %s2164
        %v2166 = vmul.f32 %v2165, %v1380
        %v2167 = vmul.f32 %v2165, %v1381
        %2170 = vrot.lane.b32.xlu0 %v2166, 126
        %v2171 = vpop.permute.xlu0 %2170
        %2172 = vrot.lane.b32.xlu0 %v2167, 126
        %v2173 = vpop.permute.xlu0 %2172
        %v2176 = vadd.f32 %v2064, %v2171
        %v2177 = vadd.f32 %v2065, %v2173
        %s2178 = sld [smem:[#allocation4 + $0xae]]
        %v2179 = vstv %s2178
        %v2180 = vmul.f32 %v2179, %v1380
        %v2181 = vmul.f32 %v2179, %v1381
        %2184 = vrot.lane.b32.xlu0 %v2180, 126
        %v2185 = vpop.permute.xlu0 %2184
        %2186 = vrot.lane.b32.xlu0 %v2181, 126
        %v2187 = vpop.permute.xlu0 %2186
        %v2190 = vadd.f32 %v2078, %v2185
        %v2191 = vadd.f32 %v2079, %v2187
        %s2192 = sld [smem:[#allocation4 + $0xaf]]
        %v2193 = vstv %s2192
        %v2194 = vmul.f32 %v2193, %v1380
        %v2195 = vmul.f32 %v2193, %v1381
        %2198 = vrot.lane.b32.xlu0 %v2194, 126
        %v2199 = vpop.permute.xlu0 %2198
        %2200 = vrot.lane.b32.xlu0 %v2195, 126
        %v2201 = vpop.permute.xlu0 %2200
        %v2204 = vadd.f32 %v2092, %v2199
        %v2205 = vadd.f32 %v2093, %v2201
        %s2206 = sld [smem:[#allocation4 + $0xb0]]
        %v2207 = vstv %s2206
        %v2208 = vmul.f32 %v2207, %v1432
        %v2209 = vmul.f32 %v2207, %v1433
        %2212 = vrot.lane.b32.xlu0 %v2208, 126
        %v2213 = vpop.permute.xlu0 %2212
        %2214 = vrot.lane.b32.xlu0 %v2209, 126
        %v2215 = vpop.permute.xlu0 %2214
        %v2218 = vadd.f32 %v2106, %v2213
        %v2219 = vadd.f32 %v2107, %v2215
        %s2220 = sld [smem:[#allocation4 + $0xb1]]
        %v2221 = vstv %s2220
        %v2222 = vmul.f32 %v2221, %v1432
        %v2223 = vmul.f32 %v2221, %v1433
        %2226 = vrot.lane.b32.xlu0 %v2222, 126
        %v2227 = vpop.permute.xlu0 %2226
        %2228 = vrot.lane.b32.xlu0 %v2223, 126
        %v2229 = vpop.permute.xlu0 %2228
        %v2232 = vadd.f32 %v2120, %v2227
        %v2233 = vadd.f32 %v2121, %v2229
        %s2234 = sld [smem:[#allocation4 + $0xb2]]
        %v2235 = vstv %s2234
        %v2236 = vmul.f32 %v2235, %v1432
        %v2237 = vmul.f32 %v2235, %v1433
        %2240 = vrot.lane.b32.xlu0 %v2236, 126
        %v2241 = vpop.permute.xlu0 %2240
        %2242 = vrot.lane.b32.xlu0 %v2237, 126
        %v2243 = vpop.permute.xlu0 %2242
        %v2246 = vadd.f32 %v2134, %v2241
        %v2247 = vadd.f32 %v2135, %v2243
        %s2248 = sld [smem:[#allocation4 + $0xb3]]
        %v2249 = vstv %s2248
        %v2250 = vmul.f32 %v2249, %v1432
        %v2251 = vmul.f32 %v2249, %v1433
        %2254 = vrot.lane.b32.xlu0 %v2250, 126
        %v2255 = vpop.permute.xlu0 %2254
        %2256 = vrot.lane.b32.xlu0 %v2251, 126
        %v2257 = vpop.permute.xlu0 %2256
        %v2260 = vadd.f32 %v2148, %v2255
        %v2261 = vadd.f32 %v2149, %v2257
        %s2262 = sld [smem:[#allocation4 + $0xb4]]
        %v2263 = vstv %s2262
        %v2264 = vmul.f32 %v2263, %v1432
        %v2265 = vmul.f32 %v2263, %v1433
        %2268 = vrot.lane.b32.xlu0 %v2264, 126
        %v2269 = vpop.permute.xlu0 %2268
        %2270 = vrot.lane.b32.xlu0 %v2265, 126
        %v2271 = vpop.permute.xlu0 %2270
        %v2274 = vadd.f32 %v2162, %v2269
        %v2275 = vadd.f32 %v2163, %v2271
        %s2276 = sld [smem:[#allocation4 + $0xb5]]
        %v2277 = vstv %s2276
        %v2278 = vmul.f32 %v2277, %v1432
        %v2279 = vmul.f32 %v2277, %v1433
        %2282 = vrot.lane.b32.xlu0 %v2278, 126
        %v2283 = vpop.permute.xlu0 %2282
        %2284 = vrot.lane.b32.xlu0 %v2279, 126
        %v2285 = vpop.permute.xlu0 %2284
        %v2288 = vadd.f32 %v2176, %v2283
        %v2289 = vadd.f32 %v2177, %v2285
        %s2290 = sld [smem:[#allocation4 + $0xb6]]
        %v2291 = vstv %s2290
        %v2292 = vmul.f32 %v2291, %v1432
        %v2293 = vmul.f32 %v2291, %v1433
        %2296 = vrot.lane.b32.xlu0 %v2292, 126
        %v2297 = vpop.permute.xlu0 %2296
        %2298 = vrot.lane.b32.xlu0 %v2293, 126
        %v2299 = vpop.permute.xlu0 %2298
        %v2302 = vadd.f32 %v2190, %v2297
        %v2303 = vadd.f32 %v2191, %v2299
        %s2304 = sld [smem:[#allocation4 + $0xb7]]
        %v2305 = vstv %s2304
        %v2306 = vmul.f32 %v2305, %v1432
        %v2307 = vmul.f32 %v2305, %v1433
        %2310 = vrot.lane.b32.xlu0 %v2306, 126
        %v2311 = vpop.permute.xlu0 %2310
        %2312 = vrot.lane.b32.xlu0 %v2307, 126
        %v2313 = vpop.permute.xlu0 %2312
        %v2316 = vadd.f32 %v2204, %v2311
        %v2317 = vadd.f32 %v2205, %v2313
        %s2318 = sld [smem:[#allocation4 + $0xb8]]
        %v2319 = vstv %s2318
        %v2320 = vmul.f32 %v2319, %v1484
        %v2321 = vmul.f32 %v2319, %v1485
        %2324 = vrot.lane.b32.xlu0 %v2320, 126
        %v2325 = vpop.permute.xlu0 %2324
        %2326 = vrot.lane.b32.xlu0 %v2321, 126
        %v2327 = vpop.permute.xlu0 %2326
        %v2330 = vadd.f32 %v2218, %v2325
        %v2331 = vadd.f32 %v2219, %v2327
        %s2332 = sld [smem:[#allocation4 + $0xb9]]
        %v2333 = vstv %s2332
        %v2334 = vmul.f32 %v2333, %v1484
        %v2335 = vmul.f32 %v2333, %v1485
        %2338 = vrot.lane.b32.xlu0 %v2334, 126
        %v2339 = vpop.permute.xlu0 %2338
        %2340 = vrot.lane.b32.xlu0 %v2335, 126
        %v2341 = vpop.permute.xlu0 %2340
        %v2344 = vadd.f32 %v2232, %v2339
        %v2345 = vadd.f32 %v2233, %v2341
        %s2346 = sld [smem:[#allocation4 + $0xba]]
        %v2347 = vstv %s2346
        %v2348 = vmul.f32 %v2347, %v1484
        %v2349 = vmul.f32 %v2347, %v1485
        %2352 = vrot.lane.b32.xlu0 %v2348, 126
        %v2353 = vpop.permute.xlu0 %2352
        %2354 = vrot.lane.b32.xlu0 %v2349, 126
        %v2355 = vpop.permute.xlu0 %2354
        %v2358 = vadd.f32 %v2246, %v2353
        %v2359 = vadd.f32 %v2247, %v2355
        %s2360 = sld [smem:[#allocation4 + $0xbb]]
        %v2361 = vstv %s2360
        %v2362 = vmul.f32 %v2361, %v1484
        %v2363 = vmul.f32 %v2361, %v1485
        %2366 = vrot.lane.b32.xlu0 %v2362, 126
        %v2367 = vpop.permute.xlu0 %2366
        %2368 = vrot.lane.b32.xlu0 %v2363, 126
        %v2369 = vpop.permute.xlu0 %2368
        %v2372 = vadd.f32 %v2260, %v2367
        %v2373 = vadd.f32 %v2261, %v2369
        %s2374 = sld [smem:[#allocation4 + $0xbc]]
        %v2375 = vstv %s2374
        %v2376 = vmul.f32 %v2375, %v1484
        %v2377 = vmul.f32 %v2375, %v1485
        %2380 = vrot.lane.b32.xlu0 %v2376, 126
        %v2381 = vpop.permute.xlu0 %2380
        %2382 = vrot.lane.b32.xlu0 %v2377, 126
        %v2383 = vpop.permute.xlu0 %2382
        %v2386 = vadd.f32 %v2274, %v2381
        %v2387 = vadd.f32 %v2275, %v2383
        %s2388 = sld [smem:[#allocation4 + $0xbd]]
        %v2389 = vstv %s2388
        %v2390 = vmul.f32 %v2389, %v1484
        %v2391 = vmul.f32 %v2389, %v1485
        %2394 = vrot.lane.b32.xlu0 %v2390, 126
        %v2395 = vpop.permute.xlu0 %2394
        %2396 = vrot.lane.b32.xlu0 %v2391, 126
        %v2397 = vpop.permute.xlu0 %2396
        %v2400 = vadd.f32 %v2288, %v2395
        %v2401 = vadd.f32 %v2289, %v2397
        %s2402 = sld [smem:[#allocation4 + $0xbe]]
        %v2403 = vstv %s2402
        %v2404 = vmul.f32 %v2403, %v1484
        %v2405 = vmul.f32 %v2403, %v1485
        %2408 = vrot.lane.b32.xlu0 %v2404, 126
        %v2409 = vpop.permute.xlu0 %2408
        %2410 = vrot.lane.b32.xlu0 %v2405, 126
        %v2411 = vpop.permute.xlu0 %2410
        %v2414 = vadd.f32 %v2302, %v2409
        %v2415 = vadd.f32 %v2303, %v2411
        %s2416 = sld [smem:[#allocation4 + $0xbf]]
        %v2417 = vstv %s2416
        %v2418 = vmul.f32 %v2417, %v1484
        %v2419 = vmul.f32 %v2417, %v1485
        %2422 = vrot.lane.b32.xlu0 %v2418, 126
        %v2423 = vpop.permute.xlu0 %2422
        %2424 = vrot.lane.b32.xlu0 %v2419, 126
        %v2425 = vpop.permute.xlu0 %2424
        %v2428 = vadd.f32 %v2316, %v2423
        %v2429 = vadd.f32 %v2317, %v2425
        %s2430 = sadd.s32 %s222, 2
        %s2431 = scalar_lea.vmem [#allocation2], %s2430
        %v2432 = vld [vmem:[%s2431] sm:$0xff]
        %v2433 = vld [vmem:[%s2431 + $0x8] sm:$0xff]
        %s2434 = sld [smem:[#allocation4 + $0xc0]]
        %v2435 = vstv %s2434
        %v2436 = vmul.f32 %v2435, %v2432
        %v2437 = vmul.f32 %v2435, %v2433
        %v2438 = vadd.f32 %v2330, %v2436
        %v2439 = vadd.f32 %v2331, %v2437
        %s2440 = sld [smem:[#allocation4 + $0xc1]]
        %v2441 = vstv %s2440
        %v2442 = vmul.f32 %v2441, %v2432
        %v2443 = vmul.f32 %v2441, %v2433
        %v2444 = vadd.f32 %v2344, %v2442
        %v2445 = vadd.f32 %v2345, %v2443
        %s2446 = sld [smem:[#allocation4 + $0xc2]]
        %v2447 = vstv %s2446
        %v2448 = vmul.f32 %v2447, %v2432
        %v2449 = vmul.f32 %v2447, %v2433
        %v2450 = vadd.f32 %v2358, %v2448
        %v2451 = vadd.f32 %v2359, %v2449
        %s2452 = sld [smem:[#allocation4 + $0xc3]]
        %v2453 = vstv %s2452
        %v2454 = vmul.f32 %v2453, %v2432
        %v2455 = vmul.f32 %v2453, %v2433
        %v2456 = vadd.f32 %v2372, %v2454
        %v2457 = vadd.f32 %v2373, %v2455
        %s2458 = sld [smem:[#allocation4 + $0xc4]]
        %v2459 = vstv %s2458
        %v2460 = vmul.f32 %v2459, %v2432
        %v2461 = vmul.f32 %v2459, %v2433
        %v2462 = vadd.f32 %v2386, %v2460
        %v2463 = vadd.f32 %v2387, %v2461
        %s2464 = sld [smem:[#allocation4 + $0xc5]]
        %v2465 = vstv %s2464
        %v2466 = vmul.f32 %v2465, %v2432
        %v2467 = vmul.f32 %v2465, %v2433
        %v2468 = vadd.f32 %v2400, %v2466
        %v2469 = vadd.f32 %v2401, %v2467
        %s2470 = sld [smem:[#allocation4 + $0xc6]]
        %v2471 = vstv %s2470
        %v2472 = vmul.f32 %v2471, %v2432
        %v2473 = vmul.f32 %v2471, %v2433
        %v2474 = vadd.f32 %v2414, %v2472
        %v2475 = vadd.f32 %v2415, %v2473
        %s2476 = sld [smem:[#allocation4 + $0xc7]]
        %v2477 = vstv %s2476
        %v2478 = vmul.f32 %v2477, %v2432
        %v2479 = vmul.f32 %v2477, %v2433
        %v2480 = vadd.f32 %v2428, %v2478
        %v2481 = vadd.f32 %v2429, %v2479
        %s2482 = sadd.s32 %s2430, 24
        %s2483 = scalar_lea.vmem [#allocation2], %s2482
        %v2484 = vld [vmem:[%s2483] sm:$0xff]
        %v2485 = vld [vmem:[%s2483 + $0x8] sm:$0xff]
        %s2486 = sld [smem:[#allocation4 + $0xc8]]
        %v2487 = vstv %s2486
        %v2488 = vmul.f32 %v2487, %v2484
        %v2489 = vmul.f32 %v2487, %v2485
        %v2490 = vadd.f32 %v2438, %v2488
        %v2491 = vadd.f32 %v2439, %v2489
        %s2492 = sld [smem:[#allocation4 + $0xc9]]
        %v2493 = vstv %s2492
        %v2494 = vmul.f32 %v2493, %v2484
        %v2495 = vmul.f32 %v2493, %v2485
        %v2496 = vadd.f32 %v2444, %v2494
        %v2497 = vadd.f32 %v2445, %v2495
        %s2498 = sld [smem:[#allocation4 + $0xca]]
        %v2499 = vstv %s2498
        %v2500 = vmul.f32 %v2499, %v2484
        %v2501 = vmul.f32 %v2499, %v2485
        %v2502 = vadd.f32 %v2450, %v2500
        %v2503 = vadd.f32 %v2451, %v2501
        %s2504 = sld [smem:[#allocation4 + $0xcb]]
        %v2505 = vstv %s2504
        %v2506 = vmul.f32 %v2505, %v2484
        %v2507 = vmul.f32 %v2505, %v2485
        %v2508 = vadd.f32 %v2456, %v2506
        %v2509 = vadd.f32 %v2457, %v2507
        %s2510 = sld [smem:[#allocation4 + $0xcc]]
        %v2511 = vstv %s2510
        %v2512 = vmul.f32 %v2511, %v2484
        %v2513 = vmul.f32 %v2511, %v2485
        %v2514 = vadd.f32 %v2462, %v2512
        %v2515 = vadd.f32 %v2463, %v2513
        %s2516 = sld [smem:[#allocation4 + $0xcd]]
        %v2517 = vstv %s2516
        %v2518 = vmul.f32 %v2517, %v2484
        %v2519 = vmul.f32 %v2517, %v2485
        %v2520 = vadd.f32 %v2468, %v2518
        %v2521 = vadd.f32 %v2469, %v2519
        %s2522 = sld [smem:[#allocation4 + $0xce]]
        %v2523 = vstv %s2522
        %v2524 = vmul.f32 %v2523, %v2484
        %v2525 = vmul.f32 %v2523, %v2485
        %v2526 = vadd.f32 %v2474, %v2524
        %v2527 = vadd.f32 %v2475, %v2525
        %s2528 = sld [smem:[#allocation4 + $0xcf]]
        %v2529 = vstv %s2528
        %v2530 = vmul.f32 %v2529, %v2484
        %v2531 = vmul.f32 %v2529, %v2485
        %v2532 = vadd.f32 %v2480, %v2530
        %v2533 = vadd.f32 %v2481, %v2531
        %s2534 = sadd.s32 %s2430, 48
        %s2535 = scalar_lea.vmem [#allocation2], %s2534
        %v2536 = vld [vmem:[%s2535] sm:$0xff]
        %v2537 = vld [vmem:[%s2535 + $0x8] sm:$0xff]
        %s2538 = sld [smem:[#allocation4 + $0xd0]]
        %v2539 = vstv %s2538
        %v2540 = vmul.f32 %v2539, %v2536
        %v2541 = vmul.f32 %v2539, %v2537
        %v2542 = vadd.f32 %v2490, %v2540
        %v2543 = vadd.f32 %v2491, %v2541
        %s2544 = sld [smem:[#allocation4 + $0xd1]]
        %v2545 = vstv %s2544
        %v2546 = vmul.f32 %v2545, %v2536
        %v2547 = vmul.f32 %v2545, %v2537
        %v2548 = vadd.f32 %v2496, %v2546
        %v2549 = vadd.f32 %v2497, %v2547
        %s2550 = sld [smem:[#allocation4 + $0xd2]]
        %v2551 = vstv %s2550
        %v2552 = vmul.f32 %v2551, %v2536
        %v2553 = vmul.f32 %v2551, %v2537
        %v2554 = vadd.f32 %v2502, %v2552
        %v2555 = vadd.f32 %v2503, %v2553
        %s2556 = sld [smem:[#allocation4 + $0xd3]]
        %v2557 = vstv %s2556
        %v2558 = vmul.f32 %v2557, %v2536
        %v2559 = vmul.f32 %v2557, %v2537
        %v2560 = vadd.f32 %v2508, %v2558
        %v2561 = vadd.f32 %v2509, %v2559
        %s2562 = sld [smem:[#allocation4 + $0xd4]]
        %v2563 = vstv %s2562
        %v2564 = vmul.f32 %v2563, %v2536
        %v2565 = vmul.f32 %v2563, %v2537
        %v2566 = vadd.f32 %v2514, %v2564
        %v2567 = vadd.f32 %v2515, %v2565
        %s2568 = sld [smem:[#allocation4 + $0xd5]]
        %v2569 = vstv %s2568
        %v2570 = vmul.f32 %v2569, %v2536
        %v2571 = vmul.f32 %v2569, %v2537
        %v2572 = vadd.f32 %v2520, %v2570
        %v2573 = vadd.f32 %v2521, %v2571
        %s2574 = sld [smem:[#allocation4 + $0xd6]]
        %v2575 = vstv %s2574
        %v2576 = vmul.f32 %v2575, %v2536
        %v2577 = vmul.f32 %v2575, %v2537
        %v2578 = vadd.f32 %v2526, %v2576
        %v2579 = vadd.f32 %v2527, %v2577
        %s2580 = sld [smem:[#allocation4 + $0xd7]]
        %v2581 = vstv %s2580
        %v2582 = vmul.f32 %v2581, %v2536
        %v2583 = vmul.f32 %v2581, %v2537
        %v2584 = vadd.f32 %v2532, %v2582
        %v2585 = vadd.f32 %v2533, %v2583
        %s2586 = sadd.s32 %s2430, 72
        %s2587 = scalar_lea.vmem [#allocation2], %s2586
        %v2588 = vld [vmem:[%s2587] sm:$0xff]
        %v2589 = vld [vmem:[%s2587 + $0x8] sm:$0xff]
        %s2590 = sld [smem:[#allocation4 + $0xd8]]
        %v2591 = vstv %s2590
        %v2592 = vmul.f32 %v2591, %v2588
        %v2593 = vmul.f32 %v2591, %v2589
        %v2594 = vadd.f32 %v2542, %v2592
        %v2595 = vadd.f32 %v2543, %v2593
        %s2596 = sld [smem:[#allocation4 + $0xd9]]
        %v2597 = vstv %s2596
        %v2598 = vmul.f32 %v2597, %v2588
        %v2599 = vmul.f32 %v2597, %v2589
        %v2600 = vadd.f32 %v2548, %v2598
        %v2601 = vadd.f32 %v2549, %v2599
        %s2602 = sld [smem:[#allocation4 + $0xda]]
        %v2603 = vstv %s2602
        %v2604 = vmul.f32 %v2603, %v2588
        %v2605 = vmul.f32 %v2603, %v2589
        %v2606 = vadd.f32 %v2554, %v2604
        %v2607 = vadd.f32 %v2555, %v2605
        %s2608 = sld [smem:[#allocation4 + $0xdb]]
        %v2609 = vstv %s2608
        %v2610 = vmul.f32 %v2609, %v2588
        %v2611 = vmul.f32 %v2609, %v2589
        %v2612 = vadd.f32 %v2560, %v2610
        %v2613 = vadd.f32 %v2561, %v2611
        %s2614 = sld [smem:[#allocation4 + $0xdc]]
        %v2615 = vstv %s2614
        %v2616 = vmul.f32 %v2615, %v2588
        %v2617 = vmul.f32 %v2615, %v2589
        %v2618 = vadd.f32 %v2566, %v2616
        %v2619 = vadd.f32 %v2567, %v2617
        %s2620 = sld [smem:[#allocation4 + $0xdd]]
        %v2621 = vstv %s2620
        %v2622 = vmul.f32 %v2621, %v2588
        %v2623 = vmul.f32 %v2621, %v2589
        %v2624 = vadd.f32 %v2572, %v2622
        %v2625 = vadd.f32 %v2573, %v2623
        %s2626 = sld [smem:[#allocation4 + $0xde]]
        %v2627 = vstv %s2626
        %v2628 = vmul.f32 %v2627, %v2588
        %v2629 = vmul.f32 %v2627, %v2589
        %v2630 = vadd.f32 %v2578, %v2628
        %v2631 = vadd.f32 %v2579, %v2629
        %s2632 = sld [smem:[#allocation4 + $0xdf]]
        %v2633 = vstv %s2632
        %v2634 = vmul.f32 %v2633, %v2588
        %v2635 = vmul.f32 %v2633, %v2589
        %v2636 = vadd.f32 %v2584, %v2634
        %v2637 = vadd.f32 %v2585, %v2635
        %s2638 = sld [smem:[#allocation4 + $0xe0]]
        %v2639 = vstv %s2638
        %v2640 = vmul.f32 %v2639, %v2432
        %v2641 = vmul.f32 %v2639, %v2433
        %2644 = vrot.lane.b32.xlu0 %v2640, 127
        %v2645 = vpop.permute.xlu0 %2644
        %2646 = vrot.lane.b32.xlu0 %v2641, 127
        %v2647 = vpop.permute.xlu0 %2646
        %v2650 = vadd.f32 %v2594, %v2645
        %v2651 = vadd.f32 %v2595, %v2647
        %s2652 = sld [smem:[#allocation4 + $0xe1]]
        %v2653 = vstv %s2652
        %v2654 = vmul.f32 %v2653, %v2432
        %v2655 = vmul.f32 %v2653, %v2433
        %2658 = vrot.lane.b32.xlu0 %v2654, 127
        %v2659 = vpop.permute.xlu0 %2658
        %2660 = vrot.lane.b32.xlu0 %v2655, 127
        %v2661 = vpop.permute.xlu0 %2660
        %v2664 = vadd.f32 %v2600, %v2659
        %v2665 = vadd.f32 %v2601, %v2661
        %s2666 = sld [smem:[#allocation4 + $0xe2]]
        %v2667 = vstv %s2666
        %v2668 = vmul.f32 %v2667, %v2432
        %v2669 = vmul.f32 %v2667, %v2433
        %2672 = vrot.lane.b32.xlu0 %v2668, 127
        %v2673 = vpop.permute.xlu0 %2672
        %2674 = vrot.lane.b32.xlu0 %v2669, 127
        %v2675 = vpop.permute.xlu0 %2674
        %v2678 = vadd.f32 %v2606, %v2673
        %v2679 = vadd.f32 %v2607, %v2675
        %s2680 = sld [smem:[#allocation4 + $0xe3]]
        %v2681 = vstv %s2680
        %v2682 = vmul.f32 %v2681, %v2432
        %v2683 = vmul.f32 %v2681, %v2433
        %2686 = vrot.lane.b32.xlu0 %v2682, 127
        %v2687 = vpop.permute.xlu0 %2686
        %2688 = vrot.lane.b32.xlu0 %v2683, 127
        %v2689 = vpop.permute.xlu0 %2688
        %v2692 = vadd.f32 %v2612, %v2687
        %v2693 = vadd.f32 %v2613, %v2689
        %s2694 = sld [smem:[#allocation4 + $0xe4]]
        %v2695 = vstv %s2694
        %v2696 = vmul.f32 %v2695, %v2432
        %v2697 = vmul.f32 %v2695, %v2433
        %2700 = vrot.lane.b32.xlu0 %v2696, 127
        %v2701 = vpop.permute.xlu0 %2700
        %2702 = vrot.lane.b32.xlu0 %v2697, 127
        %v2703 = vpop.permute.xlu0 %2702
        %v2706 = vadd.f32 %v2618, %v2701
        %v2707 = vadd.f32 %v2619, %v2703
        %s2708 = sld [smem:[#allocation4 + $0xe5]]
        %v2709 = vstv %s2708
        %v2710 = vmul.f32 %v2709, %v2432
        %v2711 = vmul.f32 %v2709, %v2433
        %2714 = vrot.lane.b32.xlu0 %v2710, 127
        %v2715 = vpop.permute.xlu0 %2714
        %2716 = vrot.lane.b32.xlu0 %v2711, 127
        %v2717 = vpop.permute.xlu0 %2716
        %v2720 = vadd.f32 %v2624, %v2715
        %v2721 = vadd.f32 %v2625, %v2717
        %s2722 = sld [smem:[#allocation4 + $0xe6]]
        %v2723 = vstv %s2722
        %v2724 = vmul.f32 %v2723, %v2432
        %v2725 = vmul.f32 %v2723, %v2433
        %2728 = vrot.lane.b32.xlu0 %v2724, 127
        %v2729 = vpop.permute.xlu0 %2728
        %2730 = vrot.lane.b32.xlu0 %v2725, 127
        %v2731 = vpop.permute.xlu0 %2730
        %v2734 = vadd.f32 %v2630, %v2729
        %v2735 = vadd.f32 %v2631, %v2731
        %s2736 = sld [smem:[#allocation4 + $0xe7]]
        %v2737 = vstv %s2736
        %v2738 = vmul.f32 %v2737, %v2432
        %v2739 = vmul.f32 %v2737, %v2433
        %2742 = vrot.lane.b32.xlu0 %v2738, 127
        %v2743 = vpop.permute.xlu0 %2742
        %2744 = vrot.lane.b32.xlu0 %v2739, 127
        %v2745 = vpop.permute.xlu0 %2744
        %v2748 = vadd.f32 %v2636, %v2743
        %v2749 = vadd.f32 %v2637, %v2745
        %s2750 = sld [smem:[#allocation4 + $0xe8]]
        %v2751 = vstv %s2750
        %v2752 = vmul.f32 %v2751, %v2484
        %v2753 = vmul.f32 %v2751, %v2485
        %2756 = vrot.lane.b32.xlu0 %v2752, 127
        %v2757 = vpop.permute.xlu0 %2756
        %2758 = vrot.lane.b32.xlu0 %v2753, 127
        %v2759 = vpop.permute.xlu0 %2758
        %v2762 = vadd.f32 %v2650, %v2757
        %v2763 = vadd.f32 %v2651, %v2759
        %s2764 = sld [smem:[#allocation4 + $0xe9]]
        %v2765 = vstv %s2764
        %v2766 = vmul.f32 %v2765, %v2484
        %v2767 = vmul.f32 %v2765, %v2485
        %2770 = vrot.lane.b32.xlu0 %v2766, 127
        %v2771 = vpop.permute.xlu0 %2770
        %2772 = vrot.lane.b32.xlu0 %v2767, 127
        %v2773 = vpop.permute.xlu0 %2772
        %v2776 = vadd.f32 %v2664, %v2771
        %v2777 = vadd.f32 %v2665, %v2773
        %s2778 = sld [smem:[#allocation4 + $0xea]]
        %v2779 = vstv %s2778
        %v2780 = vmul.f32 %v2779, %v2484
        %v2781 = vmul.f32 %v2779, %v2485
        %2784 = vrot.lane.b32.xlu0 %v2780, 127
        %v2785 = vpop.permute.xlu0 %2784
        %2786 = vrot.lane.b32.xlu0 %v2781, 127
        %v2787 = vpop.permute.xlu0 %2786
        %v2790 = vadd.f32 %v2678, %v2785
        %v2791 = vadd.f32 %v2679, %v2787
        %s2792 = sld [smem:[#allocation4 + $0xeb]]
        %v2793 = vstv %s2792
        %v2794 = vmul.f32 %v2793, %v2484
        %v2795 = vmul.f32 %v2793, %v2485
        %2798 = vrot.lane.b32.xlu0 %v2794, 127
        %v2799 = vpop.permute.xlu0 %2798
        %2800 = vrot.lane.b32.xlu0 %v2795, 127
        %v2801 = vpop.permute.xlu0 %2800
        %v2804 = vadd.f32 %v2692, %v2799
        %v2805 = vadd.f32 %v2693, %v2801
        %s2806 = sld [smem:[#allocation4 + $0xec]]
        %v2807 = vstv %s2806
        %v2808 = vmul.f32 %v2807, %v2484
        %v2809 = vmul.f32 %v2807, %v2485
        %2812 = vrot.lane.b32.xlu0 %v2808, 127
        %v2813 = vpop.permute.xlu0 %2812
        %2814 = vrot.lane.b32.xlu0 %v2809, 127
        %v2815 = vpop.permute.xlu0 %2814
        %v2818 = vadd.f32 %v2706, %v2813
        %v2819 = vadd.f32 %v2707, %v2815
        %s2820 = sld [smem:[#allocation4 + $0xed]]
        %v2821 = vstv %s2820
        %v2822 = vmul.f32 %v2821, %v2484
        %v2823 = vmul.f32 %v2821, %v2485
        %2826 = vrot.lane.b32.xlu0 %v2822, 127
        %v2827 = vpop.permute.xlu0 %2826
        %2828 = vrot.lane.b32.xlu0 %v2823, 127
        %v2829 = vpop.permute.xlu0 %2828
        %v2832 = vadd.f32 %v2720, %v2827
        %v2833 = vadd.f32 %v2721, %v2829
        %s2834 = sld [smem:[#allocation4 + $0xee]]
        %v2835 = vstv %s2834
        %v2836 = vmul.f32 %v2835, %v2484
        %v2837 = vmul.f32 %v2835, %v2485
        %2840 = vrot.lane.b32.xlu0 %v2836, 127
        %v2841 = vpop.permute.xlu0 %2840
        %2842 = vrot.lane.b32.xlu0 %v2837, 127
        %v2843 = vpop.permute.xlu0 %2842
        %v2846 = vadd.f32 %v2734, %v2841
        %v2847 = vadd.f32 %v2735, %v2843
        %s2848 = sld [smem:[#allocation4 + $0xef]]
        %v2849 = vstv %s2848
        %v2850 = vmul.f32 %v2849, %v2484
        %v2851 = vmul.f32 %v2849, %v2485
        %2854 = vrot.lane.b32.xlu0 %v2850, 127
        %v2855 = vpop.permute.xlu0 %2854
        %2856 = vrot.lane.b32.xlu0 %v2851, 127
        %v2857 = vpop.permute.xlu0 %2856
        %v2860 = vadd.f32 %v2748, %v2855
        %v2861 = vadd.f32 %v2749, %v2857
        %s2862 = sld [smem:[#allocation4 + $0xf0]]
        %v2863 = vstv %s2862
        %v2864 = vmul.f32 %v2863, %v2536
        %v2865 = vmul.f32 %v2863, %v2537
        %2868 = vrot.lane.b32.xlu0 %v2864, 127
        %v2869 = vpop.permute.xlu0 %2868
        %2870 = vrot.lane.b32.xlu0 %v2865, 127
        %v2871 = vpop.permute.xlu0 %2870
        %v2874 = vadd.f32 %v2762, %v2869
        %v2875 = vadd.f32 %v2763, %v2871
        %s2876 = sld [smem:[#allocation4 + $0xf1]]
        %v2877 = vstv %s2876
        %v2878 = vmul.f32 %v2877, %v2536
        %v2879 = vmul.f32 %v2877, %v2537
        %2882 = vrot.lane.b32.xlu0 %v2878, 127
        %v2883 = vpop.permute.xlu0 %2882
        %2884 = vrot.lane.b32.xlu0 %v2879, 127
        %v2885 = vpop.permute.xlu0 %2884
        %v2888 = vadd.f32 %v2776, %v2883
        %v2889 = vadd.f32 %v2777, %v2885
        %s2890 = sld [smem:[#allocation4 + $0xf2]]
        %v2891 = vstv %s2890
        %v2892 = vmul.f32 %v2891, %v2536
        %v2893 = vmul.f32 %v2891, %v2537
        %2896 = vrot.lane.b32.xlu0 %v2892, 127
        %v2897 = vpop.permute.xlu0 %2896
        %2898 = vrot.lane.b32.xlu0 %v2893, 127
        %v2899 = vpop.permute.xlu0 %2898
        %v2902 = vadd.f32 %v2790, %v2897
        %v2903 = vadd.f32 %v2791, %v2899
        %s2904 = sld [smem:[#allocation4 + $0xf3]]
        %v2905 = vstv %s2904
        %v2906 = vmul.f32 %v2905, %v2536
        %v2907 = vmul.f32 %v2905, %v2537
        %2910 = vrot.lane.b32.xlu0 %v2906, 127
        %v2911 = vpop.permute.xlu0 %2910
        %2912 = vrot.lane.b32.xlu0 %v2907, 127
        %v2913 = vpop.permute.xlu0 %2912
        %v2916 = vadd.f32 %v2804, %v2911
        %v2917 = vadd.f32 %v2805, %v2913
        %s2918 = sld [smem:[#allocation4 + $0xf4]]
        %v2919 = vstv %s2918
        %v2920 = vmul.f32 %v2919, %v2536
        %v2921 = vmul.f32 %v2919, %v2537
        %2924 = vrot.lane.b32.xlu0 %v2920, 127
        %v2925 = vpop.permute.xlu0 %2924
        %2926 = vrot.lane.b32.xlu0 %v2921, 127
        %v2927 = vpop.permute.xlu0 %2926
        %v2930 = vadd.f32 %v2818, %v2925
        %v2931 = vadd.f32 %v2819, %v2927
        %s2932 = sld [smem:[#allocation4 + $0xf5]]
        %v2933 = vstv %s2932
        %v2934 = vmul.f32 %v2933, %v2536
        %v2935 = vmul.f32 %v2933, %v2537
        %2938 = vrot.lane.b32.xlu0 %v2934, 127
        %v2939 = vpop.permute.xlu0 %2938
        %2940 = vrot.lane.b32.xlu0 %v2935, 127
        %v2941 = vpop.permute.xlu0 %2940
        %v2944 = vadd.f32 %v2832, %v2939
        %v2945 = vadd.f32 %v2833, %v2941
        %s2946 = sld [smem:[#allocation4 + $0xf6]]
        %v2947 = vstv %s2946
        %v2948 = vmul.f32 %v2947, %v2536
        %v2949 = vmul.f32 %v2947, %v2537
        %2952 = vrot.lane.b32.xlu0 %v2948, 127
        %v2953 = vpop.permute.xlu0 %2952
        %2954 = vrot.lane.b32.xlu0 %v2949, 127
        %v2955 = vpop.permute.xlu0 %2954
        %v2958 = vadd.f32 %v2846, %v2953
        %v2959 = vadd.f32 %v2847, %v2955
        %s2960 = sld [smem:[#allocation4 + $0xf7]]
        %v2961 = vstv %s2960
        %v2962 = vmul.f32 %v2961, %v2536
        %v2963 = vmul.f32 %v2961, %v2537
        %2966 = vrot.lane.b32.xlu0 %v2962, 127
        %v2967 = vpop.permute.xlu0 %2966
        %2968 = vrot.lane.b32.xlu0 %v2963, 127
        %v2969 = vpop.permute.xlu0 %2968
        %v2972 = vadd.f32 %v2860, %v2967
        %v2973 = vadd.f32 %v2861, %v2969
        %s2974 = sld [smem:[#allocation4 + $0xf8]]
        %v2975 = vstv %s2974
        %v2976 = vmul.f32 %v2975, %v2588
        %v2977 = vmul.f32 %v2975, %v2589
        %2980 = vrot.lane.b32.xlu0 %v2976, 127
        %v2981 = vpop.permute.xlu0 %2980
        %2982 = vrot.lane.b32.xlu0 %v2977, 127
        %v2983 = vpop.permute.xlu0 %2982
        %v2986 = vadd.f32 %v2874, %v2981
        %v2987 = vadd.f32 %v2875, %v2983
        %s2988 = sld [smem:[#allocation4 + $0xf9]]
        %v2989 = vstv %s2988
        %v2990 = vmul.f32 %v2989, %v2588
        %v2991 = vmul.f32 %v2989, %v2589
        %2994 = vrot.lane.b32.xlu0 %v2990, 127
        %v2995 = vpop.permute.xlu0 %2994
        %2996 = vrot.lane.b32.xlu0 %v2991, 127
        %v2997 = vpop.permute.xlu0 %2996
        %v3000 = vadd.f32 %v2888, %v2995
        %v3001 = vadd.f32 %v2889, %v2997
        %s3002 = sld [smem:[#allocation4 + $0xfa]]
        %v3003 = vstv %s3002
        %v3004 = vmul.f32 %v3003, %v2588
        %v3005 = vmul.f32 %v3003, %v2589
        %3008 = vrot.lane.b32.xlu0 %v3004, 127
        %v3009 = vpop.permute.xlu0 %3008
        %3010 = vrot.lane.b32.xlu0 %v3005, 127
        %v3011 = vpop.permute.xlu0 %3010
        %v3014 = vadd.f32 %v2902, %v3009
        %v3015 = vadd.f32 %v2903, %v3011
        %s3016 = sld [smem:[#allocation4 + $0xfb]]
        %v3017 = vstv %s3016
        %v3018 = vmul.f32 %v3017, %v2588
        %v3019 = vmul.f32 %v3017, %v2589
        %3022 = vrot.lane.b32.xlu0 %v3018, 127
        %v3023 = vpop.permute.xlu0 %3022
        %3024 = vrot.lane.b32.xlu0 %v3019, 127
        %v3025 = vpop.permute.xlu0 %3024
        %v3028 = vadd.f32 %v2916, %v3023
        %v3029 = vadd.f32 %v2917, %v3025
        %s3030 = sld [smem:[#allocation4 + $0xfc]]
        %v3031 = vstv %s3030
        %v3032 = vmul.f32 %v3031, %v2588
        %v3033 = vmul.f32 %v3031, %v2589
        %3036 = vrot.lane.b32.xlu0 %v3032, 127
        %v3037 = vpop.permute.xlu0 %3036
        %3038 = vrot.lane.b32.xlu0 %v3033, 127
        %v3039 = vpop.permute.xlu0 %3038
        %v3042 = vadd.f32 %v2930, %v3037
        %v3043 = vadd.f32 %v2931, %v3039
        %s3044 = sld [smem:[#allocation4 + $0xfd]]
        %v3045 = vstv %s3044
        %v3046 = vmul.f32 %v3045, %v2588
        %v3047 = vmul.f32 %v3045, %v2589
        %3050 = vrot.lane.b32.xlu0 %v3046, 127
        %v3051 = vpop.permute.xlu0 %3050
        %3052 = vrot.lane.b32.xlu0 %v3047, 127
        %v3053 = vpop.permute.xlu0 %3052
        %v3056 = vadd.f32 %v2944, %v3051
        %v3057 = vadd.f32 %v2945, %v3053
        %s3058 = sld [smem:[#allocation4 + $0xfe]]
        %v3059 = vstv %s3058
        %v3060 = vmul.f32 %v3059, %v2588
        %v3061 = vmul.f32 %v3059, %v2589
        %3064 = vrot.lane.b32.xlu0 %v3060, 127
        %v3065 = vpop.permute.xlu0 %3064
        %3066 = vrot.lane.b32.xlu0 %v3061, 127
        %v3067 = vpop.permute.xlu0 %3066
        %v3070 = vadd.f32 %v2958, %v3065
        %v3071 = vadd.f32 %v2959, %v3067
        %s3072 = sld [smem:[#allocation4 + $0xff]]
        %v3073 = vstv %s3072
        %v3074 = vmul.f32 %v3073, %v2588
        %v3075 = vmul.f32 %v3073, %v2589
        %3078 = vrot.lane.b32.xlu0 %v3074, 127
        %v3079 = vpop.permute.xlu0 %3078
        %3080 = vrot.lane.b32.xlu0 %v3075, 127
        %v3081 = vpop.permute.xlu0 %3080
        %v3084 = vadd.f32 %v2972, %v3079
        %v3085 = vadd.f32 %v2973, %v3081
        %s3086 = sld [smem:[#allocation4 + $0x100]]
        %v3087 = vstv %s3086
        %v3088 = vmul.f32 %v3087, %v2432
        %v3089 = vmul.f32 %v3087, %v2433
        %3092 = vrot.lane.b32.xlu0 %v3088, 126
        %v3093 = vpop.permute.xlu0 %3092
        %3094 = vrot.lane.b32.xlu0 %v3089, 126
        %v3095 = vpop.permute.xlu0 %3094
        %v3098 = vadd.f32 %v2986, %v3093
        %v3099 = vadd.f32 %v2987, %v3095
        %s3100 = sld [smem:[#allocation4 + $0x101]]
        %v3101 = vstv %s3100
        %v3102 = vmul.f32 %v3101, %v2432
        %v3103 = vmul.f32 %v3101, %v2433
        %3106 = vrot.lane.b32.xlu0 %v3102, 126
        %v3107 = vpop.permute.xlu0 %3106
        %3108 = vrot.lane.b32.xlu0 %v3103, 126
        %v3109 = vpop.permute.xlu0 %3108
        %v3112 = vadd.f32 %v3000, %v3107
        %v3113 = vadd.f32 %v3001, %v3109
        %s3114 = sld [smem:[#allocation4 + $0x102]]
        %v3115 = vstv %s3114
        %v3116 = vmul.f32 %v3115, %v2432
        %v3117 = vmul.f32 %v3115, %v2433
        %3120 = vrot.lane.b32.xlu0 %v3116, 126
        %v3121 = vpop.permute.xlu0 %3120
        %3122 = vrot.lane.b32.xlu0 %v3117, 126
        %v3123 = vpop.permute.xlu0 %3122
        %v3126 = vadd.f32 %v3014, %v3121
        %v3127 = vadd.f32 %v3015, %v3123
        %s3128 = sld [smem:[#allocation4 + $0x103]]
        %v3129 = vstv %s3128
        %v3130 = vmul.f32 %v3129, %v2432
        %v3131 = vmul.f32 %v3129, %v2433
        %3134 = vrot.lane.b32.xlu0 %v3130, 126
        %v3135 = vpop.permute.xlu0 %3134
        %3136 = vrot.lane.b32.xlu0 %v3131, 126
        %v3137 = vpop.permute.xlu0 %3136
        %v3140 = vadd.f32 %v3028, %v3135
        %v3141 = vadd.f32 %v3029, %v3137
        %s3142 = sld [smem:[#allocation4 + $0x104]]
        %v3143 = vstv %s3142
        %v3144 = vmul.f32 %v3143, %v2432
        %v3145 = vmul.f32 %v3143, %v2433
        %3148 = vrot.lane.b32.xlu0 %v3144, 126
        %v3149 = vpop.permute.xlu0 %3148
        %3150 = vrot.lane.b32.xlu0 %v3145, 126
        %v3151 = vpop.permute.xlu0 %3150
        %v3154 = vadd.f32 %v3042, %v3149
        %v3155 = vadd.f32 %v3043, %v3151
        %s3156 = sld [smem:[#allocation4 + $0x105]]
        %v3157 = vstv %s3156
        %v3158 = vmul.f32 %v3157, %v2432
        %v3159 = vmul.f32 %v3157, %v2433
        %3162 = vrot.lane.b32.xlu0 %v3158, 126
        %v3163 = vpop.permute.xlu0 %3162
        %3164 = vrot.lane.b32.xlu0 %v3159, 126
        %v3165 = vpop.permute.xlu0 %3164
        %v3168 = vadd.f32 %v3056, %v3163
        %v3169 = vadd.f32 %v3057, %v3165
        %s3170 = sld [smem:[#allocation4 + $0x106]]
        %v3171 = vstv %s3170
        %v3172 = vmul.f32 %v3171, %v2432
        %v3173 = vmul.f32 %v3171, %v2433
        %3176 = vrot.lane.b32.xlu0 %v3172, 126
        %v3177 = vpop.permute.xlu0 %3176
        %3178 = vrot.lane.b32.xlu0 %v3173, 126
        %v3179 = vpop.permute.xlu0 %3178
        %v3182 = vadd.f32 %v3070, %v3177
        %v3183 = vadd.f32 %v3071, %v3179
        %s3184 = sld [smem:[#allocation4 + $0x107]]
        %v3185 = vstv %s3184
        %v3186 = vmul.f32 %v3185, %v2432
        %v3187 = vmul.f32 %v3185, %v2433
        %3190 = vrot.lane.b32.xlu0 %v3186, 126
        %v3191 = vpop.permute.xlu0 %3190
        %3192 = vrot.lane.b32.xlu0 %v3187, 126
        %v3193 = vpop.permute.xlu0 %3192
        %v3196 = vadd.f32 %v3084, %v3191
        %v3197 = vadd.f32 %v3085, %v3193
        %s3198 = sld [smem:[#allocation4 + $0x108]]
        %v3199 = vstv %s3198
        %v3200 = vmul.f32 %v3199, %v2484
        %v3201 = vmul.f32 %v3199, %v2485
        %3204 = vrot.lane.b32.xlu0 %v3200, 126
        %v3205 = vpop.permute.xlu0 %3204
        %3206 = vrot.lane.b32.xlu0 %v3201, 126
        %v3207 = vpop.permute.xlu0 %3206
        %v3210 = vadd.f32 %v3098, %v3205
        %v3211 = vadd.f32 %v3099, %v3207
        %s3212 = sld [smem:[#allocation4 + $0x109]]
        %v3213 = vstv %s3212
        %v3214 = vmul.f32 %v3213, %v2484
        %v3215 = vmul.f32 %v3213, %v2485
        %3218 = vrot.lane.b32.xlu0 %v3214, 126
        %v3219 = vpop.permute.xlu0 %3218
        %3220 = vrot.lane.b32.xlu0 %v3215, 126
        %v3221 = vpop.permute.xlu0 %3220
        %v3224 = vadd.f32 %v3112, %v3219
        %v3225 = vadd.f32 %v3113, %v3221
        %s3226 = sld [smem:[#allocation4 + $0x10a]]
        %v3227 = vstv %s3226
        %v3228 = vmul.f32 %v3227, %v2484
        %v3229 = vmul.f32 %v3227, %v2485
        %3232 = vrot.lane.b32.xlu0 %v3228, 126
        %v3233 = vpop.permute.xlu0 %3232
        %3234 = vrot.lane.b32.xlu0 %v3229, 126
        %v3235 = vpop.permute.xlu0 %3234
        %v3238 = vadd.f32 %v3126, %v3233
        %v3239 = vadd.f32 %v3127, %v3235
        %s3240 = sld [smem:[#allocation4 + $0x10b]]
        %v3241 = vstv %s3240
        %v3242 = vmul.f32 %v3241, %v2484
        %v3243 = vmul.f32 %v3241, %v2485
        %3246 = vrot.lane.b32.xlu0 %v3242, 126
        %v3247 = vpop.permute.xlu0 %3246
        %3248 = vrot.lane.b32.xlu0 %v3243, 126
        %v3249 = vpop.permute.xlu0 %3248
        %v3252 = vadd.f32 %v3140, %v3247
        %v3253 = vadd.f32 %v3141, %v3249
        %s3254 = sld [smem:[#allocation4 + $0x10c]]
        %v3255 = vstv %s3254
        %v3256 = vmul.f32 %v3255, %v2484
        %v3257 = vmul.f32 %v3255, %v2485
        %3260 = vrot.lane.b32.xlu0 %v3256, 126
        %v3261 = vpop.permute.xlu0 %3260
        %3262 = vrot.lane.b32.xlu0 %v3257, 126
        %v3263 = vpop.permute.xlu0 %3262
        %v3266 = vadd.f32 %v3154, %v3261
        %v3267 = vadd.f32 %v3155, %v3263
        %s3268 = sld [smem:[#allocation4 + $0x10d]]
        %v3269 = vstv %s3268
        %v3270 = vmul.f32 %v3269, %v2484
        %v3271 = vmul.f32 %v3269, %v2485
        %3274 = vrot.lane.b32.xlu0 %v3270, 126
        %v3275 = vpop.permute.xlu0 %3274
        %3276 = vrot.lane.b32.xlu0 %v3271, 126
        %v3277 = vpop.permute.xlu0 %3276
        %v3280 = vadd.f32 %v3168, %v3275
        %v3281 = vadd.f32 %v3169, %v3277
        %s3282 = sld [smem:[#allocation4 + $0x10e]]
        %v3283 = vstv %s3282
        %v3284 = vmul.f32 %v3283, %v2484
        %v3285 = vmul.f32 %v3283, %v2485
        %3288 = vrot.lane.b32.xlu0 %v3284, 126
        %v3289 = vpop.permute.xlu0 %3288
        %3290 = vrot.lane.b32.xlu0 %v3285, 126
        %v3291 = vpop.permute.xlu0 %3290
        %v3294 = vadd.f32 %v3182, %v3289
        %v3295 = vadd.f32 %v3183, %v3291
        %s3296 = sld [smem:[#allocation4 + $0x10f]]
        %v3297 = vstv %s3296
        %v3298 = vmul.f32 %v3297, %v2484
        %v3299 = vmul.f32 %v3297, %v2485
        %3302 = vrot.lane.b32.xlu0 %v3298, 126
        %v3303 = vpop.permute.xlu0 %3302
        %3304 = vrot.lane.b32.xlu0 %v3299, 126
        %v3305 = vpop.permute.xlu0 %3304
        %v3308 = vadd.f32 %v3196, %v3303
        %v3309 = vadd.f32 %v3197, %v3305
        %s3310 = sld [smem:[#allocation4 + $0x110]]
        %v3311 = vstv %s3310
        %v3312 = vmul.f32 %v3311, %v2536
        %v3313 = vmul.f32 %v3311, %v2537
        %3316 = vrot.lane.b32.xlu0 %v3312, 126
        %v3317 = vpop.permute.xlu0 %3316
        %3318 = vrot.lane.b32.xlu0 %v3313, 126
        %v3319 = vpop.permute.xlu0 %3318
        %v3322 = vadd.f32 %v3210, %v3317
        %v3323 = vadd.f32 %v3211, %v3319
        %s3324 = sld [smem:[#allocation4 + $0x111]]
        %v3325 = vstv %s3324
        %v3326 = vmul.f32 %v3325, %v2536
        %v3327 = vmul.f32 %v3325, %v2537
        %3330 = vrot.lane.b32.xlu0 %v3326, 126
        %v3331 = vpop.permute.xlu0 %3330
        %3332 = vrot.lane.b32.xlu0 %v3327, 126
        %v3333 = vpop.permute.xlu0 %3332
        %v3336 = vadd.f32 %v3224, %v3331
        %v3337 = vadd.f32 %v3225, %v3333
        %s3338 = sld [smem:[#allocation4 + $0x112]]
        %v3339 = vstv %s3338
        %v3340 = vmul.f32 %v3339, %v2536
        %v3341 = vmul.f32 %v3339, %v2537
        %3344 = vrot.lane.b32.xlu0 %v3340, 126
        %v3345 = vpop.permute.xlu0 %3344
        %3346 = vrot.lane.b32.xlu0 %v3341, 126
        %v3347 = vpop.permute.xlu0 %3346
        %v3350 = vadd.f32 %v3238, %v3345
        %v3351 = vadd.f32 %v3239, %v3347
        %s3352 = sld [smem:[#allocation4 + $0x113]]
        %v3353 = vstv %s3352
        %v3354 = vmul.f32 %v3353, %v2536
        %v3355 = vmul.f32 %v3353, %v2537
        %3358 = vrot.lane.b32.xlu0 %v3354, 126
        %v3359 = vpop.permute.xlu0 %3358
        %3360 = vrot.lane.b32.xlu0 %v3355, 126
        %v3361 = vpop.permute.xlu0 %3360
        %v3364 = vadd.f32 %v3252, %v3359
        %v3365 = vadd.f32 %v3253, %v3361
        %s3366 = sld [smem:[#allocation4 + $0x114]]
        %v3367 = vstv %s3366
        %v3368 = vmul.f32 %v3367, %v2536
        %v3369 = vmul.f32 %v3367, %v2537
        %3372 = vrot.lane.b32.xlu0 %v3368, 126
        %v3373 = vpop.permute.xlu0 %3372
        %3374 = vrot.lane.b32.xlu0 %v3369, 126
        %v3375 = vpop.permute.xlu0 %3374
        %v3378 = vadd.f32 %v3266, %v3373
        %v3379 = vadd.f32 %v3267, %v3375
        %s3380 = sld [smem:[#allocation4 + $0x115]]
        %v3381 = vstv %s3380
        %v3382 = vmul.f32 %v3381, %v2536
        %v3383 = vmul.f32 %v3381, %v2537
        %3386 = vrot.lane.b32.xlu0 %v3382, 126
        %v3387 = vpop.permute.xlu0 %3386
        %3388 = vrot.lane.b32.xlu0 %v3383, 126
        %v3389 = vpop.permute.xlu0 %3388
        %v3392 = vadd.f32 %v3280, %v3387
        %v3393 = vadd.f32 %v3281, %v3389
        %s3394 = sld [smem:[#allocation4 + $0x116]]
        %v3395 = vstv %s3394
        %v3396 = vmul.f32 %v3395, %v2536
        %v3397 = vmul.f32 %v3395, %v2537
        %3400 = vrot.lane.b32.xlu0 %v3396, 126
        %v3401 = vpop.permute.xlu0 %3400
        %3402 = vrot.lane.b32.xlu0 %v3397, 126
        %v3403 = vpop.permute.xlu0 %3402
        %v3406 = vadd.f32 %v3294, %v3401
        %v3407 = vadd.f32 %v3295, %v3403
        %s3408 = sld [smem:[#allocation4 + $0x117]]
        %v3409 = vstv %s3408
        %v3410 = vmul.f32 %v3409, %v2536
        %v3411 = vmul.f32 %v3409, %v2537
        %3414 = vrot.lane.b32.xlu0 %v3410, 126
        %v3415 = vpop.permute.xlu0 %3414
        %3416 = vrot.lane.b32.xlu0 %v3411, 126
        %v3417 = vpop.permute.xlu0 %3416
        %v3420 = vadd.f32 %v3308, %v3415
        %v3421 = vadd.f32 %v3309, %v3417
        %s3422 = sld [smem:[#allocation4 + $0x118]]
        %v3423 = vstv %s3422
        %v3424 = vmul.f32 %v3423, %v2588
        %v3425 = vmul.f32 %v3423, %v2589
        %3428 = vrot.lane.b32.xlu0 %v3424, 126
        %v3429 = vpop.permute.xlu0 %3428
        %3430 = vrot.lane.b32.xlu0 %v3425, 126
        %v3431 = vpop.permute.xlu0 %3430
        %v3434 = vadd.f32 %v3322, %v3429
        %v3435 = vadd.f32 %v3323, %v3431
        %s3436 = sld [smem:[#allocation4 + $0x119]]
        %v3437 = vstv %s3436
        %v3438 = vmul.f32 %v3437, %v2588
        %v3439 = vmul.f32 %v3437, %v2589
        %3442 = vrot.lane.b32.xlu0 %v3438, 126
        %v3443 = vpop.permute.xlu0 %3442
        %3444 = vrot.lane.b32.xlu0 %v3439, 126
        %v3445 = vpop.permute.xlu0 %3444
        %v3448 = vadd.f32 %v3336, %v3443
        %v3449 = vadd.f32 %v3337, %v3445
        %s3450 = sld [smem:[#allocation4 + $0x11a]]
        %v3451 = vstv %s3450
        %v3452 = vmul.f32 %v3451, %v2588
        %v3453 = vmul.f32 %v3451, %v2589
        %3456 = vrot.lane.b32.xlu0 %v3452, 126
        %v3457 = vpop.permute.xlu0 %3456
        %3458 = vrot.lane.b32.xlu0 %v3453, 126
        %v3459 = vpop.permute.xlu0 %3458
        %v3462 = vadd.f32 %v3350, %v3457
        %v3463 = vadd.f32 %v3351, %v3459
        %s3464 = sld [smem:[#allocation4 + $0x11b]]
        %v3465 = vstv %s3464
        %v3466 = vmul.f32 %v3465, %v2588
        %v3467 = vmul.f32 %v3465, %v2589
        %3470 = vrot.lane.b32.xlu0 %v3466, 126
        %v3471 = vpop.permute.xlu0 %3470
        %3472 = vrot.lane.b32.xlu0 %v3467, 126
        %v3473 = vpop.permute.xlu0 %3472
        %v3476 = vadd.f32 %v3364, %v3471
        %v3477 = vadd.f32 %v3365, %v3473
        %s3478 = sld [smem:[#allocation4 + $0x11c]]
        %v3479 = vstv %s3478
        %v3480 = vmul.f32 %v3479, %v2588
        %v3481 = vmul.f32 %v3479, %v2589
        %3484 = vrot.lane.b32.xlu0 %v3480, 126
        %v3485 = vpop.permute.xlu0 %3484
        %3486 = vrot.lane.b32.xlu0 %v3481, 126
        %v3487 = vpop.permute.xlu0 %3486
        %v3490 = vadd.f32 %v3378, %v3485
        %v3491 = vadd.f32 %v3379, %v3487
        %s3492 = sld [smem:[#allocation4 + $0x11d]]
        %v3493 = vstv %s3492
        %v3494 = vmul.f32 %v3493, %v2588
        %v3495 = vmul.f32 %v3493, %v2589
        %3498 = vrot.lane.b32.xlu0 %v3494, 126
        %v3499 = vpop.permute.xlu0 %3498
        %3500 = vrot.lane.b32.xlu0 %v3495, 126
        %v3501 = vpop.permute.xlu0 %3500
        %v3504 = vadd.f32 %v3392, %v3499
        %v3505 = vadd.f32 %v3393, %v3501
        %s3506 = sld [smem:[#allocation4 + $0x11e]]
        %v3507 = vstv %s3506
        %v3508 = vmul.f32 %v3507, %v2588
        %v3509 = vmul.f32 %v3507, %v2589
        %3512 = vrot.lane.b32.xlu0 %v3508, 126
        %v3513 = vpop.permute.xlu0 %3512
        %3514 = vrot.lane.b32.xlu0 %v3509, 126
        %v3515 = vpop.permute.xlu0 %3514
        %v3518 = vadd.f32 %v3406, %v3513
        %v3519 = vadd.f32 %v3407, %v3515
        %s3520 = sld [smem:[#allocation4 + $0x11f]]
        %v3521 = vstv %s3520
        %v3522 = vmul.f32 %v3521, %v2588
        %v3523 = vmul.f32 %v3521, %v2589
        %3526 = vrot.lane.b32.xlu0 %v3522, 126
        %v3527 = vpop.permute.xlu0 %3526
        %3528 = vrot.lane.b32.xlu0 %v3523, 126
        %v3529 = vpop.permute.xlu0 %3528
        %v3532 = vadd.f32 %v3420, %v3527
        %v3533 = vadd.f32 %v3421, %v3529
        %vm3534 = vcmask 130048
        %3535 = vst.msk [vmem:[%s153] sm:$0xff] %vm3534, %v3434
        %3536 = vst.msk [vmem:[%s153 + $0x8] sm:$0xff] %vm3534, %v3435
        %s3537 = scalar_lea.vmem %s153, 16 [#allocation8]
        %3538 = vst.msk [vmem:[%s3537] sm:$0xff] %vm3534, %v3448
        %3539 = vst.msk [vmem:[%s3537 + $0x8] sm:$0xff] %vm3534, %v3449
        %s3540 = scalar_lea.vmem %s153, 32 [#allocation8]
        %3541 = vst.msk [vmem:[%s3540] sm:$0xff] %vm3534, %v3462
        %3542 = vst.msk [vmem:[%s3540 + $0x8] sm:$0xff] %vm3534, %v3463
        %s3543 = scalar_lea.vmem %s153, 48 [#allocation8]
        %3544 = vst.msk [vmem:[%s3543] sm:$0xff] %vm3534, %v3476
        %3545 = vst.msk [vmem:[%s3543 + $0x8] sm:$0xff] %vm3534, %v3477
        %s3546 = scalar_lea.vmem %s153, 64 [#allocation8]
        %3547 = vst.msk [vmem:[%s3546] sm:$0xff] %vm3534, %v3490
        %3548 = vst.msk [vmem:[%s3546 + $0x8] sm:$0xff] %vm3534, %v3491
        %s3549 = scalar_lea.vmem %s153, 80 [#allocation8]
        %3550 = vst.msk [vmem:[%s3549] sm:$0xff] %vm3534, %v3504
        %3551 = vst.msk [vmem:[%s3549 + $0x8] sm:$0xff] %vm3534, %v3505
        %s3552 = scalar_lea.vmem %s153, 96 [#allocation8]
        %3553 = vst.msk [vmem:[%s3552] sm:$0xff] %vm3534, %v3518
        %3554 = vst.msk [vmem:[%s3552 + $0x8] sm:$0xff] %vm3534, %v3519
        %s3555 = scalar_lea.vmem %s153, 112 [#allocation8]
        %3556 = vst.msk [vmem:[%s3555] sm:$0xff] %vm3534, %v3532
        %3557 = vst.msk [vmem:[%s3555 + $0x8] sm:$0xff] %vm3534, %v3533
        %s3558 = sand.u32 %s71, 1
        %s3559 = scalar_lea.sflag [#allocation7], %s3558
        %s3560 = sand.u32 %s71, 1
        %s3561 = smul.addr %s3560, 128
        %s3562 = scalar_lea.vmem [#allocation8], %s3561
        // Predicated region
        $region33: #{tpu_custom_call.1} parent=23 // pred_check
          %p3563 = pneg %p81
        $region34: #{tpu_custom_call.1} parent=23 // pred_check_branch
          %3565 = sbr.rel (%p3563) target = $region36
        $region35: #{tpu_custom_call.1} parent=23 // pred_region
          %s3566 = smul.u32 2, %s28
          %s3568 = ssub.s32 2048, 2048
          %3569 = vsyncadd %s3559, %s3568
          %s3570 = smul.addr %s27, 16
          %s3571 = sadd.s32 %s3566, %s3570
          %s3572 = smul.addr %s3571, 128
          %s3573 = scalar_lea.hbm %s2, %s3572
          %s3574 = sshll.u32 %s3562, 4
          %s3575 = int_to_ptr.vmem [resolvable:$true] %s3574
          %3580 = dma.vmem_to_hbm [thread:$0]  %s3575, 2048, %s3573, %s3559, 128, 128, 8
        $region36: #{tpu_custom_call.1} parent=23 // pred_fallthru
          _
      $region24: #{tpu_custom_call.1} parent=5 // pred_fallthru
        _
      %p3581 = scmp.le.s32.totalorder 2, %s18
      // Predicated region
      $region37: #{tpu_custom_call.1} parent=5 // pred_check
        %p3582 = pneg %p3581
      $region38: #{tpu_custom_call.1} parent=5 // pred_check_branch
        %3584 = sbr.rel (%p3582) target = $region40
      $region39: #{tpu_custom_call.1} parent=5 // pred_region
        %s3585 = ssub.s32 %s18, 2
        // Predicated region
        $region41: #{tpu_custom_call.1} parent=39 // pred_check
          %p3586 = pneg %p87
        $region42: #{tpu_custom_call.1} parent=39 // pred_check_branch
          %3588 = sbr.rel (%p3586) target = $region44
        $region43: #{tpu_custom_call.1} parent=39 // pred_region
          %s3589 = sand.u32 %s72, 1
          %s3590 = scalar_lea.sflag [#allocation7], %s3589
          %s3591 = sand.u32 %s72, 1
          %s3592 = smul.addr %s3591, 128
          %s3593 = scalar_lea.vmem [#allocation8], %s3592
          %3594 = dma.done %s3590, 2048
        $region44: #{tpu_custom_call.1} parent=39 // pred_fallthru
          _
      $region40: #{tpu_custom_call.1} parent=5 // pred_fallthru
        _
    $region6: #{tpu_custom_call.1} parent=1 // loop_footer
      %s22 = sadd.s32 1, %s18
    $region7: #{tpu_custom_call.1} parent=1 // loop_footer_branch
      %17 = sbr.rel target = $region3
    $region8: #{tpu_custom_call.1} parent=1 // loop_exit
      _
    %3595 = vsyncpa [#allocation6], 1
    %s3596 = scalar_lea.sflag [#allocation6], 1
    %3597 = vsyncpa %s3596, 1
    %3598 = vsyncpa [#allocation7], 1
    %s3599 = scalar_lea.sflag [#allocation7], 1
    %3600 = vsyncpa %s3599, 1

</llo_original>
